<compile_context>
chip_gen: v5e
topology: v5e:2x2
jax: 0.10.0
libtpu: 0.0.40
codegen_flags: <defaults>
</compile_context>

<pallas_src>
import functools

import jax
import jax.numpy as jnp
from jax import lax
from jax.experimental import pallas as pl
from jax.experimental.pallas import tpu as pltpu

# ---------------- model hyper-params (small demo sizes) ----------------
INPUT_SIZE = 1
HIDDEN_SIZE = 32          # (PyTorch file uses 250; shrunk for the demo.
                          #  For H=250, pad hidden to 256 and tile the time
                          #  axis with a grid instead of whole-seq-in-VMEM.)
NUM_CLASSES = 2
NUM_LAYERS = 2
BATCH = 2
SEQ_LEN = 8
C_PAD = 128               # lane-dense padded FC output width


def _round_up(n, m):
    return ((n + m - 1) // m) * m


# ---------------- fused Pallas kernel ----------------
def _bilstm_fused_kernel(xp0_ref, whh0_ref, wih1_ref, whh1_ref, b1_ref,
                         h0_ref, c0_ref, fcw_ref, fcb_ref,
                         out_ref, y1_ref, xp1_ref, y2_ref,
                         *, seq_len, hidden, batch_p):
    """Whole 2-layer bidirectional LSTM + FC head in one kernel.

    xp0_ref:  (2, T*Bp, 4H)  precomputed layer-0 input projection + bias
    whh0_ref: (2, H, 4H)     layer-0 recurrent weights (transposed, [i,f,o,g])
    wih1_ref: (2, 2H, 4H)    layer-1 input weights     (transposed, [i,f,o,g])
    whh1_ref: (2, H, 4H)     layer-1 recurrent weights
    b1_ref:   (2, 1, 4H)     layer-1 combined bias (b_ih + b_hh)
    h0_ref/c0_ref: (4, Bp, H) initial states, index = layer*2 + dir
    fcw_ref:  (2H, C_PAD)    zero-padded FC weights (transposed)
    fcb_ref:  (1, C_PAD)     zero-padded FC bias
    out_ref:  (T*Bp, C_PAD)  padded logits
    y1_ref/y2_ref: (T*Bp, 2H) per-layer hidden-state sequences (scratch)
    xp1_ref:  (2, T*Bp, 4H)  layer-1 input projection (scratch)
    """
    T, H, Bp = seq_len, hidden, batch_p

    def cell(gates, c):
        # Gate order [i, f, o, g]: one sigmoid on a contiguous 3H block,
        # one tanh on the trailing H lanes.
        sig = jax.nn.sigmoid(gates[:, :3 * H])
        i = sig[:, 0 * H:1 * H]
        f = sig[:, 1 * H:2 * H]
        o = sig[:, 2 * H:3 * H]
        g = jnp.tanh(gates[:, 3 * H:])
        c_new = f * c + i * g
        h_new = o * jnp.tanh(c_new)
        return h_new, c_new

    def run_layer(xp_f_at, xp_b_at, whh_f, whh_b, hf, cf, hb, cb, y_ref):
        # Fully-unrolled time loop; the two independent direction recurrences
        # are interleaved so the scheduler can overlap their MXU/EUP work.
        for t in range(T):
            tb = T - 1 - t
            gf = xp_f_at(t) + jnp.dot(hf, whh_f,
                                      preferred_element_type=jnp.float32)
            gb = xp_b_at(tb) + jnp.dot(hb, whh_b,
                                       preferred_element_type=jnp.float32)
            hf, cf = cell(gf, cf)
            hb, cb = cell(gb, cb)
            y_ref[t * Bp:(t + 1) * Bp, 0:H] = hf
            y_ref[tb * Bp:(tb + 1) * Bp, H:2 * H] = hb

    # ---- layer 0 recurrence (input projection precomputed in wrapper) ----
    run_layer(lambda t: xp0_ref[0, t * Bp:(t + 1) * Bp, :],
              lambda t: xp0_ref[1, t * Bp:(t + 1) * Bp, :],
              whh0_ref[0], whh0_ref[1],
              h0_ref[0], c0_ref[0], h0_ref[1], c0_ref[1],
              y1_ref)

    # ---- layer 1 input projection: one big matmul per direction ----
    y1 = y1_ref[...]                                  # (T*Bp, 2H)
    for d in range(2):
        xp1_ref[d] = (jnp.dot(y1, wih1_ref[d],
                              preferred_element_type=jnp.float32)
                      + b1_ref[d])

    # ---- layer 1 recurrence ----
    run_layer(lambda t: xp1_ref[0, t * Bp:(t + 1) * Bp, :],
              lambda t: xp1_ref[1, t * Bp:(t + 1) * Bp, :],
              whh1_ref[0], whh1_ref[1],
              h0_ref[2], c0_ref[2], h0_ref[3], c0_ref[3],
              y2_ref)

    # ---- FC epilogue: lane-dense (C_PAD=128) padded output ----
    out_ref[...] = (jnp.dot(y2_ref[...], fcw_ref[...],
                            preferred_element_type=jnp.float32)
                    + fcb_ref[...])


_VMEM_SPEC = pl.BlockSpec(memory_space=pltpu.MemorySpace.VMEM)


def _run_fused(xp0, whh0, wih1, whh1, b1, h0p, c0p, fcw, fcb, *, T, Bp, H, Cp):
    kern = functools.partial(_bilstm_fused_kernel,
                             seq_len=T, hidden=H, batch_p=Bp)
    return pl.pallas_call(
        kern,
        out_shape=jax.ShapeDtypeStruct((T * Bp, Cp), jnp.float32),
        in_specs=[_VMEM_SPEC] * 9,
        out_specs=_VMEM_SPEC,
        scratch_shapes=[
            pltpu.VMEM((T * Bp, 2 * H), jnp.float32),      # y1 (layer-0 out)
            pltpu.VMEM((2, T * Bp, 4 * H), jnp.float32),   # xp1 (layer-1 proj)
            pltpu.VMEM((T * Bp, 2 * H), jnp.float32),      # y2 (layer-1 out)
        ],
    )(xp0, whh0, wih1, whh1, b1, h0p, c0p, fcw, fcb)


# ---------------- parameter preparation (done ONCE, outside jit) ------------
def prepare_params(params):
    """Pre-transpose, gate-reorder ([i,f,g,o] -> [i,f,o,g]), stack directions,
    combine biases, and zero-pad the FC head to a lane-dense width."""
    H = HIDDEN_SIZE
    perm = jnp.concatenate([jnp.arange(0, H), jnp.arange(H, 2 * H),
                            jnp.arange(3 * H, 4 * H), jnp.arange(2 * H, 3 * H)])

    def prep_dir(layer, d):
        wih = params[f"wih_{layer}_{d}"][perm].T          # (Din, 4H)
        whh = params[f"whh_{layer}_{d}"][perm].T          # (H, 4H)
        b = (params[f"bih_{layer}_{d}"]
             + params[f"bhh_{layer}_{d}"])[perm].reshape(1, -1)   # (1, 4H)
        return wih, whh, b

    wih00, whh00, b00 = prep_dir(0, 0)
    wih01, whh01, b01 = prep_dir(0, 1)
    wih10, whh10, b10 = prep_dir(1, 0)
    wih11, whh11, b11 = prep_dir(1, 1)

    fc_w_pad = jnp.zeros((2 * H, C_PAD), jnp.float32).at[:, :NUM_CLASSES].set(
        params["fc_w"].T)
    fc_b_pad = jnp.zeros((1, C_PAD), jnp.float32).at[0, :NUM_CLASSES].set(
        params["fc_b"])

    return {
        "wih_0_0": wih00, "b_0_0": b00,
        "wih_0_1": wih01, "b_0_1": b01,
        "whh0": jnp.stack([whh00, whh01]),    # (2, H, 4H)
        "wih1": jnp.stack([wih10, wih11]),    # (2, 2H, 4H)
        "whh1": jnp.stack([whh10, whh11]),    # (2, H, 4H)
        "b1":   jnp.stack([b10, b11]),        # (2, 1, 4H)
        "fc_w_pad": fc_w_pad, "fc_b_pad": fc_b_pad,
    }


# ---------------- forward pass ----------------
def bidirectional_lstm_forward(x, prep, h0, c0):
    """x: (B, T, input_size) batch_first. Returns (B, T, num_classes)."""
    B, T, _ = x.shape
    H = HIDDEN_SIZE
    Bp = _round_up(B, 8)                                  # sublane padding

    xt = jnp.transpose(x, (1, 0, 2)).astype(jnp.float32)  # (T, B, Din)
    xt = jnp.pad(xt, ((0, 0), (0, Bp - B), (0, 0)))       # (T, Bp, Din)
    h0p = jnp.pad(h0.astype(jnp.float32), ((0, 0), (0, Bp - B), (0, 0)))
    c0p = jnp.pad(c0.astype(jnp.float32), ((0, 0), (0, Bp - B), (0, 0)))

    # Layer-0 input projection + bias hoisted out of the recurrence:
    # one (T*Bp, Din) @ (Din, 4H) matmul per direction (trivial for Din=1).
    x2d = xt.reshape(T * Bp, -1)
    xp0 = jnp.stack([x2d @ prep["wih_0_0"] + prep["b_0_0"],
                     x2d @ prep["wih_0_1"] + prep["b_0_1"]])   # (2, T*Bp, 4H)

    out_p = _run_fused(xp0, prep["whh0"], prep["wih1"], prep["whh1"],
                       prep["b1"], h0p, c0p,
                       prep["fc_w_pad"], prep["fc_b_pad"],
                       T=T, Bp=Bp, H=H, Cp=C_PAD)              # (T*Bp, C_PAD)

    out = out_p.reshape(T, Bp, C_PAD)[:, :B, :NUM_CLASSES]
    return jnp.transpose(out, (1, 0, 2))                       # (B, T, C)


# ---------------- pure-JAX reference (PyTorch gate order) ----------------
def _lstm_dir_ref(xs, wih, whh, bias, h0, c0, reverse):
    H = h0.shape[-1]
    seq = xs[::-1] if reverse else xs

    def step(carry, x_t):
        h, c = carry
        gates = x_t @ wih.T + h @ whh.T + bias
        i = jax.nn.sigmoid(gates[:, :H])
        f = jax.nn.sigmoid(gates[:, H:2 * H])
        g = jnp.tanh(gates[:, 2 * H:3 * H])
        o = jax.nn.sigmoid(gates[:, 3 * H:])
        c = f * c + i * g
        h = o * jnp.tanh(c)
        return (h, c), h

    _, outs = lax.scan(step, (h0, c0), seq)
    return outs[::-1] if reverse else outs


def _forward_ref(x, params, h0, c0):
    B, T, _ = x.shape
    inp = jnp.transpose(x, (1, 0, 2)).astype(jnp.float32)
    for layer in range(NUM_LAYERS):
        outs = []
        for d, reverse in enumerate((False, True)):
            idx = layer * 2 + d
            bias = params[f"bih_{layer}_{d}"] + params[f"bhh_{layer}_{d}"]
            outs.append(_lstm_dir_ref(inp, params[f"wih_{layer}_{d}"],
                                      params[f"whh_{layer}_{d}"], bias,
                                      h0[idx], c0[idx], reverse))
        inp = jnp.concatenate(outs, axis=-1)
    y = inp @ params["fc_w"].T + params["fc_b"]
    return jnp.transpose(y, (1, 0, 2))


# ---------------- deterministic parameter init ----------------
def init_params(key):
    params = {}
    bound = 1.0 / jnp.sqrt(HIDDEN_SIZE)
    n_dirs = 2
    keys = jax.random.split(key, NUM_LAYERS * n_dirs * 4 + 2)
    k = 0
    for layer in range(NUM_LAYERS):
        din = INPUT_SIZE if layer == 0 else 2 * HIDDEN_SIZE
        for d in range(n_dirs):
            params[f"wih_{layer}_{d}"] = jax.random.uniform(
                keys[k], (4 * HIDDEN_SIZE, din), jnp.float32, -bound, bound); k += 1
            params[f"whh_{layer}_{d}"] = jax.random.uniform(
                keys[k], (4 * HIDDEN_SIZE, HIDDEN_SIZE), jnp.float32, -bound, bound); k += 1
            params[f"bih_{layer}_{d}"] = jax.random.uniform(
                keys[k], (4 * HIDDEN_SIZE,), jnp.float32, -bound, bound); k += 1
            params[f"bhh_{layer}_{d}"] = jax.random.uniform(
                keys[k], (4 * HIDDEN_SIZE,), jnp.float32, -bound, bound); k += 1
    fc_bound = 1.0 / jnp.sqrt(2 * HIDDEN_SIZE)
    params["fc_w"] = jax.random.uniform(
        keys[k], (NUM_CLASSES, 2 * HIDDEN_SIZE), jnp.float32, -fc_bound, fc_bound); k += 1
    params["fc_b"] = jax.random.uniform(
        keys[k], (NUM_CLASSES,), jnp.float32, -fc_bound, fc_bound)
    return params


if __name__ == "__main__":
    root = jax.random.PRNGKey(0)
    k_param, k_x, k_h0, k_c0 = jax.random.split(root, 4)

    params = init_params(k_param)
    prep = prepare_params(params)          # one-time weight prep, outside jit

    x = jax.random.normal(k_x, (BATCH, SEQ_LEN, INPUT_SIZE), jnp.float32)
    # The PyTorch module draws fresh uniform h0/c0 every forward; here we draw
    # them once, deterministically, and pass them in.
    h0 = jax.random.uniform(k_h0, (NUM_LAYERS * 2, BATCH, HIDDEN_SIZE), jnp.float32)
    c0 = jax.random.uniform(k_c0, (NUM_LAYERS * 2, BATCH, HIDDEN_SIZE), jnp.float32)

    fwd = jax.jit(bidirectional_lstm_forward)
    out = jax.block_until_ready(fwd(x, prep, h0, c0))
    ref = jax.block_until_ready(_forward_ref(x, params, h0, c0))

    assert out.shape == (BATCH, SEQ_LEN, NUM_CLASSES), out.shape
    assert jnp.all(jnp.isfinite(out))
    assert jnp.allclose(out, ref, atol=2e-2, rtol=2e-2)
    print("KERNEL_OK")
</pallas_src>

<mosaic_0001>
module attributes {stable_mosaic.version = 11 : i64} {
  func.func @_bilstm_fused_kernel(%arg0: memref<2x64x128xf32, #tpu.memory_space<vmem>>, %arg1: memref<2x32x128xf32, #tpu.memory_space<vmem>>, %arg2: memref<2x64x128xf32, #tpu.memory_space<vmem>>, %arg3: memref<2x32x128xf32, #tpu.memory_space<vmem>>, %arg4: memref<2x1x128xf32, #tpu.memory_space<vmem>>, %arg5: memref<4x8x32xf32, #tpu.memory_space<vmem>>, %arg6: memref<4x8x32xf32, #tpu.memory_space<vmem>>, %arg7: memref<64x128xf32, #tpu.memory_space<vmem>>, %arg8: memref<1x128xf32, #tpu.memory_space<vmem>>, %arg9: memref<64x128xf32, #tpu.memory_space<vmem>>, %arg10: memref<64x64xf32, #tpu.memory_space<vmem>>, %arg11: memref<2x64x128xf32, #tpu.memory_space<vmem>>, %arg12: memref<64x64xf32, #tpu.memory_space<vmem>>) attributes {dimension_semantics = [], scalar_prefetch = 0 : i64, scratch_operands = 3 : i64, tpu.core_type = #tpu.core_type<tc>} {
    %c0 = arith.constant 0 : index
    %c0_0 = arith.constant 0 : index
    %c0_1 = arith.constant 0 : index
    %0 = vector.load %arg1[%c0, %c0_0, %c0_1] : memref<2x32x128xf32, #tpu.memory_space<vmem>>, vector<1x32x128xf32>
    %1 = vector.shape_cast %0 : vector<1x32x128xf32> to vector<32x128xf32>
    %c1 = arith.constant 1 : index
    %c0_2 = arith.constant 0 : index
    %c0_3 = arith.constant 0 : index
    %2 = vector.load %arg1[%c1, %c0_2, %c0_3] : memref<2x32x128xf32, #tpu.memory_space<vmem>>, vector<1x32x128xf32>
    %3 = vector.shape_cast %2 : vector<1x32x128xf32> to vector<32x128xf32>
    %c0_4 = arith.constant 0 : index
    %c0_5 = arith.constant 0 : index
    %c0_6 = arith.constant 0 : index
    %4 = vector.load %arg5[%c0_4, %c0_5, %c0_6] : memref<4x8x32xf32, #tpu.memory_space<vmem>>, vector<1x8x32xf32>
    %5 = vector.shape_cast %4 : vector<1x8x32xf32> to vector<8x32xf32>
    %c0_7 = arith.constant 0 : index
    %c0_8 = arith.constant 0 : index
    %c0_9 = arith.constant 0 : index
    %6 = vector.load %arg6[%c0_7, %c0_8, %c0_9] : memref<4x8x32xf32, #tpu.memory_space<vmem>>, vector<1x8x32xf32>
    %7 = vector.shape_cast %6 : vector<1x8x32xf32> to vector<8x32xf32>
    %c1_10 = arith.constant 1 : index
    %c0_11 = arith.constant 0 : index
    %c0_12 = arith.constant 0 : index
    %8 = vector.load %arg5[%c1_10, %c0_11, %c0_12] : memref<4x8x32xf32, #tpu.memory_space<vmem>>, vector<1x8x32xf32>
    %9 = vector.shape_cast %8 : vector<1x8x32xf32> to vector<8x32xf32>
    %c1_13 = arith.constant 1 : index
    %c0_14 = arith.constant 0 : index
    %c0_15 = arith.constant 0 : index
    %10 = vector.load %arg6[%c1_13, %c0_14, %c0_15] : memref<4x8x32xf32, #tpu.memory_space<vmem>>, vector<1x8x32xf32>
    %11 = vector.shape_cast %10 : vector<1x8x32xf32> to vector<8x32xf32>
    %c0_16 = arith.constant 0 : index
    %c0_17 = arith.constant 0 : index
    %c0_18 = arith.constant 0 : index
    %12 = vector.load %arg0[%c0_16, %c0_17, %c0_18] : memref<2x64x128xf32, #tpu.memory_space<vmem>>, vector<1x8x128xf32>
    %13 = vector.shape_cast %12 : vector<1x8x128xf32> to vector<8x128xf32>
    %cst = arith.constant dense<0.000000e+00> : vector<8x128xf32>
    %14 = tpu.matmul %5, %1, %cst {dimension_numbers = #tpu.dot_dimension_numbers<[1], [0], [0], [1], [0, 0, 1, 1], [], []>} : vector<8x32xf32>, vector<32x128xf32>, vector<8x128xf32> -> vector<8x128xf32>
    %15 = arith.addf %13, %14 : vector<8x128xf32>
    %c1_19 = arith.constant 1 : index
    %c56 = arith.constant 56 : index
    %c0_20 = arith.constant 0 : index
    %16 = vector.load %arg0[%c1_19, %c56, %c0_20] : memref<2x64x128xf32, #tpu.memory_space<vmem>>, vector<1x8x128xf32>
    %17 = vector.shape_cast %16 : vector<1x8x128xf32> to vector<8x128xf32>
    %cst_21 = arith.constant dense<0.000000e+00> : vector<8x128xf32>
    %18 = tpu.matmul %9, %3, %cst_21 {dimension_numbers = #tpu.dot_dimension_numbers<[1], [0], [0], [1], [0, 0, 1, 1], [], []>} : vector<8x32xf32>, vector<32x128xf32>, vector<8x128xf32> -> vector<8x128xf32>
    %19 = arith.addf %17, %18 : vector<8x128xf32>
    %20 = vector.extract_strided_slice %15 {offsets = [0, 0], sizes = [8, 96], strides = [1, 1]} : vector<8x128xf32> to vector<8x96xf32>
    %21 = arith.negf %20 : vector<8x96xf32>
    %22 = math.exp %21 : vector<8x96xf32>
    %cst_22 = arith.constant 1.000000e+00 : f32
    %23 = vector.broadcast %cst_22 : f32 to vector<8x96xf32>
    %24 = arith.addf %23, %22 : vector<8x96xf32>
    %25 = arith.divf %23, %24 : vector<8x96xf32>
    %26 = vector.extract_strided_slice %25 {offsets = [0, 0], sizes = [8, 32], strides = [1, 1]} : vector<8x96xf32> to vector<8x32xf32>
    %27 = vector.extract_strided_slice %25 {offsets = [0, 32], sizes = [8, 32], strides = [1, 1]} : vector<8x96xf32> to vector<8x32xf32>
    %28 = vector.extract_strided_slice %25 {offsets = [0, 64], sizes = [8, 32], strides = [1, 1]} : vector<8x96xf32> to vector<8x32xf32>
    %29 = vector.extract_strided_slice %15 {offsets = [0, 96], sizes = [8, 32], strides = [1, 1]} : vector<8x128xf32> to vector<8x32xf32>
    %30 = math.tanh %29 : vector<8x32xf32>
    %31 = arith.mulf %27, %7 : vector<8x32xf32>
    %32 = arith.mulf %26, %30 : vector<8x32xf32>
    %33 = arith.addf %31, %32 : vector<8x32xf32>
    %34 = math.tanh %33 : vector<8x32xf32>
    %35 = arith.mulf %28, %34 : vector<8x32xf32>
    %36 = vector.extract_strided_slice %19 {offsets = [0, 0], sizes = [8, 96], strides = [1, 1]} : vector<8x128xf32> to vector<8x96xf32>
    %37 = arith.negf %36 : vector<8x96xf32>
    %38 = math.exp %37 : vector<8x96xf32>
    %cst_23 = arith.constant 1.000000e+00 : f32
    %39 = vector.broadcast %cst_23 : f32 to vector<8x96xf32>
    %40 = arith.addf %39, %38 : vector<8x96xf32>
    %41 = arith.divf %39, %40 : vector<8x96xf32>
    %42 = vector.extract_strided_slice %41 {offsets = [0, 0], sizes = [8, 32], strides = [1, 1]} : vector<8x96xf32> to vector<8x32xf32>
    %43 = vector.extract_strided_slice %41 {offsets = [0, 32], sizes = [8, 32], strides = [1, 1]} : vector<8x96xf32> to vector<8x32xf32>
    %44 = vector.extract_strided_slice %41 {offsets = [0, 64], sizes = [8, 32], strides = [1, 1]} : vector<8x96xf32> to vector<8x32xf32>
    %45 = vector.extract_strided_slice %19 {offsets = [0, 96], sizes = [8, 32], strides = [1, 1]} : vector<8x128xf32> to vector<8x32xf32>
    %46 = math.tanh %45 : vector<8x32xf32>
    %47 = arith.mulf %43, %11 : vector<8x32xf32>
    %48 = arith.mulf %42, %46 : vector<8x32xf32>
    %49 = arith.addf %47, %48 : vector<8x32xf32>
    %50 = math.tanh %49 : vector<8x32xf32>
    %51 = arith.mulf %44, %50 : vector<8x32xf32>
    %c0_24 = arith.constant 0 : index
    %c0_25 = arith.constant 0 : index
    %52 = vector.load %arg10[%c0_24, %c0_25] : memref<64x64xf32, #tpu.memory_space<vmem>>, vector<8x32xf32>
    tpu.vector_store %arg10[%c0_24, %c0_25], %35 {strides = array<i32>} : memref<64x64xf32, #tpu.memory_space<vmem>>, vector<8x32xf32>,
    %c56_26 = arith.constant 56 : index
    %c32 = arith.constant 32 : index
    %53 = vector.load %arg10[%c56_26, %c32] : memref<64x64xf32, #tpu.memory_space<vmem>>, vector<8x32xf32>
    tpu.vector_store %arg10[%c56_26, %c32], %51 {strides = array<i32>} : memref<64x64xf32, #tpu.memory_space<vmem>>, vector<8x32xf32>,
    %c0_27 = arith.constant 0 : index
    %c8 = arith.constant 8 : index
    %c0_28 = arith.constant 0 : index
    %54 = vector.load %arg0[%c0_27, %c8, %c0_28] : memref<2x64x128xf32, #tpu.memory_space<vmem>>, vector<1x8x128xf32>
    %55 = vector.shape_cast %54 : vector<1x8x128xf32> to vector<8x128xf32>
    %cst_29 = arith.constant dense<0.000000e+00> : vector<8x128xf32>
    %56 = tpu.matmul %35, %1, %cst_29 {dimension_numbers = #tpu.dot_dimension_numbers<[1], [0], [0], [1], [0, 0, 1, 1], [], []>} : vector<8x32xf32>, vector<32x128xf32>, vector<8x128xf32> -> vector<8x128xf32>
    %57 = arith.addf %55, %56 : vector<8x128xf32>
    %c1_30 = arith.constant 1 : index
    %c48 = arith.constant 48 : index
    %c0_31 = arith.constant 0 : index
    %58 = vector.load %arg0[%c1_30, %c48, %c0_31] : memref<2x64x128xf32, #tpu.memory_space<vmem>>, vector<1x8x128xf32>
    %59 = vector.shape_cast %58 : vector<1x8x128xf32> to vector<8x128xf32>
    %cst_32 = arith.constant dense<0.000000e+00> : vector<8x128xf32>
    %60 = tpu.matmul %51, %3, %cst_32 {dimension_numbers = #tpu.dot_dimension_numbers<[1], [0], [0], [1], [0, 0, 1, 1], [], []>} : vector<8x32xf32>, vector<32x128xf32>, vector<8x128xf32> -> vector<8x128xf32>
    %61 = arith.addf %59, %60 : vector<8x128xf32>
    %62 = vector.extract_strided_slice %57 {offsets = [0, 0], sizes = [8, 96], strides = [1, 1]} : vector<8x128xf32> to vector<8x96xf32>
    %63 = arith.negf %62 : vector<8x96xf32>
    %64 = math.exp %63 : vector<8x96xf32>
    %cst_33 = arith.constant 1.000000e+00 : f32
    %65 = vector.broadcast %cst_33 : f32 to vector<8x96xf32>
    %66 = arith.addf %65, %64 : vector<8x96xf32>
    %67 = arith.divf %65, %66 : vector<8x96xf32>
    %68 = vector.extract_strided_slice %67 {offsets = [0, 0], sizes = [8, 32], strides = [1, 1]} : vector<8x96xf32> to vector<8x32xf32>
    %69 = vector.extract_strided_slice %67 {offsets = [0, 32], sizes = [8, 32], strides = [1, 1]} : vector<8x96xf32> to vector<8x32xf32>
    %70 = vector.extract_strided_slice %67 {offsets = [0, 64], sizes = [8, 32], strides = [1, 1]} : vector<8x96xf32> to vector<8x32xf32>
    %71 = vector.extract_strided_slice %57 {offsets = [0, 96], sizes = [8, 32], strides = [1, 1]} : vector<8x128xf32> to vector<8x32xf32>
    %72 = math.tanh %71 : vector<8x32xf32>
    %73 = arith.mulf %69, %33 : vector<8x32xf32>
    %74 = arith.mulf %68, %72 : vector<8x32xf32>
    %75 = arith.addf %73, %74 : vector<8x32xf32>
    %76 = math.tanh %75 : vector<8x32xf32>
    %77 = arith.mulf %70, %76 : vector<8x32xf32>
    %78 = vector.extract_strided_slice %61 {offsets = [0, 0], sizes = [8, 96], strides = [1, 1]} : vector<8x128xf32> to vector<8x96xf32>
    %79 = arith.negf %78 : vector<8x96xf32>
    %80 = math.exp %79 : vector<8x96xf32>
    %cst_34 = arith.constant 1.000000e+00 : f32
    %81 = vector.broadcast %cst_34 : f32 to vector<8x96xf32>
    %82 = arith.addf %81, %80 : vector<8x96xf32>
    %83 = arith.divf %81, %82 : vector<8x96xf32>
    %84 = vector.extract_strided_slice %83 {offsets = [0, 0], sizes = [8, 32], strides = [1, 1]} : vector<8x96xf32> to vector<8x32xf32>
    %85 = vector.extract_strided_slice %83 {offsets = [0, 32], sizes = [8, 32], strides = [1, 1]} : vector<8x96xf32> to vector<8x32xf32>
    %86 = vector.extract_strided_slice %83 {offsets = [0, 64], sizes = [8, 32], strides = [1, 1]} : vector<8x96xf32> to vector<8x32xf32>
    %87 = vector.extract_strided_slice %61 {offsets = [0, 96], sizes = [8, 32], strides = [1, 1]} : vector<8x128xf32> to vector<8x32xf32>
    %88 = math.tanh %87 : vector<8x32xf32>
    %89 = arith.mulf %85, %49 : vector<8x32xf32>
    %90 = arith.mulf %84, %88 : vector<8x32xf32>
    %91 = arith.addf %89, %90 : vector<8x32xf32>
    %92 = math.tanh %91 : vector<8x32xf32>
    %93 = arith.mulf %86, %92 : vector<8x32xf32>
    %c8_35 = arith.constant 8 : index
    %c0_36 = arith.constant 0 : index
    %94 = vector.load %arg10[%c8_35, %c0_36] : memref<64x64xf32, #tpu.memory_space<vmem>>, vector<8x32xf32>
    tpu.vector_store %arg10[%c8_35, %c0_36], %77 {strides = array<i32>} : memref<64x64xf32, #tpu.memory_space<vmem>>, vector<8x32xf32>,
    %c48_37 = arith.constant 48 : index
    %c32_38 = arith.constant 32 : index
    %95 = vector.load %arg10[%c48_37, %c32_38] : memref<64x64xf32, #tpu.memory_space<vmem>>, vector<8x32xf32>
    tpu.vector_store %arg10[%c48_37, %c32_38], %93 {strides = array<i32>} : memref<64x64xf32, #tpu.memory_space<vmem>>, vector<8x32xf32>,
    %c0_39 = arith.constant 0 : index
    %c16 = arith.constant 16 : index
    %c0_40 = arith.constant 0 : index
    %96 = vector.load %arg0[%c0_39, %c16, %c0_40] : memref<2x64x128xf32, #tpu.memory_space<vmem>>, vector<1x8x128xf32>
    %97 = vector.shape_cast %96 : vector<1x8x128xf32> to vector<8x128xf32>
    %cst_41 = arith.constant dense<0.000000e+00> : vector<8x128xf32>
    %98 = tpu.matmul %77, %1, %cst_41 {dimension_numbers = #tpu.dot_dimension_numbers<[1], [0], [0], [1], [0, 0, 1, 1], [], []>} : vector<8x32xf32>, vector<32x128xf32>, vector<8x128xf32> -> vector<8x128xf32>
    %99 = arith.addf %97, %98 : vector<8x128xf32>
    %c1_42 = arith.constant 1 : index
    %c40 = arith.constant 40 : index
    %c0_43 = arith.constant 0 : index
    %100 = vector.load %arg0[%c1_42, %c40, %c0_43] : memref<2x64x128xf32, #tpu.memory_space<vmem>>, vector<1x8x128xf32>
    %101 = vector.shape_cast %100 : vector<1x8x128xf32> to vector<8x128xf32>
    %cst_44 = arith.constant dense<0.000000e+00> : vector<8x128xf32>
    %102 = tpu.matmul %93, %3, %cst_44 {dimension_numbers = #tpu.dot_dimension_numbers<[1], [0], [0], [1], [0, 0, 1, 1], [], []>} : vector<8x32xf32>, vector<32x128xf32>, vector<8x128xf32> -> vector<8x128xf32>
    %103 = arith.addf %101, %102 : vector<8x128xf32>
    %104 = vector.extract_strided_slice %99 {offsets = [0, 0], sizes = [8, 96], strides = [1, 1]} : vector<8x128xf32> to vector<8x96xf32>
    %105 = arith.negf %104 : vector<8x96xf32>
    %106 = math.exp %105 : vector<8x96xf32>
    %cst_45 = arith.constant 1.000000e+00 : f32
    %107 = vector.broadcast %cst_45 : f32 to vector<8x96xf32>
    %108 = arith.addf %107, %106 : vector<8x96xf32>
    %109 = arith.divf %107, %108 : vector<8x96xf32>
    %110 = vector.extract_strided_slice %109 {offsets = [0, 0], sizes = [8, 32], strides = [1, 1]} : vector<8x96xf32> to vector<8x32xf32>
    %111 = vector.extract_strided_slice %109 {offsets = [0, 32], sizes = [8, 32], strides = [1, 1]} : vector<8x96xf32> to vector<8x32xf32>
    %112 = vector.extract_strided_slice %109 {offsets = [0, 64], sizes = [8, 32], strides = [1, 1]} : vector<8x96xf32> to vector<8x32xf32>
    %113 = vector.extract_strided_slice %99 {offsets = [0, 96], sizes = [8, 32], strides = [1, 1]} : vector<8x128xf32> to vector<8x32xf32>
    %114 = math.tanh %113 : vector<8x32xf32>
    %115 = arith.mulf %111, %75 : vector<8x32xf32>
    %116 = arith.mulf %110, %114 : vector<8x32xf32>
    %117 = arith.addf %115, %116 : vector<8x32xf32>
    %118 = math.tanh %117 : vector<8x32xf32>
    %119 = arith.mulf %112, %118 : vector<8x32xf32>
    %120 = vector.extract_strided_slice %103 {offsets = [0, 0], sizes = [8, 96], strides = [1, 1]} : vector<8x128xf32> to vector<8x96xf32>
    %121 = arith.negf %120 : vector<8x96xf32>
    %122 = math.exp %121 : vector<8x96xf32>
    %cst_46 = arith.constant 1.000000e+00 : f32
    %123 = vector.broadcast %cst_46 : f32 to vector<8x96xf32>
    %124 = arith.addf %123, %122 : vector<8x96xf32>
    %125 = arith.divf %123, %124 : vector<8x96xf32>
    %126 = vector.extract_strided_slice %125 {offsets = [0, 0], sizes = [8, 32], strides = [1, 1]} : vector<8x96xf32> to vector<8x32xf32>
    %127 = vector.extract_strided_slice %125 {offsets = [0, 32], sizes = [8, 32], strides = [1, 1]} : vector<8x96xf32> to vector<8x32xf32>
    %128 = vector.extract_strided_slice %125 {offsets = [0, 64], sizes = [8, 32], strides = [1, 1]} : vector<8x96xf32> to vector<8x32xf32>
    %129 = vector.extract_strided_slice %103 {offsets = [0, 96], sizes = [8, 32], strides = [1, 1]} : vector<8x128xf32> to vector<8x32xf32>
    %130 = math.tanh %129 : vector<8x32xf32>
    %131 = arith.mulf %127, %91 : vector<8x32xf32>
    %132 = arith.mulf %126, %130 : vector<8x32xf32>
    %133 = arith.addf %131, %132 : vector<8x32xf32>
    %134 = math.tanh %133 : vector<8x32xf32>
    %135 = arith.mulf %128, %134 : vector<8x32xf32>
    %c16_47 = arith.constant 16 : index
    %c0_48 = arith.constant 0 : index
    %136 = vector.load %arg10[%c16_47, %c0_48] : memref<64x64xf32, #tpu.memory_space<vmem>>, vector<8x32xf32>
    tpu.vector_store %arg10[%c16_47, %c0_48], %119 {strides = array<i32>} : memref<64x64xf32, #tpu.memory_space<vmem>>, vector<8x32xf32>,
    %c40_49 = arith.constant 40 : index
    %c32_50 = arith.constant 32 : index
    %137 = vector.load %arg10[%c40_49, %c32_50] : memref<64x64xf32, #tpu.memory_space<vmem>>, vector<8x32xf32>
    tpu.vector_store %arg10[%c40_49, %c32_50], %135 {strides = array<i32>} : memref<64x64xf32, #tpu.memory_space<vmem>>, vector<8x32xf32>,
    %c0_51 = arith.constant 0 : index
    %c24 = arith.constant 24 : index
    %c0_52 = arith.constant 0 : index
    %138 = vector.load %arg0[%c0_51, %c24, %c0_52] : memref<2x64x128xf32, #tpu.memory_space<vmem>>, vector<1x8x128xf32>
    %139 = vector.shape_cast %138 : vector<1x8x128xf32> to vector<8x128xf32>
    %cst_53 = arith.constant dense<0.000000e+00> : vector<8x128xf32>
    %140 = tpu.matmul %119, %1, %cst_53 {dimension_numbers = #tpu.dot_dimension_numbers<[1], [0], [0], [1], [0, 0, 1, 1], [], []>} : vector<8x32xf32>, vector<32x128xf32>, vector<8x128xf32> -> vector<8x128xf32>
    %141 = arith.addf %139, %140 : vector<8x128xf32>
    %c1_54 = arith.constant 1 : index
    %c32_55 = arith.constant 32 : index
    %c0_56 = arith.constant 0 : index
    %142 = vector.load %arg0[%c1_54, %c32_55, %c0_56] : memref<2x64x128xf32, #tpu.memory_space<vmem>>, vector<1x8x128xf32>
    %143 = vector.shape_cast %142 : vector<1x8x128xf32> to vector<8x128xf32>
    %cst_57 = arith.constant dense<0.000000e+00> : vector<8x128xf32>
    %144 = tpu.matmul %135, %3, %cst_57 {dimension_numbers = #tpu.dot_dimension_numbers<[1], [0], [0], [1], [0, 0, 1, 1], [], []>} : vector<8x32xf32>, vector<32x128xf32>, vector<8x128xf32> -> vector<8x128xf32>
    %145 = arith.addf %143, %144 : vector<8x128xf32>
    %146 = vector.extract_strided_slice %141 {offsets = [0, 0], sizes = [8, 96], strides = [1, 1]} : vector<8x128xf32> to vector<8x96xf32>
    %147 = arith.negf %146 : vector<8x96xf32>
    %148 = math.exp %147 : vector<8x96xf32>
    %cst_58 = arith.constant 1.000000e+00 : f32
    %149 = vector.broadcast %cst_58 : f32 to vector<8x96xf32>
    %150 = arith.addf %149, %148 : vector<8x96xf32>
    %151 = arith.divf %149, %150 : vector<8x96xf32>
    %152 = vector.extract_strided_slice %151 {offsets = [0, 0], sizes = [8, 32], strides = [1, 1]} : vector<8x96xf32> to vector<8x32xf32>
    %153 = vector.extract_strided_slice %151 {offsets = [0, 32], sizes = [8, 32], strides = [1, 1]} : vector<8x96xf32> to vector<8x32xf32>
    %154 = vector.extract_strided_slice %151 {offsets = [0, 64], sizes = [8, 32], strides = [1, 1]} : vector<8x96xf32> to vector<8x32xf32>
    %155 = vector.extract_strided_slice %141 {offsets = [0, 96], sizes = [8, 32], strides = [1, 1]} : vector<8x128xf32> to vector<8x32xf32>
    %156 = math.tanh %155 : vector<8x32xf32>
    %157 = arith.mulf %153, %117 : vector<8x32xf32>
    %158 = arith.mulf %152, %156 : vector<8x32xf32>
    %159 = arith.addf %157, %158 : vector<8x32xf32>
    %160 = math.tanh %159 : vector<8x32xf32>
    %161 = arith.mulf %154, %160 : vector<8x32xf32>
    %162 = vector.extract_strided_slice %145 {offsets = [0, 0], sizes = [8, 96], strides = [1, 1]} : vector<8x128xf32> to vector<8x96xf32>
    %163 = arith.negf %162 : vector<8x96xf32>
    %164 = math.exp %163 : vector<8x96xf32>
    %cst_59 = arith.constant 1.000000e+00 : f32
    %165 = vector.broadcast %cst_59 : f32 to vector<8x96xf32>
    %166 = arith.addf %165, %164 : vector<8x96xf32>
    %167 = arith.divf %165, %166 : vector<8x96xf32>
    %168 = vector.extract_strided_slice %167 {offsets = [0, 0], sizes = [8, 32], strides = [1, 1]} : vector<8x96xf32> to vector<8x32xf32>
    %169 = vector.extract_strided_slice %167 {offsets = [0, 32], sizes = [8, 32], strides = [1, 1]} : vector<8x96xf32> to vector<8x32xf32>
    %170 = vector.extract_strided_slice %167 {offsets = [0, 64], sizes = [8, 32], strides = [1, 1]} : vector<8x96xf32> to vector<8x32xf32>
    %171 = vector.extract_strided_slice %145 {offsets = [0, 96], sizes = [8, 32], strides = [1, 1]} : vector<8x128xf32> to vector<8x32xf32>
    %172 = math.tanh %171 : vector<8x32xf32>
    %173 = arith.mulf %169, %133 : vector<8x32xf32>
    %174 = arith.mulf %168, %172 : vector<8x32xf32>
    %175 = arith.addf %173, %174 : vector<8x32xf32>
    %176 = math.tanh %175 : vector<8x32xf32>
    %177 = arith.mulf %170, %176 : vector<8x32xf32>
    %c24_60 = arith.constant 24 : index
    %c0_61 = arith.constant 0 : index
    %178 = vector.load %arg10[%c24_60, %c0_61] : memref<64x64xf32, #tpu.memory_space<vmem>>, vector<8x32xf32>
    tpu.vector_store %arg10[%c24_60, %c0_61], %161 {strides = array<i32>} : memref<64x64xf32, #tpu.memory_space<vmem>>, vector<8x32xf32>,
    %c32_62 = arith.constant 32 : index
    %c32_63 = arith.constant 32 : index
    %179 = vector.load %arg10[%c32_62, %c32_63] : memref<64x64xf32, #tpu.memory_space<vmem>>, vector<8x32xf32>
    tpu.vector_store %arg10[%c32_62, %c32_63], %177 {strides = array<i32>} : memref<64x64xf32, #tpu.memory_space<vmem>>, vector<8x32xf32>,
    %c0_64 = arith.constant 0 : index
    %c32_65 = arith.constant 32 : index
    %c0_66 = arith.constant 0 : index
    %180 = vector.load %arg0[%c0_64, %c32_65, %c0_66] : memref<2x64x128xf32, #tpu.memory_space<vmem>>, vector<1x8x128xf32>
    %181 = vector.shape_cast %180 : vector<1x8x128xf32> to vector<8x128xf32>
    %cst_67 = arith.constant dense<0.000000e+00> : vector<8x128xf32>
    %182 = tpu.matmul %161, %1, %cst_67 {dimension_numbers = #tpu.dot_dimension_numbers<[1], [0], [0], [1], [0, 0, 1, 1], [], []>} : vector<8x32xf32>, vector<32x128xf32>, vector<8x128xf32> -> vector<8x128xf32>
    %183 = arith.addf %181, %182 : vector<8x128xf32>
    %c1_68 = arith.constant 1 : index
    %c24_69 = arith.constant 24 : index
    %c0_70 = arith.constant 0 : index
    %184 = vector.load %arg0[%c1_68, %c24_69, %c0_70] : memref<2x64x128xf32, #tpu.memory_space<vmem>>, vector<1x8x128xf32>
    %185 = vector.shape_cast %184 : vector<1x8x128xf32> to vector<8x128xf32>
    %cst_71 = arith.constant dense<0.000000e+00> : vector<8x128xf32>
    %186 = tpu.matmul %177, %3, %cst_71 {dimension_numbers = #tpu.dot_dimension_numbers<[1], [0], [0], [1], [0, 0, 1, 1], [], []>} : vector<8x32xf32>, vector<32x128xf32>, vector<8x128xf32> -> vector<8x128xf32>
    %187 = arith.addf %185, %186 : vector<8x128xf32>
    %188 = vector.extract_strided_slice %183 {offsets = [0, 0], sizes = [8, 96], strides = [1, 1]} : vector<8x128xf32> to vector<8x96xf32>
    %189 = arith.negf %188 : vector<8x96xf32>
    %190 = math.exp %189 : vector<8x96xf32>
    %cst_72 = arith.constant 1.000000e+00 : f32
    %191 = vector.broadcast %cst_72 : f32 to vector<8x96xf32>
    %192 = arith.addf %191, %190 : vector<8x96xf32>
    %193 = arith.divf %191, %192 : vector<8x96xf32>
    %194 = vector.extract_strided_slice %193 {offsets = [0, 0], sizes = [8, 32], strides = [1, 1]} : vector<8x96xf32> to vector<8x32xf32>
    %195 = vector.extract_strided_slice %193 {offsets = [0, 32], sizes = [8, 32], strides = [1, 1]} : vector<8x96xf32> to vector<8x32xf32>
    %196 = vector.extract_strided_slice %193 {offsets = [0, 64], sizes = [8, 32], strides = [1, 1]} : vector<8x96xf32> to vector<8x32xf32>
    %197 = vector.extract_strided_slice %183 {offsets = [0, 96], sizes = [8, 32], strides = [1, 1]} : vector<8x128xf32> to vector<8x32xf32>
    %198 = math.tanh %197 : vector<8x32xf32>
    %199 = arith.mulf %195, %159 : vector<8x32xf32>
    %200 = arith.mulf %194, %198 : vector<8x32xf32>
    %201 = arith.addf %199, %200 : vector<8x32xf32>
    %202 = math.tanh %201 : vector<8x32xf32>
    %203 = arith.mulf %196, %202 : vector<8x32xf32>
    %204 = vector.extract_strided_slice %187 {offsets = [0, 0], sizes = [8, 96], strides = [1, 1]} : vector<8x128xf32> to vector<8x96xf32>
    %205 = arith.negf %204 : vector<8x96xf32>
    %206 = math.exp %205 : vector<8x96xf32>
    %cst_73 = arith.constant 1.000000e+00 : f32
    %207 = vector.broadcast %cst_73 : f32 to vector<8x96xf32>
    %208 = arith.addf %207, %206 : vector<8x96xf32>
    %209 = arith.divf %207, %208 : vector<8x96xf32>
    %210 = vector.extract_strided_slice %209 {offsets = [0, 0], sizes = [8, 32], strides = [1, 1]} : vector<8x96xf32> to vector<8x32xf32>
    %211 = vector.extract_strided_slice %209 {offsets = [0, 32], sizes = [8, 32], strides = [1, 1]} : vector<8x96xf32> to vector<8x32xf32>
    %212 = vector.extract_strided_slice %209 {offsets = [0, 64], sizes = [8, 32], strides = [1, 1]} : vector<8x96xf32> to vector<8x32xf32>
    %213 = vector.extract_strided_slice %187 {offsets = [0, 96], sizes = [8, 32], strides = [1, 1]} : vector<8x128xf32> to vector<8x32xf32>
    %214 = math.tanh %213 : vector<8x32xf32>
    %215 = arith.mulf %211, %175 : vector<8x32xf32>
    %216 = arith.mulf %210, %214 : vector<8x32xf32>
    %217 = arith.addf %215, %216 : vector<8x32xf32>
    %218 = math.tanh %217 : vector<8x32xf32>
    %219 = arith.mulf %212, %218 : vector<8x32xf32>
    %c32_74 = arith.constant 32 : index
    %c0_75 = arith.constant 0 : index
    %220 = vector.load %arg10[%c32_74, %c0_75] : memref<64x64xf32, #tpu.memory_space<vmem>>, vector<8x32xf32>
    tpu.vector_store %arg10[%c32_74, %c0_75], %203 {strides = array<i32>} : memref<64x64xf32, #tpu.memory_space<vmem>>, vector<8x32xf32>,
    %c24_76 = arith.constant 24 : index
    %c32_77 = arith.constant 32 : index
    %221 = vector.load %arg10[%c24_76, %c32_77] : memref<64x64xf32, #tpu.memory_space<vmem>>, vector<8x32xf32>
    tpu.vector_store %arg10[%c24_76, %c32_77], %219 {strides = array<i32>} : memref<64x64xf32, #tpu.memory_space<vmem>>, vector<8x32xf32>,
    %c0_78 = arith.constant 0 : index
    %c40_79 = arith.constant 40 : index
    %c0_80 = arith.constant 0 : index
    %222 = vector.load %arg0[%c0_78, %c40_79, %c0_80] : memref<2x64x128xf32, #tpu.memory_space<vmem>>, vector<1x8x128xf32>
    %223 = vector.shape_cast %222 : vector<1x8x128xf32> to vector<8x128xf32>
    %cst_81 = arith.constant dense<0.000000e+00> : vector<8x128xf32>
    %224 = tpu.matmul %203, %1, %cst_81 {dimension_numbers = #tpu.dot_dimension_numbers<[1], [0], [0], [1], [0, 0, 1, 1], [], []>} : vector<8x32xf32>, vector<32x128xf32>, vector<8x128xf32> -> vector<8x128xf32>
    %225 = arith.addf %223, %224 : vector<8x128xf32>
    %c1_82 = arith.constant 1 : index
    %c16_83 = arith.constant 16 : index
    %c0_84 = arith.constant 0 : index
    %226 = vector.load %arg0[%c1_82, %c16_83, %c0_84] : memref<2x64x128xf32, #tpu.memory_space<vmem>>, vector<1x8x128xf32>
    %227 = vector.shape_cast %226 : vector<1x8x128xf32> to vector<8x128xf32>
    %cst_85 = arith.constant dense<0.000000e+00> : vector<8x128xf32>
    %228 = tpu.matmul %219, %3, %cst_85 {dimension_numbers = #tpu.dot_dimension_numbers<[1], [0], [0], [1], [0, 0, 1, 1], [], []>} : vector<8x32xf32>, vector<32x128xf32>, vector<8x128xf32> -> vector<8x128xf32>
    %229 = arith.addf %227, %228 : vector<8x128xf32>
    %230 = vector.extract_strided_slice %225 {offsets = [0, 0], sizes = [8, 96], strides = [1, 1]} : vector<8x128xf32> to vector<8x96xf32>
    %231 = arith.negf %230 : vector<8x96xf32>
    %232 = math.exp %231 : vector<8x96xf32>
    %cst_86 = arith.constant 1.000000e+00 : f32
    %233 = vector.broadcast %cst_86 : f32 to vector<8x96xf32>
    %234 = arith.addf %233, %232 : vector<8x96xf32>
    %235 = arith.divf %233, %234 : vector<8x96xf32>
    %236 = vector.extract_strided_slice %235 {offsets = [0, 0], sizes = [8, 32], strides = [1, 1]} : vector<8x96xf32> to vector<8x32xf32>
    %237 = vector.extract_strided_slice %235 {offsets = [0, 32], sizes = [8, 32], strides = [1, 1]} : vector<8x96xf32> to vector<8x32xf32>
    %238 = vector.extract_strided_slice %235 {offsets = [0, 64], sizes = [8, 32], strides = [1, 1]} : vector<8x96xf32> to vector<8x32xf32>
    %239 = vector.extract_strided_slice %225 {offsets = [0, 96], sizes = [8, 32], strides = [1, 1]} : vector<8x128xf32> to vector<8x32xf32>
    %240 = math.tanh %239 : vector<8x32xf32>
    %241 = arith.mulf %237, %201 : vector<8x32xf32>
    %242 = arith.mulf %236, %240 : vector<8x32xf32>
    %243 = arith.addf %241, %242 : vector<8x32xf32>
    %244 = math.tanh %243 : vector<8x32xf32>
    %245 = arith.mulf %238, %244 : vector<8x32xf32>
    %246 = vector.extract_strided_slice %229 {offsets = [0, 0], sizes = [8, 96], strides = [1, 1]} : vector<8x128xf32> to vector<8x96xf32>
    %247 = arith.negf %246 : vector<8x96xf32>
    %248 = math.exp %247 : vector<8x96xf32>
    %cst_87 = arith.constant 1.000000e+00 : f32
    %249 = vector.broadcast %cst_87 : f32 to vector<8x96xf32>
    %250 = arith.addf %249, %248 : vector<8x96xf32>
    %251 = arith.divf %249, %250 : vector<8x96xf32>
    %252 = vector.extract_strided_slice %251 {offsets = [0, 0], sizes = [8, 32], strides = [1, 1]} : vector<8x96xf32> to vector<8x32xf32>
    %253 = vector.extract_strided_slice %251 {offsets = [0, 32], sizes = [8, 32], strides = [1, 1]} : vector<8x96xf32> to vector<8x32xf32>
    %254 = vector.extract_strided_slice %251 {offsets = [0, 64], sizes = [8, 32], strides = [1, 1]} : vector<8x96xf32> to vector<8x32xf32>
    %255 = vector.extract_strided_slice %229 {offsets = [0, 96], sizes = [8, 32], strides = [1, 1]} : vector<8x128xf32> to vector<8x32xf32>
    %256 = math.tanh %255 : vector<8x32xf32>
    %257 = arith.mulf %253, %217 : vector<8x32xf32>
    %258 = arith.mulf %252, %256 : vector<8x32xf32>
    %259 = arith.addf %257, %258 : vector<8x32xf32>
    %260 = math.tanh %259 : vector<8x32xf32>
    %261 = arith.mulf %254, %260 : vector<8x32xf32>
    %c40_88 = arith.constant 40 : index
    %c0_89 = arith.constant 0 : index
    %262 = vector.load %arg10[%c40_88, %c0_89] : memref<64x64xf32, #tpu.memory_space<vmem>>, vector<8x32xf32>
    tpu.vector_store %arg10[%c40_88, %c0_89], %245 {strides = array<i32>} : memref<64x64xf32, #tpu.memory_space<vmem>>, vector<8x32xf32>,
    %c16_90 = arith.constant 16 : index
    %c32_91 = arith.constant 32 : index
    %263 = vector.load %arg10[%c16_90, %c32_91] : memref<64x64xf32, #tpu.memory_space<vmem>>, vector<8x32xf32>
    tpu.vector_store %arg10[%c16_90, %c32_91], %261 {strides = array<i32>} : memref<64x64xf32, #tpu.memory_space<vmem>>, vector<8x32xf32>,
    %c0_92 = arith.constant 0 : index
    %c48_93 = arith.constant 48 : index
    %c0_94 = arith.constant 0 : index
    %264 = vector.load %arg0[%c0_92, %c48_93, %c0_94] : memref<2x64x128xf32, #tpu.memory_space<vmem>>, vector<1x8x128xf32>
    %265 = vector.shape_cast %264 : vector<1x8x128xf32> to vector<8x128xf32>
    %cst_95 = arith.constant dense<0.000000e+00> : vector<8x128xf32>
    %266 = tpu.matmul %245, %1, %cst_95 {dimension_numbers = #tpu.dot_dimension_numbers<[1], [0], [0], [1], [0, 0, 1, 1], [], []>} : vector<8x32xf32>, vector<32x128xf32>, vector<8x128xf32> -> vector<8x128xf32>
    %267 = arith.addf %265, %266 : vector<8x128xf32>
    %c1_96 = arith.constant 1 : index
    %c8_97 = arith.constant 8 : index
    %c0_98 = arith.constant 0 : index
    %268 = vector.load %arg0[%c1_96, %c8_97, %c0_98] : memref<2x64x128xf32, #tpu.memory_space<vmem>>, vector<1x8x128xf32>
    %269 = vector.shape_cast %268 : vector<1x8x128xf32> to vector<8x128xf32>
    %cst_99 = arith.constant dense<0.000000e+00> : vector<8x128xf32>
    %270 = tpu.matmul %261, %3, %cst_99 {dimension_numbers = #tpu.dot_dimension_numbers<[1], [0], [0], [1], [0, 0, 1, 1], [], []>} : vector<8x32xf32>, vector<32x128xf32>, vector<8x128xf32> -> vector<8x128xf32>
    %271 = arith.addf %269, %270 : vector<8x128xf32>
    %272 = vector.extract_strided_slice %267 {offsets = [0, 0], sizes = [8, 96], strides = [1, 1]} : vector<8x128xf32> to vector<8x96xf32>
    %273 = arith.negf %272 : vector<8x96xf32>
    %274 = math.exp %273 : vector<8x96xf32>
    %cst_100 = arith.constant 1.000000e+00 : f32
    %275 = vector.broadcast %cst_100 : f32 to vector<8x96xf32>
    %276 = arith.addf %275, %274 : vector<8x96xf32>
    %277 = arith.divf %275, %276 : vector<8x96xf32>
    %278 = vector.extract_strided_slice %277 {offsets = [0, 0], sizes = [8, 32], strides = [1, 1]} : vector<8x96xf32> to vector<8x32xf32>
    %279 = vector.extract_strided_slice %277 {offsets = [0, 32], sizes = [8, 32], strides = [1, 1]} : vector<8x96xf32> to vector<8x32xf32>
    %280 = vector.extract_strided_slice %277 {offsets = [0, 64], sizes = [8, 32], strides = [1, 1]} : vector<8x96xf32> to vector<8x32xf32>
    %281 = vector.extract_strided_slice %267 {offsets = [0, 96], sizes = [8, 32], strides = [1, 1]} : vector<8x128xf32> to vector<8x32xf32>
    %282 = math.tanh %281 : vector<8x32xf32>
    %283 = arith.mulf %279, %243 : vector<8x32xf32>
    %284 = arith.mulf %278, %282 : vector<8x32xf32>
    %285 = arith.addf %283, %284 : vector<8x32xf32>
    %286 = math.tanh %285 : vector<8x32xf32>
    %287 = arith.mulf %280, %286 : vector<8x32xf32>
    %288 = vector.extract_strided_slice %271 {offsets = [0, 0], sizes = [8, 96], strides = [1, 1]} : vector<8x128xf32> to vector<8x96xf32>
    %289 = arith.negf %288 : vector<8x96xf32>
    %290 = math.exp %289 : vector<8x96xf32>
    %cst_101 = arith.constant 1.000000e+00 : f32
    %291 = vector.broadcast %cst_101 : f32 to vector<8x96xf32>
    %292 = arith.addf %291, %290 : vector<8x96xf32>
    %293 = arith.divf %291, %292 : vector<8x96xf32>
    %294 = vector.extract_strided_slice %293 {offsets = [0, 0], sizes = [8, 32], strides = [1, 1]} : vector<8x96xf32> to vector<8x32xf32>
    %295 = vector.extract_strided_slice %293 {offsets = [0, 32], sizes = [8, 32], strides = [1, 1]} : vector<8x96xf32> to vector<8x32xf32>
    %296 = vector.extract_strided_slice %293 {offsets = [0, 64], sizes = [8, 32], strides = [1, 1]} : vector<8x96xf32> to vector<8x32xf32>
    %297 = vector.extract_strided_slice %271 {offsets = [0, 96], sizes = [8, 32], strides = [1, 1]} : vector<8x128xf32> to vector<8x32xf32>
    %298 = math.tanh %297 : vector<8x32xf32>
    %299 = arith.mulf %295, %259 : vector<8x32xf32>
    %300 = arith.mulf %294, %298 : vector<8x32xf32>
    %301 = arith.addf %299, %300 : vector<8x32xf32>
    %302 = math.tanh %301 : vector<8x32xf32>
    %303 = arith.mulf %296, %302 : vector<8x32xf32>
    %c48_102 = arith.constant 48 : index
    %c0_103 = arith.constant 0 : index
    %304 = vector.load %arg10[%c48_102, %c0_103] : memref<64x64xf32, #tpu.memory_space<vmem>>, vector<8x32xf32>
    tpu.vector_store %arg10[%c48_102, %c0_103], %287 {strides = array<i32>} : memref<64x64xf32, #tpu.memory_space<vmem>>, vector<8x32xf32>,
    %c8_104 = arith.constant 8 : index
    %c32_105 = arith.constant 32 : index
    %305 = vector.load %arg10[%c8_104, %c32_105] : memref<64x64xf32, #tpu.memory_space<vmem>>, vector<8x32xf32>
    tpu.vector_store %arg10[%c8_104, %c32_105], %303 {strides = array<i32>} : memref<64x64xf32, #tpu.memory_space<vmem>>, vector<8x32xf32>,
    %c0_106 = arith.constant 0 : index
    %c56_107 = arith.constant 56 : index
    %c0_108 = arith.constant 0 : index
    %306 = vector.load %arg0[%c0_106, %c56_107, %c0_108] : memref<2x64x128xf32, #tpu.memory_space<vmem>>, vector<1x8x128xf32>
    %307 = vector.shape_cast %306 : vector<1x8x128xf32> to vector<8x128xf32>
    %cst_109 = arith.constant dense<0.000000e+00> : vector<8x128xf32>
    %308 = tpu.matmul %287, %1, %cst_109 {dimension_numbers = #tpu.dot_dimension_numbers<[1], [0], [0], [1], [0, 0, 1, 1], [], []>} : vector<8x32xf32>, vector<32x128xf32>, vector<8x128xf32> -> vector<8x128xf32>
    %309 = arith.addf %307, %308 : vector<8x128xf32>
    %c1_110 = arith.constant 1 : index
    %c0_111 = arith.constant 0 : index
    %c0_112 = arith.constant 0 : index
    %310 = vector.load %arg0[%c1_110, %c0_111, %c0_112] : memref<2x64x128xf32, #tpu.memory_space<vmem>>, vector<1x8x128xf32>
    %311 = vector.shape_cast %310 : vector<1x8x128xf32> to vector<8x128xf32>
    %cst_113 = arith.constant dense<0.000000e+00> : vector<8x128xf32>
    %312 = tpu.matmul %303, %3, %cst_113 {dimension_numbers = #tpu.dot_dimension_numbers<[1], [0], [0], [1], [0, 0, 1, 1], [], []>} : vector<8x32xf32>, vector<32x128xf32>, vector<8x128xf32> -> vector<8x128xf32>
    %313 = arith.addf %311, %312 : vector<8x128xf32>
    %314 = vector.extract_strided_slice %309 {offsets = [0, 0], sizes = [8, 96], strides = [1, 1]} : vector<8x128xf32> to vector<8x96xf32>
    %315 = arith.negf %314 : vector<8x96xf32>
    %316 = math.exp %315 : vector<8x96xf32>
    %cst_114 = arith.constant 1.000000e+00 : f32
    %317 = vector.broadcast %cst_114 : f32 to vector<8x96xf32>
    %318 = arith.addf %317, %316 : vector<8x96xf32>
    %319 = arith.divf %317, %318 : vector<8x96xf32>
    %320 = vector.extract_strided_slice %319 {offsets = [0, 0], sizes = [8, 32], strides = [1, 1]} : vector<8x96xf32> to vector<8x32xf32>
    %321 = vector.extract_strided_slice %319 {offsets = [0, 32], sizes = [8, 32], strides = [1, 1]} : vector<8x96xf32> to vector<8x32xf32>
    %322 = vector.extract_strided_slice %319 {offsets = [0, 64], sizes = [8, 32], strides = [1, 1]} : vector<8x96xf32> to vector<8x32xf32>
    %323 = vector.extract_strided_slice %309 {offsets = [0, 96], sizes = [8, 32], strides = [1, 1]} : vector<8x128xf32> to vector<8x32xf32>
    %324 = math.tanh %323 : vector<8x32xf32>
    %325 = arith.mulf %321, %285 : vector<8x32xf32>
    %326 = arith.mulf %320, %324 : vector<8x32xf32>
    %327 = arith.addf %325, %326 : vector<8x32xf32>
    %328 = math.tanh %327 : vector<8x32xf32>
    %329 = arith.mulf %322, %328 : vector<8x32xf32>
    %330 = vector.extract_strided_slice %313 {offsets = [0, 0], sizes = [8, 96], strides = [1, 1]} : vector<8x128xf32> to vector<8x96xf32>
    %331 = arith.negf %330 : vector<8x96xf32>
    %332 = math.exp %331 : vector<8x96xf32>
    %cst_115 = arith.constant 1.000000e+00 : f32
    %333 = vector.broadcast %cst_115 : f32 to vector<8x96xf32>
    %334 = arith.addf %333, %332 : vector<8x96xf32>
    %335 = arith.divf %333, %334 : vector<8x96xf32>
    %336 = vector.extract_strided_slice %335 {offsets = [0, 0], sizes = [8, 32], strides = [1, 1]} : vector<8x96xf32> to vector<8x32xf32>
    %337 = vector.extract_strided_slice %335 {offsets = [0, 32], sizes = [8, 32], strides = [1, 1]} : vector<8x96xf32> to vector<8x32xf32>
    %338 = vector.extract_strided_slice %335 {offsets = [0, 64], sizes = [8, 32], strides = [1, 1]} : vector<8x96xf32> to vector<8x32xf32>
    %339 = vector.extract_strided_slice %313 {offsets = [0, 96], sizes = [8, 32], strides = [1, 1]} : vector<8x128xf32> to vector<8x32xf32>
    %340 = math.tanh %339 : vector<8x32xf32>
    %341 = arith.mulf %337, %301 : vector<8x32xf32>
    %342 = arith.mulf %336, %340 : vector<8x32xf32>
    %343 = arith.addf %341, %342 : vector<8x32xf32>
    %344 = math.tanh %343 : vector<8x32xf32>
    %345 = arith.mulf %338, %344 : vector<8x32xf32>
    %c56_116 = arith.constant 56 : index
    %c0_117 = arith.constant 0 : index
    %346 = vector.load %arg10[%c56_116, %c0_117] : memref<64x64xf32, #tpu.memory_space<vmem>>, vector<8x32xf32>
    tpu.vector_store %arg10[%c56_116, %c0_117], %329 {strides = array<i32>} : memref<64x64xf32, #tpu.memory_space<vmem>>, vector<8x32xf32>,
    %c0_118 = arith.constant 0 : index
    %c32_119 = arith.constant 32 : index
    %347 = vector.load %arg10[%c0_118, %c32_119] : memref<64x64xf32, #tpu.memory_space<vmem>>, vector<8x32xf32>
    tpu.vector_store %arg10[%c0_118, %c32_119], %345 {strides = array<i32>} : memref<64x64xf32, #tpu.memory_space<vmem>>, vector<8x32xf32>,
    %c0_120 = arith.constant 0 : index
    %c0_121 = arith.constant 0 : index
    %348 = vector.load %arg10[%c0_120, %c0_121] : memref<64x64xf32, #tpu.memory_space<vmem>>, vector<64x64xf32>
    %c0_122 = arith.constant 0 : index
    %c0_123 = arith.constant 0 : index
    %c0_124 = arith.constant 0 : index
    %349 = vector.load %arg2[%c0_122, %c0_123, %c0_124] : memref<2x64x128xf32, #tpu.memory_space<vmem>>, vector<1x64x128xf32>
    %350 = vector.shape_cast %349 : vector<1x64x128xf32> to vector<64x128xf32>
    %cst_125 = arith.constant dense<0.000000e+00> : vector<64x128xf32>
    %351 = tpu.matmul %348, %350, %cst_125 {dimension_numbers = #tpu.dot_dimension_numbers<[1], [0], [0], [1], [0, 0, 1, 1], [], []>} : vector<64x64xf32>, vector<64x128xf32>, vector<64x128xf32> -> vector<64x128xf32>
    %c0_126 = arith.constant 0 : index
    %c0_127 = arith.constant 0 : index
    %c0_128 = arith.constant 0 : index
    %352 = vector.load %arg4[%c0_126, %c0_127, %c0_128] : memref<2x1x128xf32, #tpu.memory_space<vmem>>, vector<1x1x128xf32>
    %353 = vector.shape_cast %352 : vector<1x1x128xf32> to vector<1x128xf32>
    %354 = vector.broadcast %353 : vector<1x128xf32> to vector<64x128xf32>
    %355 = arith.addf %351, %354 : vector<64x128xf32>
    %c0_129 = arith.constant 0 : index
    %c0_130 = arith.constant 0 : index
    %c0_131 = arith.constant 0 : index
    %356 = vector.load %arg11[%c0_129, %c0_130, %c0_131] : memref<2x64x128xf32, #tpu.memory_space<vmem>>, vector<1x64x128xf32>
    %357 = vector.shape_cast %356 : vector<1x64x128xf32> to vector<64x128xf32>
    %358 = vector.shape_cast %355 : vector<64x128xf32> to vector<1x64x128xf32>
    tpu.vector_store %arg11[%c0_129, %c0_130, %c0_131], %358 {strides = array<i32>} : memref<2x64x128xf32, #tpu.memory_space<vmem>>, vector<1x64x128xf32>,
    %c1_132 = arith.constant 1 : index
    %c0_133 = arith.constant 0 : index
    %c0_134 = arith.constant 0 : index
    %359 = vector.load %arg2[%c1_132, %c0_133, %c0_134] : memref<2x64x128xf32, #tpu.memory_space<vmem>>, vector<1x64x128xf32>
    %360 = vector.shape_cast %359 : vector<1x64x128xf32> to vector<64x128xf32>
    %cst_135 = arith.constant dense<0.000000e+00> : vector<64x128xf32>
    %361 = tpu.matmul %348, %360, %cst_135 {dimension_numbers = #tpu.dot_dimension_numbers<[1], [0], [0], [1], [0, 0, 1, 1], [], []>} : vector<64x64xf32>, vector<64x128xf32>, vector<64x128xf32> -> vector<64x128xf32>
    %c1_136 = arith.constant 1 : index
    %c0_137 = arith.constant 0 : index
    %c0_138 = arith.constant 0 : index
    %362 = vector.load %arg4[%c1_136, %c0_137, %c0_138] : memref<2x1x128xf32, #tpu.memory_space<vmem>>, vector<1x1x128xf32>
    %363 = vector.shape_cast %362 : vector<1x1x128xf32> to vector<1x128xf32>
    %364 = vector.broadcast %363 : vector<1x128xf32> to vector<64x128xf32>
    %365 = arith.addf %361, %364 : vector<64x128xf32>
    %c1_139 = arith.constant 1 : index
    %c0_140 = arith.constant 0 : index
    %c0_141 = arith.constant 0 : index
    %366 = vector.load %arg11[%c1_139, %c0_140, %c0_141] : memref<2x64x128xf32, #tpu.memory_space<vmem>>, vector<1x64x128xf32>
    %367 = vector.shape_cast %366 : vector<1x64x128xf32> to vector<64x128xf32>
    %368 = vector.shape_cast %365 : vector<64x128xf32> to vector<1x64x128xf32>
    tpu.vector_store %arg11[%c1_139, %c0_140, %c0_141], %368 {strides = array<i32>} : memref<2x64x128xf32, #tpu.memory_space<vmem>>, vector<1x64x128xf32>,
    %c0_142 = arith.constant 0 : index
    %c0_143 = arith.constant 0 : index
    %c0_144 = arith.constant 0 : index
    %369 = vector.load %arg3[%c0_142, %c0_143, %c0_144] : memref<2x32x128xf32, #tpu.memory_space<vmem>>, vector<1x32x128xf32>
    %370 = vector.shape_cast %369 : vector<1x32x128xf32> to vector<32x128xf32>
    %c1_145 = arith.constant 1 : index
    %c0_146 = arith.constant 0 : index
    %c0_147 = arith.constant 0 : index
    %371 = vector.load %arg3[%c1_145, %c0_146, %c0_147] : memref<2x32x128xf32, #tpu.memory_space<vmem>>, vector<1x32x128xf32>
    %372 = vector.shape_cast %371 : vector<1x32x128xf32> to vector<32x128xf32>
    %c2 = arith.constant 2 : index
    %c0_148 = arith.constant 0 : index
    %c0_149 = arith.constant 0 : index
    %373 = vector.load %arg5[%c2, %c0_148, %c0_149] : memref<4x8x32xf32, #tpu.memory_space<vmem>>, vector<1x8x32xf32>
    %374 = vector.shape_cast %373 : vector<1x8x32xf32> to vector<8x32xf32>
    %c2_150 = arith.constant 2 : index
    %c0_151 = arith.constant 0 : index
    %c0_152 = arith.constant 0 : index
    %375 = vector.load %arg6[%c2_150, %c0_151, %c0_152] : memref<4x8x32xf32, #tpu.memory_space<vmem>>, vector<1x8x32xf32>
    %376 = vector.shape_cast %375 : vector<1x8x32xf32> to vector<8x32xf32>
    %c3 = arith.constant 3 : index
    %c0_153 = arith.constant 0 : index
    %c0_154 = arith.constant 0 : index
    %377 = vector.load %arg5[%c3, %c0_153, %c0_154] : memref<4x8x32xf32, #tpu.memory_space<vmem>>, vector<1x8x32xf32>
    %378 = vector.shape_cast %377 : vector<1x8x32xf32> to vector<8x32xf32>
    %c3_155 = arith.constant 3 : index
    %c0_156 = arith.constant 0 : index
    %c0_157 = arith.constant 0 : index
    %379 = vector.load %arg6[%c3_155, %c0_156, %c0_157] : memref<4x8x32xf32, #tpu.memory_space<vmem>>, vector<1x8x32xf32>
    %380 = vector.shape_cast %379 : vector<1x8x32xf32> to vector<8x32xf32>
    %c0_158 = arith.constant 0 : index
    %c0_159 = arith.constant 0 : index
    %c0_160 = arith.constant 0 : index
    %381 = vector.load %arg11[%c0_158, %c0_159, %c0_160] : memref<2x64x128xf32, #tpu.memory_space<vmem>>, vector<1x8x128xf32>
    %382 = vector.shape_cast %381 : vector<1x8x128xf32> to vector<8x128xf32>
    %cst_161 = arith.constant dense<0.000000e+00> : vector<8x128xf32>
    %383 = tpu.matmul %374, %370, %cst_161 {dimension_numbers = #tpu.dot_dimension_numbers<[1], [0], [0], [1], [0, 0, 1, 1], [], []>} : vector<8x32xf32>, vector<32x128xf32>, vector<8x128xf32> -> vector<8x128xf32>
    %384 = arith.addf %382, %383 : vector<8x128xf32>
    %c1_162 = arith.constant 1 : index
    %c56_163 = arith.constant 56 : index
    %c0_164 = arith.constant 0 : index
    %385 = vector.load %arg11[%c1_162, %c56_163, %c0_164] : memref<2x64x128xf32, #tpu.memory_space<vmem>>, vector<1x8x128xf32>
    %386 = vector.shape_cast %385 : vector<1x8x128xf32> to vector<8x128xf32>
    %cst_165 = arith.constant dense<0.000000e+00> : vector<8x128xf32>
    %387 = tpu.matmul %378, %372, %cst_165 {dimension_numbers = #tpu.dot_dimension_numbers<[1], [0], [0], [1], [0, 0, 1, 1], [], []>} : vector<8x32xf32>, vector<32x128xf32>, vector<8x128xf32> -> vector<8x128xf32>
    %388 = arith.addf %386, %387 : vector<8x128xf32>
    %389 = vector.extract_strided_slice %384 {offsets = [0, 0], sizes = [8, 96], strides = [1, 1]} : vector<8x128xf32> to vector<8x96xf32>
    %390 = arith.negf %389 : vector<8x96xf32>
    %391 = math.exp %390 : vector<8x96xf32>
    %cst_166 = arith.constant 1.000000e+00 : f32
    %392 = vector.broadcast %cst_166 : f32 to vector<8x96xf32>
    %393 = arith.addf %392, %391 : vector<8x96xf32>
    %394 = arith.divf %392, %393 : vector<8x96xf32>
    %395 = vector.extract_strided_slice %394 {offsets = [0, 0], sizes = [8, 32], strides = [1, 1]} : vector<8x96xf32> to vector<8x32xf32>
    %396 = vector.extract_strided_slice %394 {offsets = [0, 32], sizes = [8, 32], strides = [1, 1]} : vector<8x96xf32> to vector<8x32xf32>
    %397 = vector.extract_strided_slice %394 {offsets = [0, 64], sizes = [8, 32], strides = [1, 1]} : vector<8x96xf32> to vector<8x32xf32>
    %398 = vector.extract_strided_slice %384 {offsets = [0, 96], sizes = [8, 32], strides = [1, 1]} : vector<8x128xf32> to vector<8x32xf32>
    %399 = math.tanh %398 : vector<8x32xf32>
    %400 = arith.mulf %396, %376 : vector<8x32xf32>
    %401 = arith.mulf %395, %399 : vector<8x32xf32>
    %402 = arith.addf %400, %401 : vector<8x32xf32>
    %403 = math.tanh %402 : vector<8x32xf32>
    %404 = arith.mulf %397, %403 : vector<8x32xf32>
    %405 = vector.extract_strided_slice %388 {offsets = [0, 0], sizes = [8, 96], strides = [1, 1]} : vector<8x128xf32> to vector<8x96xf32>
    %406 = arith.negf %405 : vector<8x96xf32>
    %407 = math.exp %406 : vector<8x96xf32>
    %cst_167 = arith.constant 1.000000e+00 : f32
    %408 = vector.broadcast %cst_167 : f32 to vector<8x96xf32>
    %409 = arith.addf %408, %407 : vector<8x96xf32>
    %410 = arith.divf %408, %409 : vector<8x96xf32>
    %411 = vector.extract_strided_slice %410 {offsets = [0, 0], sizes = [8, 32], strides = [1, 1]} : vector<8x96xf32> to vector<8x32xf32>
    %412 = vector.extract_strided_slice %410 {offsets = [0, 32], sizes = [8, 32], strides = [1, 1]} : vector<8x96xf32> to vector<8x32xf32>
    %413 = vector.extract_strided_slice %410 {offsets = [0, 64], sizes = [8, 32], strides = [1, 1]} : vector<8x96xf32> to vector<8x32xf32>
    %414 = vector.extract_strided_slice %388 {offsets = [0, 96], sizes = [8, 32], strides = [1, 1]} : vector<8x128xf32> to vector<8x32xf32>
    %415 = math.tanh %414 : vector<8x32xf32>
    %416 = arith.mulf %412, %380 : vector<8x32xf32>
    %417 = arith.mulf %411, %415 : vector<8x32xf32>
    %418 = arith.addf %416, %417 : vector<8x32xf32>
    %419 = math.tanh %418 : vector<8x32xf32>
    %420 = arith.mulf %413, %419 : vector<8x32xf32>
    %c0_168 = arith.constant 0 : index
    %c0_169 = arith.constant 0 : index
    %421 = vector.load %arg12[%c0_168, %c0_169] : memref<64x64xf32, #tpu.memory_space<vmem>>, vector<8x32xf32>
    tpu.vector_store %arg12[%c0_168, %c0_169], %404 {strides = array<i32>} : memref<64x64xf32, #tpu.memory_space<vmem>>, vector<8x32xf32>,
    %c56_170 = arith.constant 56 : index
    %c32_171 = arith.constant 32 : index
    %422 = vector.load %arg12[%c56_170, %c32_171] : memref<64x64xf32, #tpu.memory_space<vmem>>, vector<8x32xf32>
    tpu.vector_store %arg12[%c56_170, %c32_171], %420 {strides = array<i32>} : memref<64x64xf32, #tpu.memory_space<vmem>>, vector<8x32xf32>,
    %c0_172 = arith.constant 0 : index
    %c8_173 = arith.constant 8 : index
    %c0_174 = arith.constant 0 : index
    %423 = vector.load %arg11[%c0_172, %c8_173, %c0_174] : memref<2x64x128xf32, #tpu.memory_space<vmem>>, vector<1x8x128xf32>
    %424 = vector.shape_cast %423 : vector<1x8x128xf32> to vector<8x128xf32>
    %cst_175 = arith.constant dense<0.000000e+00> : vector<8x128xf32>
    %425 = tpu.matmul %404, %370, %cst_175 {dimension_numbers = #tpu.dot_dimension_numbers<[1], [0], [0], [1], [0, 0, 1, 1], [], []>} : vector<8x32xf32>, vector<32x128xf32>, vector<8x128xf32> -> vector<8x128xf32>
    %426 = arith.addf %424, %425 : vector<8x128xf32>
    %c1_176 = arith.constant 1 : index
    %c48_177 = arith.constant 48 : index
    %c0_178 = arith.constant 0 : index
    %427 = vector.load %arg11[%c1_176, %c48_177, %c0_178] : memref<2x64x128xf32, #tpu.memory_space<vmem>>, vector<1x8x128xf32>
    %428 = vector.shape_cast %427 : vector<1x8x128xf32> to vector<8x128xf32>
    %cst_179 = arith.constant dense<0.000000e+00> : vector<8x128xf32>
    %429 = tpu.matmul %420, %372, %cst_179 {dimension_numbers = #tpu.dot_dimension_numbers<[1], [0], [0], [1], [0, 0, 1, 1], [], []>} : vector<8x32xf32>, vector<32x128xf32>, vector<8x128xf32> -> vector<8x128xf32>
    %430 = arith.addf %428, %429 : vector<8x128xf32>
    %431 = vector.extract_strided_slice %426 {offsets = [0, 0], sizes = [8, 96], strides = [1, 1]} : vector<8x128xf32> to vector<8x96xf32>
    %432 = arith.negf %431 : vector<8x96xf32>
    %433 = math.exp %432 : vector<8x96xf32>
    %cst_180 = arith.constant 1.000000e+00 : f32
    %434 = vector.broadcast %cst_180 : f32 to vector<8x96xf32>
    %435 = arith.addf %434, %433 : vector<8x96xf32>
    %436 = arith.divf %434, %435 : vector<8x96xf32>
    %437 = vector.extract_strided_slice %436 {offsets = [0, 0], sizes = [8, 32], strides = [1, 1]} : vector<8x96xf32> to vector<8x32xf32>
    %438 = vector.extract_strided_slice %436 {offsets = [0, 32], sizes = [8, 32], strides = [1, 1]} : vector<8x96xf32> to vector<8x32xf32>
    %439 = vector.extract_strided_slice %436 {offsets = [0, 64], sizes = [8, 32], strides = [1, 1]} : vector<8x96xf32> to vector<8x32xf32>
    %440 = vector.extract_strided_slice %426 {offsets = [0, 96], sizes = [8, 32], strides = [1, 1]} : vector<8x128xf32> to vector<8x32xf32>
    %441 = math.tanh %440 : vector<8x32xf32>
    %442 = arith.mulf %438, %402 : vector<8x32xf32>
    %443 = arith.mulf %437, %441 : vector<8x32xf32>
    %444 = arith.addf %442, %443 : vector<8x32xf32>
    %445 = math.tanh %444 : vector<8x32xf32>
    %446 = arith.mulf %439, %445 : vector<8x32xf32>
    %447 = vector.extract_strided_slice %430 {offsets = [0, 0], sizes = [8, 96], strides = [1, 1]} : vector<8x128xf32> to vector<8x96xf32>
    %448 = arith.negf %447 : vector<8x96xf32>
    %449 = math.exp %448 : vector<8x96xf32>
    %cst_181 = arith.constant 1.000000e+00 : f32
    %450 = vector.broadcast %cst_181 : f32 to vector<8x96xf32>
    %451 = arith.addf %450, %449 : vector<8x96xf32>
    %452 = arith.divf %450, %451 : vector<8x96xf32>
    %453 = vector.extract_strided_slice %452 {offsets = [0, 0], sizes = [8, 32], strides = [1, 1]} : vector<8x96xf32> to vector<8x32xf32>
    %454 = vector.extract_strided_slice %452 {offsets = [0, 32], sizes = [8, 32], strides = [1, 1]} : vector<8x96xf32> to vector<8x32xf32>
    %455 = vector.extract_strided_slice %452 {offsets = [0, 64], sizes = [8, 32], strides = [1, 1]} : vector<8x96xf32> to vector<8x32xf32>
    %456 = vector.extract_strided_slice %430 {offsets = [0, 96], sizes = [8, 32], strides = [1, 1]} : vector<8x128xf32> to vector<8x32xf32>
    %457 = math.tanh %456 : vector<8x32xf32>
    %458 = arith.mulf %454, %418 : vector<8x32xf32>
    %459 = arith.mulf %453, %457 : vector<8x32xf32>
    %460 = arith.addf %458, %459 : vector<8x32xf32>
    %461 = math.tanh %460 : vector<8x32xf32>
    %462 = arith.mulf %455, %461 : vector<8x32xf32>
    %c8_182 = arith.constant 8 : index
    %c0_183 = arith.constant 0 : index
    %463 = vector.load %arg12[%c8_182, %c0_183] : memref<64x64xf32, #tpu.memory_space<vmem>>, vector<8x32xf32>
    tpu.vector_store %arg12[%c8_182, %c0_183], %446 {strides = array<i32>} : memref<64x64xf32, #tpu.memory_space<vmem>>, vector<8x32xf32>,
    %c48_184 = arith.constant 48 : index
    %c32_185 = arith.constant 32 : index
    %464 = vector.load %arg12[%c48_184, %c32_185] : memref<64x64xf32, #tpu.memory_space<vmem>>, vector<8x32xf32>
    tpu.vector_store %arg12[%c48_184, %c32_185], %462 {strides = array<i32>} : memref<64x64xf32, #tpu.memory_space<vmem>>, vector<8x32xf32>,
    %c0_186 = arith.constant 0 : index
    %c16_187 = arith.constant 16 : index
    %c0_188 = arith.constant 0 : index
    %465 = vector.load %arg11[%c0_186, %c16_187, %c0_188] : memref<2x64x128xf32, #tpu.memory_space<vmem>>, vector<1x8x128xf32>
    %466 = vector.shape_cast %465 : vector<1x8x128xf32> to vector<8x128xf32>
    %cst_189 = arith.constant dense<0.000000e+00> : vector<8x128xf32>
    %467 = tpu.matmul %446, %370, %cst_189 {dimension_numbers = #tpu.dot_dimension_numbers<[1], [0], [0], [1], [0, 0, 1, 1], [], []>} : vector<8x32xf32>, vector<32x128xf32>, vector<8x128xf32> -> vector<8x128xf32>
    %468 = arith.addf %466, %467 : vector<8x128xf32>
    %c1_190 = arith.constant 1 : index
    %c40_191 = arith.constant 40 : index
    %c0_192 = arith.constant 0 : index
    %469 = vector.load %arg11[%c1_190, %c40_191, %c0_192] : memref<2x64x128xf32, #tpu.memory_space<vmem>>, vector<1x8x128xf32>
    %470 = vector.shape_cast %469 : vector<1x8x128xf32> to vector<8x128xf32>
    %cst_193 = arith.constant dense<0.000000e+00> : vector<8x128xf32>
    %471 = tpu.matmul %462, %372, %cst_193 {dimension_numbers = #tpu.dot_dimension_numbers<[1], [0], [0], [1], [0, 0, 1, 1], [], []>} : vector<8x32xf32>, vector<32x128xf32>, vector<8x128xf32> -> vector<8x128xf32>
    %472 = arith.addf %470, %471 : vector<8x128xf32>
    %473 = vector.extract_strided_slice %468 {offsets = [0, 0], sizes = [8, 96], strides = [1, 1]} : vector<8x128xf32> to vector<8x96xf32>
    %474 = arith.negf %473 : vector<8x96xf32>
    %475 = math.exp %474 : vector<8x96xf32>
    %cst_194 = arith.constant 1.000000e+00 : f32
    %476 = vector.broadcast %cst_194 : f32 to vector<8x96xf32>
    %477 = arith.addf %476, %475 : vector<8x96xf32>
    %478 = arith.divf %476, %477 : vector<8x96xf32>
    %479 = vector.extract_strided_slice %478 {offsets = [0, 0], sizes = [8, 32], strides = [1, 1]} : vector<8x96xf32> to vector<8x32xf32>
    %480 = vector.extract_strided_slice %478 {offsets = [0, 32], sizes = [8, 32], strides = [1, 1]} : vector<8x96xf32> to vector<8x32xf32>
    %481 = vector.extract_strided_slice %478 {offsets = [0, 64], sizes = [8, 32], strides = [1, 1]} : vector<8x96xf32> to vector<8x32xf32>
    %482 = vector.extract_strided_slice %468 {offsets = [0, 96], sizes = [8, 32], strides = [1, 1]} : vector<8x128xf32> to vector<8x32xf32>
    %483 = math.tanh %482 : vector<8x32xf32>
    %484 = arith.mulf %480, %444 : vector<8x32xf32>
    %485 = arith.mulf %479, %483 : vector<8x32xf32>
    %486 = arith.addf %484, %485 : vector<8x32xf32>
    %487 = math.tanh %486 : vector<8x32xf32>
    %488 = arith.mulf %481, %487 : vector<8x32xf32>
    %489 = vector.extract_strided_slice %472 {offsets = [0, 0], sizes = [8, 96], strides = [1, 1]} : vector<8x128xf32> to vector<8x96xf32>
    %490 = arith.negf %489 : vector<8x96xf32>
    %491 = math.exp %490 : vector<8x96xf32>
    %cst_195 = arith.constant 1.000000e+00 : f32
    %492 = vector.broadcast %cst_195 : f32 to vector<8x96xf32>
    %493 = arith.addf %492, %491 : vector<8x96xf32>
    %494 = arith.divf %492, %493 : vector<8x96xf32>
    %495 = vector.extract_strided_slice %494 {offsets = [0, 0], sizes = [8, 32], strides = [1, 1]} : vector<8x96xf32> to vector<8x32xf32>
    %496 = vector.extract_strided_slice %494 {offsets = [0, 32], sizes = [8, 32], strides = [1, 1]} : vector<8x96xf32> to vector<8x32xf32>
    %497 = vector.extract_strided_slice %494 {offsets = [0, 64], sizes = [8, 32], strides = [1, 1]} : vector<8x96xf32> to vector<8x32xf32>
    %498 = vector.extract_strided_slice %472 {offsets = [0, 96], sizes = [8, 32], strides = [1, 1]} : vector<8x128xf32> to vector<8x32xf32>
    %499 = math.tanh %498 : vector<8x32xf32>
    %500 = arith.mulf %496, %460 : vector<8x32xf32>
    %501 = arith.mulf %495, %499 : vector<8x32xf32>
    %502 = arith.addf %500, %501 : vector<8x32xf32>
    %503 = math.tanh %502 : vector<8x32xf32>
    %504 = arith.mulf %497, %503 : vector<8x32xf32>
    %c16_196 = arith.constant 16 : index
    %c0_197 = arith.constant 0 : index
    %505 = vector.load %arg12[%c16_196, %c0_197] : memref<64x64xf32, #tpu.memory_space<vmem>>, vector<8x32xf32>
    tpu.vector_store %arg12[%c16_196, %c0_197], %488 {strides = array<i32>} : memref<64x64xf32, #tpu.memory_space<vmem>>, vector<8x32xf32>,
    %c40_198 = arith.constant 40 : index
    %c32_199 = arith.constant 32 : index
    %506 = vector.load %arg12[%c40_198, %c32_199] : memref<64x64xf32, #tpu.memory_space<vmem>>, vector<8x32xf32>
    tpu.vector_store %arg12[%c40_198, %c32_199], %504 {strides = array<i32>} : memref<64x64xf32, #tpu.memory_space<vmem>>, vector<8x32xf32>,
    %c0_200 = arith.constant 0 : index
    %c24_201 = arith.constant 24 : index
    %c0_202 = arith.constant 0 : index
    %507 = vector.load %arg11[%c0_200, %c24_201, %c0_202] : memref<2x64x128xf32, #tpu.memory_space<vmem>>, vector<1x8x128xf32>
    %508 = vector.shape_cast %507 : vector<1x8x128xf32> to vector<8x128xf32>
    %cst_203 = arith.constant dense<0.000000e+00> : vector<8x128xf32>
    %509 = tpu.matmul %488, %370, %cst_203 {dimension_numbers = #tpu.dot_dimension_numbers<[1], [0], [0], [1], [0, 0, 1, 1], [], []>} : vector<8x32xf32>, vector<32x128xf32>, vector<8x128xf32> -> vector<8x128xf32>
    %510 = arith.addf %508, %509 : vector<8x128xf32>
    %c1_204 = arith.constant 1 : index
    %c32_205 = arith.constant 32 : index
    %c0_206 = arith.constant 0 : index
    %511 = vector.load %arg11[%c1_204, %c32_205, %c0_206] : memref<2x64x128xf32, #tpu.memory_space<vmem>>, vector<1x8x128xf32>
    %512 = vector.shape_cast %511 : vector<1x8x128xf32> to vector<8x128xf32>
    %cst_207 = arith.constant dense<0.000000e+00> : vector<8x128xf32>
    %513 = tpu.matmul %504, %372, %cst_207 {dimension_numbers = #tpu.dot_dimension_numbers<[1], [0], [0], [1], [0, 0, 1, 1], [], []>} : vector<8x32xf32>, vector<32x128xf32>, vector<8x128xf32> -> vector<8x128xf32>
    %514 = arith.addf %512, %513 : vector<8x128xf32>
    %515 = vector.extract_strided_slice %510 {offsets = [0, 0], sizes = [8, 96], strides = [1, 1]} : vector<8x128xf32> to vector<8x96xf32>
    %516 = arith.negf %515 : vector<8x96xf32>
    %517 = math.exp %516 : vector<8x96xf32>
    %cst_208 = arith.constant 1.000000e+00 : f32
    %518 = vector.broadcast %cst_208 : f32 to vector<8x96xf32>
    %519 = arith.addf %518, %517 : vector<8x96xf32>
    %520 = arith.divf %518, %519 : vector<8x96xf32>
    %521 = vector.extract_strided_slice %520 {offsets = [0, 0], sizes = [8, 32], strides = [1, 1]} : vector<8x96xf32> to vector<8x32xf32>
    %522 = vector.extract_strided_slice %520 {offsets = [0, 32], sizes = [8, 32], strides = [1, 1]} : vector<8x96xf32> to vector<8x32xf32>
    %523 = vector.extract_strided_slice %520 {offsets = [0, 64], sizes = [8, 32], strides = [1, 1]} : vector<8x96xf32> to vector<8x32xf32>
    %524 = vector.extract_strided_slice %510 {offsets = [0, 96], sizes = [8, 32], strides = [1, 1]} : vector<8x128xf32> to vector<8x32xf32>
    %525 = math.tanh %524 : vector<8x32xf32>
    %526 = arith.mulf %522, %486 : vector<8x32xf32>
    %527 = arith.mulf %521, %525 : vector<8x32xf32>
    %528 = arith.addf %526, %527 : vector<8x32xf32>
    %529 = math.tanh %528 : vector<8x32xf32>
    %530 = arith.mulf %523, %529 : vector<8x32xf32>
    %531 = vector.extract_strided_slice %514 {offsets = [0, 0], sizes = [8, 96], strides = [1, 1]} : vector<8x128xf32> to vector<8x96xf32>
    %532 = arith.negf %531 : vector<8x96xf32>
    %533 = math.exp %532 : vector<8x96xf32>
    %cst_209 = arith.constant 1.000000e+00 : f32
    %534 = vector.broadcast %cst_209 : f32 to vector<8x96xf32>
    %535 = arith.addf %534, %533 : vector<8x96xf32>
    %536 = arith.divf %534, %535 : vector<8x96xf32>
    %537 = vector.extract_strided_slice %536 {offsets = [0, 0], sizes = [8, 32], strides = [1, 1]} : vector<8x96xf32> to vector<8x32xf32>
    %538 = vector.extract_strided_slice %536 {offsets = [0, 32], sizes = [8, 32], strides = [1, 1]} : vector<8x96xf32> to vector<8x32xf32>
    %539 = vector.extract_strided_slice %536 {offsets = [0, 64], sizes = [8, 32], strides = [1, 1]} : vector<8x96xf32> to vector<8x32xf32>
    %540 = vector.extract_strided_slice %514 {offsets = [0, 96], sizes = [8, 32], strides = [1, 1]} : vector<8x128xf32> to vector<8x32xf32>
    %541 = math.tanh %540 : vector<8x32xf32>
    %542 = arith.mulf %538, %502 : vector<8x32xf32>
    %543 = arith.mulf %537, %541 : vector<8x32xf32>
    %544 = arith.addf %542, %543 : vector<8x32xf32>
    %545 = math.tanh %544 : vector<8x32xf32>
    %546 = arith.mulf %539, %545 : vector<8x32xf32>
    %c24_210 = arith.constant 24 : index
    %c0_211 = arith.constant 0 : index
    %547 = vector.load %arg12[%c24_210, %c0_211] : memref<64x64xf32, #tpu.memory_space<vmem>>, vector<8x32xf32>
    tpu.vector_store %arg12[%c24_210, %c0_211], %530 {strides = array<i32>} : memref<64x64xf32, #tpu.memory_space<vmem>>, vector<8x32xf32>,
    %c32_212 = arith.constant 32 : index
    %c32_213 = arith.constant 32 : index
    %548 = vector.load %arg12[%c32_212, %c32_213] : memref<64x64xf32, #tpu.memory_space<vmem>>, vector<8x32xf32>
    tpu.vector_store %arg12[%c32_212, %c32_213], %546 {strides = array<i32>} : memref<64x64xf32, #tpu.memory_space<vmem>>, vector<8x32xf32>,
    %c0_214 = arith.constant 0 : index
    %c32_215 = arith.constant 32 : index
    %c0_216 = arith.constant 0 : index
    %549 = vector.load %arg11[%c0_214, %c32_215, %c0_216] : memref<2x64x128xf32, #tpu.memory_space<vmem>>, vector<1x8x128xf32>
    %550 = vector.shape_cast %549 : vector<1x8x128xf32> to vector<8x128xf32>
    %cst_217 = arith.constant dense<0.000000e+00> : vector<8x128xf32>
    %551 = tpu.matmul %530, %370, %cst_217 {dimension_numbers = #tpu.dot_dimension_numbers<[1], [0], [0], [1], [0, 0, 1, 1], [], []>} : vector<8x32xf32>, vector<32x128xf32>, vector<8x128xf32> -> vector<8x128xf32>
    %552 = arith.addf %550, %551 : vector<8x128xf32>
    %c1_218 = arith.constant 1 : index
    %c24_219 = arith.constant 24 : index
    %c0_220 = arith.constant 0 : index
    %553 = vector.load %arg11[%c1_218, %c24_219, %c0_220] : memref<2x64x128xf32, #tpu.memory_space<vmem>>, vector<1x8x128xf32>
    %554 = vector.shape_cast %553 : vector<1x8x128xf32> to vector<8x128xf32>
    %cst_221 = arith.constant dense<0.000000e+00> : vector<8x128xf32>
    %555 = tpu.matmul %546, %372, %cst_221 {dimension_numbers = #tpu.dot_dimension_numbers<[1], [0], [0], [1], [0, 0, 1, 1], [], []>} : vector<8x32xf32>, vector<32x128xf32>, vector<8x128xf32> -> vector<8x128xf32>
    %556 = arith.addf %554, %555 : vector<8x128xf32>
    %557 = vector.extract_strided_slice %552 {offsets = [0, 0], sizes = [8, 96], strides = [1, 1]} : vector<8x128xf32> to vector<8x96xf32>
    %558 = arith.negf %557 : vector<8x96xf32>
    %559 = math.exp %558 : vector<8x96xf32>
    %cst_222 = arith.constant 1.000000e+00 : f32
    %560 = vector.broadcast %cst_222 : f32 to vector<8x96xf32>
    %561 = arith.addf %560, %559 : vector<8x96xf32>
    %562 = arith.divf %560, %561 : vector<8x96xf32>
    %563 = vector.extract_strided_slice %562 {offsets = [0, 0], sizes = [8, 32], strides = [1, 1]} : vector<8x96xf32> to vector<8x32xf32>
    %564 = vector.extract_strided_slice %562 {offsets = [0, 32], sizes = [8, 32], strides = [1, 1]} : vector<8x96xf32> to vector<8x32xf32>
    %565 = vector.extract_strided_slice %562 {offsets = [0, 64], sizes = [8, 32], strides = [1, 1]} : vector<8x96xf32> to vector<8x32xf32>
    %566 = vector.extract_strided_slice %552 {offsets = [0, 96], sizes = [8, 32], strides = [1, 1]} : vector<8x128xf32> to vector<8x32xf32>
    %567 = math.tanh %566 : vector<8x32xf32>
    %568 = arith.mulf %564, %528 : vector<8x32xf32>
    %569 = arith.mulf %563, %567 : vector<8x32xf32>
    %570 = arith.addf %568, %569 : vector<8x32xf32>
    %571 = math.tanh %570 : vector<8x32xf32>
    %572 = arith.mulf %565, %571 : vector<8x32xf32>
    %573 = vector.extract_strided_slice %556 {offsets = [0, 0], sizes = [8, 96], strides = [1, 1]} : vector<8x128xf32> to vector<8x96xf32>
    %574 = arith.negf %573 : vector<8x96xf32>
    %575 = math.exp %574 : vector<8x96xf32>
    %cst_223 = arith.constant 1.000000e+00 : f32
    %576 = vector.broadcast %cst_223 : f32 to vector<8x96xf32>
    %577 = arith.addf %576, %575 : vector<8x96xf32>
    %578 = arith.divf %576, %577 : vector<8x96xf32>
    %579 = vector.extract_strided_slice %578 {offsets = [0, 0], sizes = [8, 32], strides = [1, 1]} : vector<8x96xf32> to vector<8x32xf32>
    %580 = vector.extract_strided_slice %578 {offsets = [0, 32], sizes = [8, 32], strides = [1, 1]} : vector<8x96xf32> to vector<8x32xf32>
    %581 = vector.extract_strided_slice %578 {offsets = [0, 64], sizes = [8, 32], strides = [1, 1]} : vector<8x96xf32> to vector<8x32xf32>
    %582 = vector.extract_strided_slice %556 {offsets = [0, 96], sizes = [8, 32], strides = [1, 1]} : vector<8x128xf32> to vector<8x32xf32>
    %583 = math.tanh %582 : vector<8x32xf32>
    %584 = arith.mulf %580, %544 : vector<8x32xf32>
    %585 = arith.mulf %579, %583 : vector<8x32xf32>
    %586 = arith.addf %584, %585 : vector<8x32xf32>
    %587 = math.tanh %586 : vector<8x32xf32>
    %588 = arith.mulf %581, %587 : vector<8x32xf32>
    %c32_224 = arith.constant 32 : index
    %c0_225 = arith.constant 0 : index
    %589 = vector.load %arg12[%c32_224, %c0_225] : memref<64x64xf32, #tpu.memory_space<vmem>>, vector<8x32xf32>
    tpu.vector_store %arg12[%c32_224, %c0_225], %572 {strides = array<i32>} : memref<64x64xf32, #tpu.memory_space<vmem>>, vector<8x32xf32>,
    %c24_226 = arith.constant 24 : index
    %c32_227 = arith.constant 32 : index
    %590 = vector.load %arg12[%c24_226, %c32_227] : memref<64x64xf32, #tpu.memory_space<vmem>>, vector<8x32xf32>
    tpu.vector_store %arg12[%c24_226, %c32_227], %588 {strides = array<i32>} : memref<64x64xf32, #tpu.memory_space<vmem>>, vector<8x32xf32>,
    %c0_228 = arith.constant 0 : index
    %c40_229 = arith.constant 40 : index
    %c0_230 = arith.constant 0 : index
    %591 = vector.load %arg11[%c0_228, %c40_229, %c0_230] : memref<2x64x128xf32, #tpu.memory_space<vmem>>, vector<1x8x128xf32>
    %592 = vector.shape_cast %591 : vector<1x8x128xf32> to vector<8x128xf32>
    %cst_231 = arith.constant dense<0.000000e+00> : vector<8x128xf32>
    %593 = tpu.matmul %572, %370, %cst_231 {dimension_numbers = #tpu.dot_dimension_numbers<[1], [0], [0], [1], [0, 0, 1, 1], [], []>} : vector<8x32xf32>, vector<32x128xf32>, vector<8x128xf32> -> vector<8x128xf32>
    %594 = arith.addf %592, %593 : vector<8x128xf32>
    %c1_232 = arith.constant 1 : index
    %c16_233 = arith.constant 16 : index
    %c0_234 = arith.constant 0 : index
    %595 = vector.load %arg11[%c1_232, %c16_233, %c0_234] : memref<2x64x128xf32, #tpu.memory_space<vmem>>, vector<1x8x128xf32>
    %596 = vector.shape_cast %595 : vector<1x8x128xf32> to vector<8x128xf32>
    %cst_235 = arith.constant dense<0.000000e+00> : vector<8x128xf32>
    %597 = tpu.matmul %588, %372, %cst_235 {dimension_numbers = #tpu.dot_dimension_numbers<[1], [0], [0], [1], [0, 0, 1, 1], [], []>} : vector<8x32xf32>, vector<32x128xf32>, vector<8x128xf32> -> vector<8x128xf32>
    %598 = arith.addf %596, %597 : vector<8x128xf32>
    %599 = vector.extract_strided_slice %594 {offsets = [0, 0], sizes = [8, 96], strides = [1, 1]} : vector<8x128xf32> to vector<8x96xf32>
    %600 = arith.negf %599 : vector<8x96xf32>
    %601 = math.exp %600 : vector<8x96xf32>
    %cst_236 = arith.constant 1.000000e+00 : f32
    %602 = vector.broadcast %cst_236 : f32 to vector<8x96xf32>
    %603 = arith.addf %602, %601 : vector<8x96xf32>
    %604 = arith.divf %602, %603 : vector<8x96xf32>
    %605 = vector.extract_strided_slice %604 {offsets = [0, 0], sizes = [8, 32], strides = [1, 1]} : vector<8x96xf32> to vector<8x32xf32>
    %606 = vector.extract_strided_slice %604 {offsets = [0, 32], sizes = [8, 32], strides = [1, 1]} : vector<8x96xf32> to vector<8x32xf32>
    %607 = vector.extract_strided_slice %604 {offsets = [0, 64], sizes = [8, 32], strides = [1, 1]} : vector<8x96xf32> to vector<8x32xf32>
    %608 = vector.extract_strided_slice %594 {offsets = [0, 96], sizes = [8, 32], strides = [1, 1]} : vector<8x128xf32> to vector<8x32xf32>
    %609 = math.tanh %608 : vector<8x32xf32>
    %610 = arith.mulf %606, %570 : vector<8x32xf32>
    %611 = arith.mulf %605, %609 : vector<8x32xf32>
    %612 = arith.addf %610, %611 : vector<8x32xf32>
    %613 = math.tanh %612 : vector<8x32xf32>
    %614 = arith.mulf %607, %613 : vector<8x32xf32>
    %615 = vector.extract_strided_slice %598 {offsets = [0, 0], sizes = [8, 96], strides = [1, 1]} : vector<8x128xf32> to vector<8x96xf32>
    %616 = arith.negf %615 : vector<8x96xf32>
    %617 = math.exp %616 : vector<8x96xf32>
    %cst_237 = arith.constant 1.000000e+00 : f32
    %618 = vector.broadcast %cst_237 : f32 to vector<8x96xf32>
    %619 = arith.addf %618, %617 : vector<8x96xf32>
    %620 = arith.divf %618, %619 : vector<8x96xf32>
    %621 = vector.extract_strided_slice %620 {offsets = [0, 0], sizes = [8, 32], strides = [1, 1]} : vector<8x96xf32> to vector<8x32xf32>
    %622 = vector.extract_strided_slice %620 {offsets = [0, 32], sizes = [8, 32], strides = [1, 1]} : vector<8x96xf32> to vector<8x32xf32>
    %623 = vector.extract_strided_slice %620 {offsets = [0, 64], sizes = [8, 32], strides = [1, 1]} : vector<8x96xf32> to vector<8x32xf32>
    %624 = vector.extract_strided_slice %598 {offsets = [0, 96], sizes = [8, 32], strides = [1, 1]} : vector<8x128xf32> to vector<8x32xf32>
    %625 = math.tanh %624 : vector<8x32xf32>
    %626 = arith.mulf %622, %586 : vector<8x32xf32>
    %627 = arith.mulf %621, %625 : vector<8x32xf32>
    %628 = arith.addf %626, %627 : vector<8x32xf32>
    %629 = math.tanh %628 : vector<8x32xf32>
    %630 = arith.mulf %623, %629 : vector<8x32xf32>
    %c40_238 = arith.constant 40 : index
    %c0_239 = arith.constant 0 : index
    %631 = vector.load %arg12[%c40_238, %c0_239] : memref<64x64xf32, #tpu.memory_space<vmem>>, vector<8x32xf32>
    tpu.vector_store %arg12[%c40_238, %c0_239], %614 {strides = array<i32>} : memref<64x64xf32, #tpu.memory_space<vmem>>, vector<8x32xf32>,
    %c16_240 = arith.constant 16 : index
    %c32_241 = arith.constant 32 : index
    %632 = vector.load %arg12[%c16_240, %c32_241] : memref<64x64xf32, #tpu.memory_space<vmem>>, vector<8x32xf32>
    tpu.vector_store %arg12[%c16_240, %c32_241], %630 {strides = array<i32>} : memref<64x64xf32, #tpu.memory_space<vmem>>, vector<8x32xf32>,
    %c0_242 = arith.constant 0 : index
    %c48_243 = arith.constant 48 : index
    %c0_244 = arith.constant 0 : index
    %633 = vector.load %arg11[%c0_242, %c48_243, %c0_244] : memref<2x64x128xf32, #tpu.memory_space<vmem>>, vector<1x8x128xf32>
    %634 = vector.shape_cast %633 : vector<1x8x128xf32> to vector<8x128xf32>
    %cst_245 = arith.constant dense<0.000000e+00> : vector<8x128xf32>
    %635 = tpu.matmul %614, %370, %cst_245 {dimension_numbers = #tpu.dot_dimension_numbers<[1], [0], [0], [1], [0, 0, 1, 1], [], []>} : vector<8x32xf32>, vector<32x128xf32>, vector<8x128xf32> -> vector<8x128xf32>
    %636 = arith.addf %634, %635 : vector<8x128xf32>
    %c1_246 = arith.constant 1 : index
    %c8_247 = arith.constant 8 : index
    %c0_248 = arith.constant 0 : index
    %637 = vector.load %arg11[%c1_246, %c8_247, %c0_248] : memref<2x64x128xf32, #tpu.memory_space<vmem>>, vector<1x8x128xf32>
    %638 = vector.shape_cast %637 : vector<1x8x128xf32> to vector<8x128xf32>
    %cst_249 = arith.constant dense<0.000000e+00> : vector<8x128xf32>
    %639 = tpu.matmul %630, %372, %cst_249 {dimension_numbers = #tpu.dot_dimension_numbers<[1], [0], [0], [1], [0, 0, 1, 1], [], []>} : vector<8x32xf32>, vector<32x128xf32>, vector<8x128xf32> -> vector<8x128xf32>
    %640 = arith.addf %638, %639 : vector<8x128xf32>
    %641 = vector.extract_strided_slice %636 {offsets = [0, 0], sizes = [8, 96], strides = [1, 1]} : vector<8x128xf32> to vector<8x96xf32>
    %642 = arith.negf %641 : vector<8x96xf32>
    %643 = math.exp %642 : vector<8x96xf32>
    %cst_250 = arith.constant 1.000000e+00 : f32
    %644 = vector.broadcast %cst_250 : f32 to vector<8x96xf32>
    %645 = arith.addf %644, %643 : vector<8x96xf32>
    %646 = arith.divf %644, %645 : vector<8x96xf32>
    %647 = vector.extract_strided_slice %646 {offsets = [0, 0], sizes = [8, 32], strides = [1, 1]} : vector<8x96xf32> to vector<8x32xf32>
    %648 = vector.extract_strided_slice %646 {offsets = [0, 32], sizes = [8, 32], strides = [1, 1]} : vector<8x96xf32> to vector<8x32xf32>
    %649 = vector.extract_strided_slice %646 {offsets = [0, 64], sizes = [8, 32], strides = [1, 1]} : vector<8x96xf32> to vector<8x32xf32>
    %650 = vector.extract_strided_slice %636 {offsets = [0, 96], sizes = [8, 32], strides = [1, 1]} : vector<8x128xf32> to vector<8x32xf32>
    %651 = math.tanh %650 : vector<8x32xf32>
    %652 = arith.mulf %648, %612 : vector<8x32xf32>
    %653 = arith.mulf %647, %651 : vector<8x32xf32>
    %654 = arith.addf %652, %653 : vector<8x32xf32>
    %655 = math.tanh %654 : vector<8x32xf32>
    %656 = arith.mulf %649, %655 : vector<8x32xf32>
    %657 = vector.extract_strided_slice %640 {offsets = [0, 0], sizes = [8, 96], strides = [1, 1]} : vector<8x128xf32> to vector<8x96xf32>
    %658 = arith.negf %657 : vector<8x96xf32>
    %659 = math.exp %658 : vector<8x96xf32>
    %cst_251 = arith.constant 1.000000e+00 : f32
    %660 = vector.broadcast %cst_251 : f32 to vector<8x96xf32>
    %661 = arith.addf %660, %659 : vector<8x96xf32>
    %662 = arith.divf %660, %661 : vector<8x96xf32>
    %663 = vector.extract_strided_slice %662 {offsets = [0, 0], sizes = [8, 32], strides = [1, 1]} : vector<8x96xf32> to vector<8x32xf32>
    %664 = vector.extract_strided_slice %662 {offsets = [0, 32], sizes = [8, 32], strides = [1, 1]} : vector<8x96xf32> to vector<8x32xf32>
    %665 = vector.extract_strided_slice %662 {offsets = [0, 64], sizes = [8, 32], strides = [1, 1]} : vector<8x96xf32> to vector<8x32xf32>
    %666 = vector.extract_strided_slice %640 {offsets = [0, 96], sizes = [8, 32], strides = [1, 1]} : vector<8x128xf32> to vector<8x32xf32>
    %667 = math.tanh %666 : vector<8x32xf32>
    %668 = arith.mulf %664, %628 : vector<8x32xf32>
    %669 = arith.mulf %663, %667 : vector<8x32xf32>
    %670 = arith.addf %668, %669 : vector<8x32xf32>
    %671 = math.tanh %670 : vector<8x32xf32>
    %672 = arith.mulf %665, %671 : vector<8x32xf32>
    %c48_252 = arith.constant 48 : index
    %c0_253 = arith.constant 0 : index
    %673 = vector.load %arg12[%c48_252, %c0_253] : memref<64x64xf32, #tpu.memory_space<vmem>>, vector<8x32xf32>
    tpu.vector_store %arg12[%c48_252, %c0_253], %656 {strides = array<i32>} : memref<64x64xf32, #tpu.memory_space<vmem>>, vector<8x32xf32>,
    %c8_254 = arith.constant 8 : index
    %c32_255 = arith.constant 32 : index
    %674 = vector.load %arg12[%c8_254, %c32_255] : memref<64x64xf32, #tpu.memory_space<vmem>>, vector<8x32xf32>
    tpu.vector_store %arg12[%c8_254, %c32_255], %672 {strides = array<i32>} : memref<64x64xf32, #tpu.memory_space<vmem>>, vector<8x32xf32>,
    %c0_256 = arith.constant 0 : index
    %c56_257 = arith.constant 56 : index
    %c0_258 = arith.constant 0 : index
    %675 = vector.load %arg11[%c0_256, %c56_257, %c0_258] : memref<2x64x128xf32, #tpu.memory_space<vmem>>, vector<1x8x128xf32>
    %676 = vector.shape_cast %675 : vector<1x8x128xf32> to vector<8x128xf32>
    %cst_259 = arith.constant dense<0.000000e+00> : vector<8x128xf32>
    %677 = tpu.matmul %656, %370, %cst_259 {dimension_numbers = #tpu.dot_dimension_numbers<[1], [0], [0], [1], [0, 0, 1, 1], [], []>} : vector<8x32xf32>, vector<32x128xf32>, vector<8x128xf32> -> vector<8x128xf32>
    %678 = arith.addf %676, %677 : vector<8x128xf32>
    %c1_260 = arith.constant 1 : index
    %c0_261 = arith.constant 0 : index
    %c0_262 = arith.constant 0 : index
    %679 = vector.load %arg11[%c1_260, %c0_261, %c0_262] : memref<2x64x128xf32, #tpu.memory_space<vmem>>, vector<1x8x128xf32>
    %680 = vector.shape_cast %679 : vector<1x8x128xf32> to vector<8x128xf32>
    %cst_263 = arith.constant dense<0.000000e+00> : vector<8x128xf32>
    %681 = tpu.matmul %672, %372, %cst_263 {dimension_numbers = #tpu.dot_dimension_numbers<[1], [0], [0], [1], [0, 0, 1, 1], [], []>} : vector<8x32xf32>, vector<32x128xf32>, vector<8x128xf32> -> vector<8x128xf32>
    %682 = arith.addf %680, %681 : vector<8x128xf32>
    %683 = vector.extract_strided_slice %678 {offsets = [0, 0], sizes = [8, 96], strides = [1, 1]} : vector<8x128xf32> to vector<8x96xf32>
    %684 = arith.negf %683 : vector<8x96xf32>
    %685 = math.exp %684 : vector<8x96xf32>
    %cst_264 = arith.constant 1.000000e+00 : f32
    %686 = vector.broadcast %cst_264 : f32 to vector<8x96xf32>
    %687 = arith.addf %686, %685 : vector<8x96xf32>
    %688 = arith.divf %686, %687 : vector<8x96xf32>
    %689 = vector.extract_strided_slice %688 {offsets = [0, 0], sizes = [8, 32], strides = [1, 1]} : vector<8x96xf32> to vector<8x32xf32>
    %690 = vector.extract_strided_slice %688 {offsets = [0, 32], sizes = [8, 32], strides = [1, 1]} : vector<8x96xf32> to vector<8x32xf32>
    %691 = vector.extract_strided_slice %688 {offsets = [0, 64], sizes = [8, 32], strides = [1, 1]} : vector<8x96xf32> to vector<8x32xf32>
    %692 = vector.extract_strided_slice %678 {offsets = [0, 96], sizes = [8, 32], strides = [1, 1]} : vector<8x128xf32> to vector<8x32xf32>
    %693 = math.tanh %692 : vector<8x32xf32>
    %694 = arith.mulf %690, %654 : vector<8x32xf32>
    %695 = arith.mulf %689, %693 : vector<8x32xf32>
    %696 = arith.addf %694, %695 : vector<8x32xf32>
    %697 = math.tanh %696 : vector<8x32xf32>
    %698 = arith.mulf %691, %697 : vector<8x32xf32>
    %699 = vector.extract_strided_slice %682 {offsets = [0, 0], sizes = [8, 96], strides = [1, 1]} : vector<8x128xf32> to vector<8x96xf32>
    %700 = arith.negf %699 : vector<8x96xf32>
    %701 = math.exp %700 : vector<8x96xf32>
    %cst_265 = arith.constant 1.000000e+00 : f32
    %702 = vector.broadcast %cst_265 : f32 to vector<8x96xf32>
    %703 = arith.addf %702, %701 : vector<8x96xf32>
    %704 = arith.divf %702, %703 : vector<8x96xf32>
    %705 = vector.extract_strided_slice %704 {offsets = [0, 0], sizes = [8, 32], strides = [1, 1]} : vector<8x96xf32> to vector<8x32xf32>
    %706 = vector.extract_strided_slice %704 {offsets = [0, 32], sizes = [8, 32], strides = [1, 1]} : vector<8x96xf32> to vector<8x32xf32>
    %707 = vector.extract_strided_slice %704 {offsets = [0, 64], sizes = [8, 32], strides = [1, 1]} : vector<8x96xf32> to vector<8x32xf32>
    %708 = vector.extract_strided_slice %682 {offsets = [0, 96], sizes = [8, 32], strides = [1, 1]} : vector<8x128xf32> to vector<8x32xf32>
    %709 = math.tanh %708 : vector<8x32xf32>
    %710 = arith.mulf %706, %670 : vector<8x32xf32>
    %711 = arith.mulf %705, %709 : vector<8x32xf32>
    %712 = arith.addf %710, %711 : vector<8x32xf32>
    %713 = math.tanh %712 : vector<8x32xf32>
    %714 = arith.mulf %707, %713 : vector<8x32xf32>
    %c56_266 = arith.constant 56 : index
    %c0_267 = arith.constant 0 : index
    %715 = vector.load %arg12[%c56_266, %c0_267] : memref<64x64xf32, #tpu.memory_space<vmem>>, vector<8x32xf32>
    tpu.vector_store %arg12[%c56_266, %c0_267], %698 {strides = array<i32>} : memref<64x64xf32, #tpu.memory_space<vmem>>, vector<8x32xf32>,
    %c0_268 = arith.constant 0 : index
    %c32_269 = arith.constant 32 : index
    %716 = vector.load %arg12[%c0_268, %c32_269] : memref<64x64xf32, #tpu.memory_space<vmem>>, vector<8x32xf32>
    tpu.vector_store %arg12[%c0_268, %c32_269], %714 {strides = array<i32>} : memref<64x64xf32, #tpu.memory_space<vmem>>, vector<8x32xf32>,
    %c0_270 = arith.constant 0 : index
    %c0_271 = arith.constant 0 : index
    %717 = vector.load %arg12[%c0_270, %c0_271] : memref<64x64xf32, #tpu.memory_space<vmem>>, vector<64x64xf32>
    %c0_272 = arith.constant 0 : index
    %c0_273 = arith.constant 0 : index
    %718 = vector.load %arg7[%c0_272, %c0_273] : memref<64x128xf32, #tpu.memory_space<vmem>>, vector<64x128xf32>
    %cst_274 = arith.constant dense<0.000000e+00> : vector<64x128xf32>
    %719 = tpu.matmul %717, %718, %cst_274 {dimension_numbers = #tpu.dot_dimension_numbers<[1], [0], [0], [1], [0, 0, 1, 1], [], []>} : vector<64x64xf32>, vector<64x128xf32>, vector<64x128xf32> -> vector<64x128xf32>
    %c0_275 = arith.constant 0 : index
    %c0_276 = arith.constant 0 : index
    %720 = vector.load %arg8[%c0_275, %c0_276] : memref<1x128xf32, #tpu.memory_space<vmem>>, vector<1x128xf32>
    %721 = vector.broadcast %720 : vector<1x128xf32> to vector<64x128xf32>
    %722 = arith.addf %719, %721 : vector<64x128xf32>
    %c0_277 = arith.constant 0 : index
    %c0_278 = arith.constant 0 : index
    %723 = vector.load %arg9[%c0_277, %c0_278] : memref<64x128xf32, #tpu.memory_space<vmem>>, vector<64x128xf32>
    tpu.vector_store %arg9[%c0_277, %c0_278], %722 {strides = array<i32>} : memref<64x128xf32, #tpu.memory_space<vmem>>, vector<64x128xf32>,
    return
  }
}

</mosaic_0001>

<llo_original>
// kernel: bidirectional_lstm_forward.1
$region0: #{bidirectional_lstm_forward.1}
  #allocation0 [shape = 'u32[]', space=smem, size = 0x4, offset = 0x4, fixed_abs, tag = 'smem constant byte address 0x4 - core index']
  #allocation1 [shape = 'u32[72,128]{1,0:T(1,128)}', space=vmem, size = 0x9000, scoped, tag = 'internal scratch']
  #allocation2 [shape = 'f32[64,64]{1,0:T(8,128)}', space=vmem, size = 0x8000, scoped, tag = 'scratch operand']
  #allocation3 [shape = 'f32[2,64,128]{2,1,0:T(8,128)}', space=vmem, size = 0x10000, scoped, tag = 'scratch operand']
  #allocation4 [shape = 'f32[64,64]{1,0:T(8,128)}', space=vmem, size = 0x8000, scoped, tag = 'scratch operand']
  %s0 = inlined_call_operand.vmem [shape: f32[2,64,128], index: 0, kind: input, shape index: {}]
  %s1 = inlined_call_operand.vmem [shape: f32[2,32,128], index: 1, kind: input, shape index: {}]
  %s2 = inlined_call_operand.vmem [shape: f32[2,64,128], index: 2, kind: input, shape index: {}]
  %s3 = inlined_call_operand.vmem [shape: f32[2,32,128], index: 3, kind: input, shape index: {}]
  %s4 = inlined_call_operand.vmem [shape: f32[2,1,128], index: 4, kind: input, shape index: {}]
  %s5 = inlined_call_operand.vmem [shape: f32[4,8,32], index: 5, kind: input, shape index: {}]
  %s6 = inlined_call_operand.vmem [shape: f32[4,8,32], index: 6, kind: input, shape index: {}]
  %s7 = inlined_call_operand.vmem [shape: f32[64,128], index: 7, kind: input, shape index: {}]
  %s8 = inlined_call_operand.vmem [shape: f32[1,128], index: 8, kind: input, shape index: {}]
  %s9 = inlined_call_operand.vmem [shape: f32[64,128], index: 9, kind: output, shape index: {}]
  %s10 = sld [smem:[#allocation0]]
  $region46: #{bidirectional_lstm_forward.1} parent=0
    _
  %s12 = ssub.s32 1, %s10
  %s13 = scalar_select 0, %s12, %s10
  // Predicated region
  $region2: #{bidirectional_lstm_forward.1} parent=0 // pred_check
    _
  $region3: #{bidirectional_lstm_forward.1} parent=0 // pred_check_branch
    %15 = sbr.rel (0) target = $region5
  $region4: #{bidirectional_lstm_forward.1} parent=0 // pred_region
    _
  $region5: #{bidirectional_lstm_forward.1} parent=0 // pred_fallthru
    _
  // Predicated region
  $region6: #{bidirectional_lstm_forward.1} parent=0 // pred_check
    _
  $region7: #{bidirectional_lstm_forward.1} parent=0 // pred_check_branch
    %17 = sbr.rel (0) target = $region9
  $region8: #{bidirectional_lstm_forward.1} parent=0 // pred_region
    _
  $region9: #{bidirectional_lstm_forward.1} parent=0 // pred_fallthru
    _
  // Predicated region
  $region10: #{bidirectional_lstm_forward.1} parent=0 // pred_check
    _
  $region11: #{bidirectional_lstm_forward.1} parent=0 // pred_check_branch
    %19 = sbr.rel (0) target = $region13
  $region12: #{bidirectional_lstm_forward.1} parent=0 // pred_region
    _
  $region13: #{bidirectional_lstm_forward.1} parent=0 // pred_fallthru
    _
  // Predicated region
  $region14: #{bidirectional_lstm_forward.1} parent=0 // pred_check
    _
  $region15: #{bidirectional_lstm_forward.1} parent=0 // pred_check_branch
    %21 = sbr.rel (0) target = $region17
  $region16: #{bidirectional_lstm_forward.1} parent=0 // pred_region
    _
  $region17: #{bidirectional_lstm_forward.1} parent=0 // pred_fallthru
    _
  // Predicated region
  $region18: #{bidirectional_lstm_forward.1} parent=0 // pred_check
    _
  $region19: #{bidirectional_lstm_forward.1} parent=0 // pred_check_branch
    %23 = sbr.rel (0) target = $region21
  $region20: #{bidirectional_lstm_forward.1} parent=0 // pred_region
    _
  $region21: #{bidirectional_lstm_forward.1} parent=0 // pred_fallthru
    _
  // Predicated region
  $region22: #{bidirectional_lstm_forward.1} parent=0 // pred_check
    _
  $region23: #{bidirectional_lstm_forward.1} parent=0 // pred_check_branch
    %25 = sbr.rel (0) target = $region25
  $region24: #{bidirectional_lstm_forward.1} parent=0 // pred_region
    _
  $region25: #{bidirectional_lstm_forward.1} parent=0 // pred_fallthru
    _
  // Predicated region
  $region26: #{bidirectional_lstm_forward.1} parent=0 // pred_check
    _
  $region27: #{bidirectional_lstm_forward.1} parent=0 // pred_check_branch
    %27 = sbr.rel (0) target = $region29
  $region28: #{bidirectional_lstm_forward.1} parent=0 // pred_region
    _
  $region29: #{bidirectional_lstm_forward.1} parent=0 // pred_fallthru
    _
  // Predicated region
  $region30: #{bidirectional_lstm_forward.1} parent=0 // pred_check
    _
  $region31: #{bidirectional_lstm_forward.1} parent=0 // pred_check_branch
    %29 = sbr.rel (0) target = $region33
  $region32: #{bidirectional_lstm_forward.1} parent=0 // pred_region
    _
  $region33: #{bidirectional_lstm_forward.1} parent=0 // pred_fallthru
    _
  // Predicated region
  $region34: #{bidirectional_lstm_forward.1} parent=0 // pred_check
    _
  $region35: #{bidirectional_lstm_forward.1} parent=0 // pred_check_branch
    %31 = sbr.rel (0) target = $region37
  $region36: #{bidirectional_lstm_forward.1} parent=0 // pred_region
    _
  $region37: #{bidirectional_lstm_forward.1} parent=0 // pred_fallthru
    _
  %v32 = vld [vmem:[%s1] sm:$0xff]
  %v33 = vld [vmem:[%s1 + $0x8] sm:$0xff]
  %v34 = vld [vmem:[%s1 + $0x10] sm:$0xff]
  %v35 = vld [vmem:[%s1 + $0x18] sm:$0xff]
  %s36 = scalar_lea.vmem %s1, 32
  %v37 = vld [vmem:[%s36] sm:$0xff]
  %v38 = vld [vmem:[%s36 + $0x8] sm:$0xff]
  %v39 = vld [vmem:[%s36 + $0x10] sm:$0xff]
  %v40 = vld [vmem:[%s36 + $0x18] sm:$0xff]
  %v41 = vld [vmem:[%s5] sm:$0xff]
  %v42 = vld [vmem:[%s6] sm:$0xff]
  %s43 = scalar_lea.vmem %s5, 8
  %v44 = vld [vmem:[%s43] sm:$0xff]
  %s45 = scalar_lea.vmem %s6, 8
  %v46 = vld [vmem:[%s45] sm:$0xff]
  %v47 = vld [vmem:[%s0] sm:$0xff]
  %vm48 = vcmask 261120
  %v50 = vsel %vm48, %v41, 0
  %52 = vmatpush.msra.mxu0 0.0
  %53 = vmatpush.msra.mxu0 0.0
  %54 = vmatpush.msra.mxu0 0.0
  %55 = vmatpush.msra.mxu0 0.0
  %56 = vmatpush.msra.mxu0 0.0
  %57 = vmatpush.msra.mxu0 0.0
  %58 = vmatpush.msra.mxu0 0.0
  %59 = vmatpush.msra.mxu0 0.0
  %60 = vmatpush.msra.mxu0 0.0
  %61 = vmatpush.msra.mxu0 0.0
  %62 = vmatpush.msra.mxu0 0.0
  %63 = vmatpush.msra.mxu0 0.0
  %64 = vmatpush.msra.mxu0 %v35
  %65 = vmatpush.msra.mxu0 %v34
  %66 = vmatpush.msra.mxu0 %v33
  %67 = vmatpush.msra.mxu0 %v32
  %68 = vmatmul.f32.gmra.mxu0 %v50
  %v69 = vpop.f32.mrf.mxu0
  %v70 = vadd.f32 0.0, %v69
  %71 = vdwg.mxu0
  %v72 = vadd.f32 %v47, %v70
  %s73 = scalar_lea.vmem %s0, 64
  %v74 = vld [vmem:[%s73 + $0x38] sm:$0xff]
  %v76 = vsel %vm48, %v44, 0
  %78 = vmatpush.msra.mxu0 0.0
  %79 = vmatpush.msra.mxu0 0.0
  %80 = vmatpush.msra.mxu0 0.0
  %81 = vmatpush.msra.mxu0 0.0
  %82 = vmatpush.msra.mxu0 0.0
  %83 = vmatpush.msra.mxu0 0.0
  %84 = vmatpush.msra.mxu0 0.0
  %85 = vmatpush.msra.mxu0 0.0
  %86 = vmatpush.msra.mxu0 0.0
  %87 = vmatpush.msra.mxu0 0.0
  %88 = vmatpush.msra.mxu0 0.0
  %89 = vmatpush.msra.mxu0 0.0
  %90 = vmatpush.msra.mxu0 %v40
  %91 = vmatpush.msra.mxu0 %v39
  %92 = vmatpush.msra.mxu0 %v38
  %93 = vmatpush.msra.mxu0 %v37
  %94 = vmatmul.f32.gmra.mxu0 %v76
  %v95 = vpop.f32.mrf.mxu0
  %v96 = vadd.f32 0.0, %v95
  %97 = vdwg.mxu0
  %v98 = vadd.f32 %v74, %v96
  %v99 = vxor.u32 %v72, 2147483648
  %v100 = vmul.f32 %v99, 1.442695
  %v101 = vpow.pop %v100
  %v102 = vadd.f32 %v101, 1.0
  %v103 = vrcp.pop %v102
  %v104 = vmul.f32 %v102, %v103
  %v105 = vsub.f32 1.0, %v104
  %v106 = vmul.f32 %v103, %v105
  %v107 = vadd.f32 %v103, %v106
  %vm108 = vweird.f32 %v102
  %vm109 = vweird.f32 %v103
  %vm110 = vmor %vm108, %vm109
  %v111 = vsel %vm110, %v103, %v107
  %v112 = vand.u32 2147483647, %v102
  %vm113 = vcmp.eq.f32.partialorder %v112, 8.507059e+37
  %v114 = vand.u32 %v102, 2147483648
  %v115 = vor.u32 1.1754944e-38, %v114
  %v116 = vsel %vm113, %v115, %v111
  %v117 = vmul.f32 1.0, %v116
  %v118 = vtanh.pop %v72
  %120 = vrot.lane.b32.xlu0 %v42, 32
  %v121 = vpop.permute.xlu0 %120
  %v123 = vmul.f32 %v117, %v121
  %125 = vrot.lane.b32.xlu0 %v118, 32
  %v126 = vpop.permute.xlu0 %125
  %v128 = vmul.f32 %v117, %v126
  %130 = vrot.lane.b32.xlu0 %v128, 32
  %v131 = vpop.permute.xlu0 %130
  %v133 = vadd.f32 %v123, %v131
  %v134 = vtanh.pop %v133
  %136 = vrot.lane.b32.xlu0 %v134, 32
  %v137 = vpop.permute.xlu0 %136
  %v139 = vmul.f32 %v117, %v137
  %v140 = vxor.u32 %v98, 2147483648
  %v141 = vmul.f32 %v140, 1.442695
  %v142 = vpow.pop %v141
  %v143 = vadd.f32 %v142, 1.0
  %v144 = vrcp.pop %v143
  %v145 = vmul.f32 %v143, %v144
  %v146 = vsub.f32 1.0, %v145
  %v147 = vmul.f32 %v144, %v146
  %v148 = vadd.f32 %v144, %v147
  %vm149 = vweird.f32 %v143
  %vm150 = vweird.f32 %v144
  %vm151 = vmor %vm149, %vm150
  %v152 = vsel %vm151, %v144, %v148
  %v153 = vand.u32 2147483647, %v143
  %vm154 = vcmp.eq.f32.partialorder %v153, 8.507059e+37
  %v155 = vand.u32 %v143, 2147483648
  %v156 = vor.u32 1.1754944e-38, %v155
  %v157 = vsel %vm154, %v156, %v152
  %v158 = vmul.f32 1.0, %v157
  %v159 = vtanh.pop %v98
  %161 = vrot.lane.b32.xlu0 %v46, 32
  %v162 = vpop.permute.xlu0 %161
  %v164 = vmul.f32 %v158, %v162
  %166 = vrot.lane.b32.xlu0 %v159, 32
  %v167 = vpop.permute.xlu0 %166
  %v169 = vmul.f32 %v158, %v167
  %171 = vrot.lane.b32.xlu0 %v169, 32
  %v172 = vpop.permute.xlu0 %171
  %v174 = vadd.f32 %v164, %v172
  %v175 = vtanh.pop %v174
  %177 = vrot.lane.b32.xlu0 %v175, 32
  %v178 = vpop.permute.xlu0 %177
  %v180 = vmul.f32 %v158, %v178
  %182 = vrot.lane.b32.xlu0 %v139, 64
  %v183 = vpop.permute.xlu0 %182
  %185 = vst.msk [vmem:[#allocation2] sm:$0xff] %vm48, %v183
  %187 = vrot.lane.b32.xlu0 %v180, 96
  %v188 = vpop.permute.xlu0 %187
  %vm190 = vcmask 523520
  %191 = vst.msk [vmem:[#allocation2 + $0x38] sm:$0xff] %vm190, %v188
  %v192 = vld [vmem:[%s0 + $0x8] sm:$0xff]
  %v193 = vsel %vm48, %v183, 0
  %195 = vmatpush.msra.mxu0 0.0
  %196 = vmatpush.msra.mxu0 0.0
  %197 = vmatpush.msra.mxu0 0.0
  %198 = vmatpush.msra.mxu0 0.0
  %199 = vmatpush.msra.mxu0 0.0
  %200 = vmatpush.msra.mxu0 0.0
  %201 = vmatpush.msra.mxu0 0.0
  %202 = vmatpush.msra.mxu0 0.0
  %203 = vmatpush.msra.mxu0 0.0
  %204 = vmatpush.msra.mxu0 0.0
  %205 = vmatpush.msra.mxu0 0.0
  %206 = vmatpush.msra.mxu0 0.0
  %207 = vmatpush.msra.mxu0 %v35
  %208 = vmatpush.msra.mxu0 %v34
  %209 = vmatpush.msra.mxu0 %v33
  %210 = vmatpush.msra.mxu0 %v32
  %211 = vmatmul.f32.gmra.mxu0 %v193
  %v212 = vpop.f32.mrf.mxu0
  %v213 = vadd.f32 0.0, %v212
  %214 = vdwg.mxu0
  %v215 = vadd.f32 %v192, %v213
  %v216 = vld [vmem:[%s73 + $0x30] sm:$0xff]
  %217 = vrot.lane.b32.xlu0 %v180, 64
  %v218 = vpop.permute.xlu0 %217
  %v219 = vsel %vm48, %v218, 0
  %221 = vmatpush.msra.mxu0 0.0
  %222 = vmatpush.msra.mxu0 0.0
  %223 = vmatpush.msra.mxu0 0.0
  %224 = vmatpush.msra.mxu0 0.0
  %225 = vmatpush.msra.mxu0 0.0
  %226 = vmatpush.msra.mxu0 0.0
  %227 = vmatpush.msra.mxu0 0.0
  %228 = vmatpush.msra.mxu0 0.0
  %229 = vmatpush.msra.mxu0 0.0
  %230 = vmatpush.msra.mxu0 0.0
  %231 = vmatpush.msra.mxu0 0.0
  %232 = vmatpush.msra.mxu0 0.0
  %233 = vmatpush.msra.mxu0 %v40
  %234 = vmatpush.msra.mxu0 %v39
  %235 = vmatpush.msra.mxu0 %v38
  %236 = vmatpush.msra.mxu0 %v37
  %237 = vmatmul.f32.gmra.mxu0 %v219
  %v238 = vpop.f32.mrf.mxu0
  %v239 = vadd.f32 0.0, %v238
  %240 = vdwg.mxu0
  %v241 = vadd.f32 %v216, %v239
  %v242 = vxor.u32 %v215, 2147483648
  %v243 = vmul.f32 %v242, 1.442695
  %v244 = vpow.pop %v243
  %v245 = vadd.f32 %v244, 1.0
  %v246 = vrcp.pop %v245
  %v247 = vmul.f32 %v245, %v246
  %v248 = vsub.f32 1.0, %v247
  %v249 = vmul.f32 %v246, %v248
  %v250 = vadd.f32 %v246, %v249
  %vm251 = vweird.f32 %v245
  %vm252 = vweird.f32 %v246
  %vm253 = vmor %vm251, %vm252
  %v254 = vsel %vm253, %v246, %v250
  %v255 = vand.u32 2147483647, %v245
  %vm256 = vcmp.eq.f32.partialorder %v255, 8.507059e+37
  %v257 = vand.u32 %v245, 2147483648
  %v258 = vor.u32 1.1754944e-38, %v257
  %v259 = vsel %vm256, %v258, %v254
  %v260 = vmul.f32 1.0, %v259
  %v261 = vtanh.pop %v215
  %v262 = vmul.f32 %v260, %v133
  %264 = vrot.lane.b32.xlu0 %v261, 32
  %v265 = vpop.permute.xlu0 %264
  %v267 = vmul.f32 %v260, %v265
  %269 = vrot.lane.b32.xlu0 %v267, 32
  %v270 = vpop.permute.xlu0 %269
  %v272 = vadd.f32 %v262, %v270
  %v273 = vtanh.pop %v272
  %275 = vrot.lane.b32.xlu0 %v273, 32
  %v276 = vpop.permute.xlu0 %275
  %v278 = vmul.f32 %v260, %v276
  %v279 = vxor.u32 %v241, 2147483648
  %v280 = vmul.f32 %v279, 1.442695
  %v281 = vpow.pop %v280
  %v282 = vadd.f32 %v281, 1.0
  %v283 = vrcp.pop %v282
  %v284 = vmul.f32 %v282, %v283
  %v285 = vsub.f32 1.0, %v284
  %v286 = vmul.f32 %v283, %v285
  %v287 = vadd.f32 %v283, %v286
  %vm288 = vweird.f32 %v282
  %vm289 = vweird.f32 %v283
  %vm290 = vmor %vm288, %vm289
  %v291 = vsel %vm290, %v283, %v287
  %v292 = vand.u32 2147483647, %v282
  %vm293 = vcmp.eq.f32.partialorder %v292, 8.507059e+37
  %v294 = vand.u32 %v282, 2147483648
  %v295 = vor.u32 1.1754944e-38, %v294
  %v296 = vsel %vm293, %v295, %v291
  %v297 = vmul.f32 1.0, %v296
  %v298 = vtanh.pop %v241
  %v299 = vmul.f32 %v297, %v174
  %301 = vrot.lane.b32.xlu0 %v298, 32
  %v302 = vpop.permute.xlu0 %301
  %v304 = vmul.f32 %v297, %v302
  %306 = vrot.lane.b32.xlu0 %v304, 32
  %v307 = vpop.permute.xlu0 %306
  %v309 = vadd.f32 %v299, %v307
  %v310 = vtanh.pop %v309
  %312 = vrot.lane.b32.xlu0 %v310, 32
  %v313 = vpop.permute.xlu0 %312
  %v315 = vmul.f32 %v297, %v313
  %317 = vrot.lane.b32.xlu0 %v278, 64
  %v318 = vpop.permute.xlu0 %317
  %320 = vst.msk [vmem:[#allocation2 + $0x8] sm:$0xff] %vm48, %v318
  %322 = vrot.lane.b32.xlu0 %v315, 96
  %v323 = vpop.permute.xlu0 %322
  %325 = vst.msk [vmem:[#allocation2 + $0x30] sm:$0xff] %vm190, %v323
  %v326 = vld [vmem:[%s0 + $0x10] sm:$0xff]
  %v327 = vsel %vm48, %v318, 0
  %329 = vmatpush.msra.mxu0 0.0
  %330 = vmatpush.msra.mxu0 0.0
  %331 = vmatpush.msra.mxu0 0.0
  %332 = vmatpush.msra.mxu0 0.0
  %333 = vmatpush.msra.mxu0 0.0
  %334 = vmatpush.msra.mxu0 0.0
  %335 = vmatpush.msra.mxu0 0.0
  %336 = vmatpush.msra.mxu0 0.0
  %337 = vmatpush.msra.mxu0 0.0
  %338 = vmatpush.msra.mxu0 0.0
  %339 = vmatpush.msra.mxu0 0.0
  %340 = vmatpush.msra.mxu0 0.0
  %341 = vmatpush.msra.mxu0 %v35
  %342 = vmatpush.msra.mxu0 %v34
  %343 = vmatpush.msra.mxu0 %v33
  %344 = vmatpush.msra.mxu0 %v32
  %345 = vmatmul.f32.gmra.mxu0 %v327
  %v346 = vpop.f32.mrf.mxu0
  %v347 = vadd.f32 0.0, %v346
  %348 = vdwg.mxu0
  %v349 = vadd.f32 %v326, %v347
  %v350 = vld [vmem:[%s73 + $0x28] sm:$0xff]
  %351 = vrot.lane.b32.xlu0 %v315, 64
  %v352 = vpop.permute.xlu0 %351
  %v353 = vsel %vm48, %v352, 0
  %355 = vmatpush.msra.mxu0 0.0
  %356 = vmatpush.msra.mxu0 0.0
  %357 = vmatpush.msra.mxu0 0.0
  %358 = vmatpush.msra.mxu0 0.0
  %359 = vmatpush.msra.mxu0 0.0
  %360 = vmatpush.msra.mxu0 0.0
  %361 = vmatpush.msra.mxu0 0.0
  %362 = vmatpush.msra.mxu0 0.0
  %363 = vmatpush.msra.mxu0 0.0
  %364 = vmatpush.msra.mxu0 0.0
  %365 = vmatpush.msra.mxu0 0.0
  %366 = vmatpush.msra.mxu0 0.0
  %367 = vmatpush.msra.mxu0 %v40
  %368 = vmatpush.msra.mxu0 %v39
  %369 = vmatpush.msra.mxu0 %v38
  %370 = vmatpush.msra.mxu0 %v37
  %371 = vmatmul.f32.gmra.mxu0 %v353
  %v372 = vpop.f32.mrf.mxu0
  %v373 = vadd.f32 0.0, %v372
  %374 = vdwg.mxu0
  %v375 = vadd.f32 %v350, %v373
  %v376 = vxor.u32 %v349, 2147483648
  %v377 = vmul.f32 %v376, 1.442695
  %v378 = vpow.pop %v377
  %v379 = vadd.f32 %v378, 1.0
  %v380 = vrcp.pop %v379
  %v381 = vmul.f32 %v379, %v380
  %v382 = vsub.f32 1.0, %v381
  %v383 = vmul.f32 %v380, %v382
  %v384 = vadd.f32 %v380, %v383
  %vm385 = vweird.f32 %v379
  %vm386 = vweird.f32 %v380
  %vm387 = vmor %vm385, %vm386
  %v388 = vsel %vm387, %v380, %v384
  %v389 = vand.u32 2147483647, %v379
  %vm390 = vcmp.eq.f32.partialorder %v389, 8.507059e+37
  %v391 = vand.u32 %v379, 2147483648
  %v392 = vor.u32 1.1754944e-38, %v391
  %v393 = vsel %vm390, %v392, %v388
  %v394 = vmul.f32 1.0, %v393
  %v395 = vtanh.pop %v349
  %v396 = vmul.f32 %v394, %v272
  %398 = vrot.lane.b32.xlu0 %v395, 32
  %v399 = vpop.permute.xlu0 %398
  %v401 = vmul.f32 %v394, %v399
  %403 = vrot.lane.b32.xlu0 %v401, 32
  %v404 = vpop.permute.xlu0 %403
  %v406 = vadd.f32 %v396, %v404
  %v407 = vtanh.pop %v406
  %409 = vrot.lane.b32.xlu0 %v407, 32
  %v410 = vpop.permute.xlu0 %409
  %v412 = vmul.f32 %v394, %v410
  %v413 = vxor.u32 %v375, 2147483648
  %v414 = vmul.f32 %v413, 1.442695
  %v415 = vpow.pop %v414
  %v416 = vadd.f32 %v415, 1.0
  %v417 = vrcp.pop %v416
  %v418 = vmul.f32 %v416, %v417
  %v419 = vsub.f32 1.0, %v418
  %v420 = vmul.f32 %v417, %v419
  %v421 = vadd.f32 %v417, %v420
  %vm422 = vweird.f32 %v416
  %vm423 = vweird.f32 %v417
  %vm424 = vmor %vm422, %vm423
  %v425 = vsel %vm424, %v417, %v421
  %v426 = vand.u32 2147483647, %v416
  %vm427 = vcmp.eq.f32.partialorder %v426, 8.507059e+37
  %v428 = vand.u32 %v416, 2147483648
  %v429 = vor.u32 1.1754944e-38, %v428
  %v430 = vsel %vm427, %v429, %v425
  %v431 = vmul.f32 1.0, %v430
  %v432 = vtanh.pop %v375
  %v433 = vmul.f32 %v431, %v309
  %435 = vrot.lane.b32.xlu0 %v432, 32
  %v436 = vpop.permute.xlu0 %435
  %v438 = vmul.f32 %v431, %v436
  %440 = vrot.lane.b32.xlu0 %v438, 32
  %v441 = vpop.permute.xlu0 %440
  %v443 = vadd.f32 %v433, %v441
  %v444 = vtanh.pop %v443
  %446 = vrot.lane.b32.xlu0 %v444, 32
  %v447 = vpop.permute.xlu0 %446
  %v449 = vmul.f32 %v431, %v447
  %451 = vrot.lane.b32.xlu0 %v412, 64
  %v452 = vpop.permute.xlu0 %451
  %454 = vst.msk [vmem:[#allocation2 + $0x10] sm:$0xff] %vm48, %v452
  %456 = vrot.lane.b32.xlu0 %v449, 96
  %v457 = vpop.permute.xlu0 %456
  %459 = vst.msk [vmem:[#allocation2 + $0x28] sm:$0xff] %vm190, %v457
  %v460 = vld [vmem:[%s0 + $0x18] sm:$0xff]
  %v461 = vsel %vm48, %v452, 0
  %463 = vmatpush.msra.mxu0 0.0
  %464 = vmatpush.msra.mxu0 0.0
  %465 = vmatpush.msra.mxu0 0.0
  %466 = vmatpush.msra.mxu0 0.0
  %467 = vmatpush.msra.mxu0 0.0
  %468 = vmatpush.msra.mxu0 0.0
  %469 = vmatpush.msra.mxu0 0.0
  %470 = vmatpush.msra.mxu0 0.0
  %471 = vmatpush.msra.mxu0 0.0
  %472 = vmatpush.msra.mxu0 0.0
  %473 = vmatpush.msra.mxu0 0.0
  %474 = vmatpush.msra.mxu0 0.0
  %475 = vmatpush.msra.mxu0 %v35
  %476 = vmatpush.msra.mxu0 %v34
  %477 = vmatpush.msra.mxu0 %v33
  %478 = vmatpush.msra.mxu0 %v32
  %479 = vmatmul.f32.gmra.mxu0 %v461
  %v480 = vpop.f32.mrf.mxu0
  %v481 = vadd.f32 0.0, %v480
  %482 = vdwg.mxu0
  %v483 = vadd.f32 %v460, %v481
  %v484 = vld [vmem:[%s73 + $0x20] sm:$0xff]
  %485 = vrot.lane.b32.xlu0 %v449, 64
  %v486 = vpop.permute.xlu0 %485
  %v487 = vsel %vm48, %v486, 0
  %489 = vmatpush.msra.mxu0 0.0
  %490 = vmatpush.msra.mxu0 0.0
  %491 = vmatpush.msra.mxu0 0.0
  %492 = vmatpush.msra.mxu0 0.0
  %493 = vmatpush.msra.mxu0 0.0
  %494 = vmatpush.msra.mxu0 0.0
  %495 = vmatpush.msra.mxu0 0.0
  %496 = vmatpush.msra.mxu0 0.0
  %497 = vmatpush.msra.mxu0 0.0
  %498 = vmatpush.msra.mxu0 0.0
  %499 = vmatpush.msra.mxu0 0.0
  %500 = vmatpush.msra.mxu0 0.0
  %501 = vmatpush.msra.mxu0 %v40
  %502 = vmatpush.msra.mxu0 %v39
  %503 = vmatpush.msra.mxu0 %v38
  %504 = vmatpush.msra.mxu0 %v37
  %505 = vmatmul.f32.gmra.mxu0 %v487
  %v506 = vpop.f32.mrf.mxu0
  %v507 = vadd.f32 0.0, %v506
  %508 = vdwg.mxu0
  %v509 = vadd.f32 %v484, %v507
  %v510 = vxor.u32 %v483, 2147483648
  %v511 = vmul.f32 %v510, 1.442695
  %v512 = vpow.pop %v511
  %v513 = vadd.f32 %v512, 1.0
  %v514 = vrcp.pop %v513
  %v515 = vmul.f32 %v513, %v514
  %v516 = vsub.f32 1.0, %v515
  %v517 = vmul.f32 %v514, %v516
  %v518 = vadd.f32 %v514, %v517
  %vm519 = vweird.f32 %v513
  %vm520 = vweird.f32 %v514
  %vm521 = vmor %vm519, %vm520
  %v522 = vsel %vm521, %v514, %v518
  %v523 = vand.u32 2147483647, %v513
  %vm524 = vcmp.eq.f32.partialorder %v523, 8.507059e+37
  %v525 = vand.u32 %v513, 2147483648
  %v526 = vor.u32 1.1754944e-38, %v525
  %v527 = vsel %vm524, %v526, %v522
  %v528 = vmul.f32 1.0, %v527
  %v529 = vtanh.pop %v483
  %v530 = vmul.f32 %v528, %v406
  %532 = vrot.lane.b32.xlu0 %v529, 32
  %v533 = vpop.permute.xlu0 %532
  %v535 = vmul.f32 %v528, %v533
  %537 = vrot.lane.b32.xlu0 %v535, 32
  %v538 = vpop.permute.xlu0 %537
  %v540 = vadd.f32 %v530, %v538
  %v541 = vtanh.pop %v540
  %543 = vrot.lane.b32.xlu0 %v541, 32
  %v544 = vpop.permute.xlu0 %543
  %v546 = vmul.f32 %v528, %v544
  %v547 = vxor.u32 %v509, 2147483648
  %v548 = vmul.f32 %v547, 1.442695
  %v549 = vpow.pop %v548
  %v550 = vadd.f32 %v549, 1.0
  %v551 = vrcp.pop %v550
  %v552 = vmul.f32 %v550, %v551
  %v553 = vsub.f32 1.0, %v552
  %v554 = vmul.f32 %v551, %v553
  %v555 = vadd.f32 %v551, %v554
  %vm556 = vweird.f32 %v550
  %vm557 = vweird.f32 %v551
  %vm558 = vmor %vm556, %vm557
  %v559 = vsel %vm558, %v551, %v555
  %v560 = vand.u32 2147483647, %v550
  %vm561 = vcmp.eq.f32.partialorder %v560, 8.507059e+37
  %v562 = vand.u32 %v550, 2147483648
  %v563 = vor.u32 1.1754944e-38, %v562
  %v564 = vsel %vm561, %v563, %v559
  %v565 = vmul.f32 1.0, %v564
  %v566 = vtanh.pop %v509
  %v567 = vmul.f32 %v565, %v443
  %569 = vrot.lane.b32.xlu0 %v566, 32
  %v570 = vpop.permute.xlu0 %569
  %v572 = vmul.f32 %v565, %v570
  %574 = vrot.lane.b32.xlu0 %v572, 32
  %v575 = vpop.permute.xlu0 %574
  %v577 = vadd.f32 %v567, %v575
  %v578 = vtanh.pop %v577
  %580 = vrot.lane.b32.xlu0 %v578, 32
  %v581 = vpop.permute.xlu0 %580
  %v583 = vmul.f32 %v565, %v581
  %585 = vrot.lane.b32.xlu0 %v546, 64
  %v586 = vpop.permute.xlu0 %585
  %588 = vst.msk [vmem:[#allocation2 + $0x18] sm:$0xff] %vm48, %v586
  %590 = vrot.lane.b32.xlu0 %v583, 96
  %v591 = vpop.permute.xlu0 %590
  %593 = vst.msk [vmem:[#allocation2 + $0x20] sm:$0xff] %vm190, %v591
  %v594 = vld [vmem:[%s0 + $0x20] sm:$0xff]
  %v595 = vsel %vm48, %v586, 0
  %597 = vmatpush.msra.mxu0 0.0
  %598 = vmatpush.msra.mxu0 0.0
  %599 = vmatpush.msra.mxu0 0.0
  %600 = vmatpush.msra.mxu0 0.0
  %601 = vmatpush.msra.mxu0 0.0
  %602 = vmatpush.msra.mxu0 0.0
  %603 = vmatpush.msra.mxu0 0.0
  %604 = vmatpush.msra.mxu0 0.0
  %605 = vmatpush.msra.mxu0 0.0
  %606 = vmatpush.msra.mxu0 0.0
  %607 = vmatpush.msra.mxu0 0.0
  %608 = vmatpush.msra.mxu0 0.0
  %609 = vmatpush.msra.mxu0 %v35
  %610 = vmatpush.msra.mxu0 %v34
  %611 = vmatpush.msra.mxu0 %v33
  %612 = vmatpush.msra.mxu0 %v32
  %613 = vmatmul.f32.gmra.mxu0 %v595
  %v614 = vpop.f32.mrf.mxu0
  %v615 = vadd.f32 0.0, %v614
  %616 = vdwg.mxu0
  %v617 = vadd.f32 %v594, %v615
  %v618 = vld [vmem:[%s73 + $0x18] sm:$0xff]
  %619 = vrot.lane.b32.xlu0 %v583, 64
  %v620 = vpop.permute.xlu0 %619
  %v621 = vsel %vm48, %v620, 0
  %623 = vmatpush.msra.mxu0 0.0
  %624 = vmatpush.msra.mxu0 0.0
  %625 = vmatpush.msra.mxu0 0.0
  %626 = vmatpush.msra.mxu0 0.0
  %627 = vmatpush.msra.mxu0 0.0
  %628 = vmatpush.msra.mxu0 0.0
  %629 = vmatpush.msra.mxu0 0.0
  %630 = vmatpush.msra.mxu0 0.0
  %631 = vmatpush.msra.mxu0 0.0
  %632 = vmatpush.msra.mxu0 0.0
  %633 = vmatpush.msra.mxu0 0.0
  %634 = vmatpush.msra.mxu0 0.0
  %635 = vmatpush.msra.mxu0 %v40
  %636 = vmatpush.msra.mxu0 %v39
  %637 = vmatpush.msra.mxu0 %v38
  %638 = vmatpush.msra.mxu0 %v37
  %639 = vmatmul.f32.gmra.mxu0 %v621
  %v640 = vpop.f32.mrf.mxu0
  %v641 = vadd.f32 0.0, %v640
  %642 = vdwg.mxu0
  %v643 = vadd.f32 %v618, %v641
  %v644 = vxor.u32 %v617, 2147483648
  %v645 = vmul.f32 %v644, 1.442695
  %v646 = vpow.pop %v645
  %v647 = vadd.f32 %v646, 1.0
  %v648 = vrcp.pop %v647
  %v649 = vmul.f32 %v647, %v648
  %v650 = vsub.f32 1.0, %v649
  %v651 = vmul.f32 %v648, %v650
  %v652 = vadd.f32 %v648, %v651
  %vm653 = vweird.f32 %v647
  %vm654 = vweird.f32 %v648
  %vm655 = vmor %vm653, %vm654
  %v656 = vsel %vm655, %v648, %v652
  %v657 = vand.u32 2147483647, %v647
  %vm658 = vcmp.eq.f32.partialorder %v657, 8.507059e+37
  %v659 = vand.u32 %v647, 2147483648
  %v660 = vor.u32 1.1754944e-38, %v659
  %v661 = vsel %vm658, %v660, %v656
  %v662 = vmul.f32 1.0, %v661
  %v663 = vtanh.pop %v617
  %v664 = vmul.f32 %v662, %v540
  %666 = vrot.lane.b32.xlu0 %v663, 32
  %v667 = vpop.permute.xlu0 %666
  %v669 = vmul.f32 %v662, %v667
  %671 = vrot.lane.b32.xlu0 %v669, 32
  %v672 = vpop.permute.xlu0 %671
  %v674 = vadd.f32 %v664, %v672
  %v675 = vtanh.pop %v674
  %677 = vrot.lane.b32.xlu0 %v675, 32
  %v678 = vpop.permute.xlu0 %677
  %v680 = vmul.f32 %v662, %v678
  %v681 = vxor.u32 %v643, 2147483648
  %v682 = vmul.f32 %v681, 1.442695
  %v683 = vpow.pop %v682
  %v684 = vadd.f32 %v683, 1.0
  %v685 = vrcp.pop %v684
  %v686 = vmul.f32 %v684, %v685
  %v687 = vsub.f32 1.0, %v686
  %v688 = vmul.f32 %v685, %v687
  %v689 = vadd.f32 %v685, %v688
  %vm690 = vweird.f32 %v684
  %vm691 = vweird.f32 %v685
  %vm692 = vmor %vm690, %vm691
  %v693 = vsel %vm692, %v685, %v689
  %v694 = vand.u32 2147483647, %v684
  %vm695 = vcmp.eq.f32.partialorder %v694, 8.507059e+37
  %v696 = vand.u32 %v684, 2147483648
  %v697 = vor.u32 1.1754944e-38, %v696
  %v698 = vsel %vm695, %v697, %v693
  %v699 = vmul.f32 1.0, %v698
  %v700 = vtanh.pop %v643
  %v701 = vmul.f32 %v699, %v577
  %703 = vrot.lane.b32.xlu0 %v700, 32
  %v704 = vpop.permute.xlu0 %703
  %v706 = vmul.f32 %v699, %v704
  %708 = vrot.lane.b32.xlu0 %v706, 32
  %v709 = vpop.permute.xlu0 %708
  %v711 = vadd.f32 %v701, %v709
  %v712 = vtanh.pop %v711
  %714 = vrot.lane.b32.xlu0 %v712, 32
  %v715 = vpop.permute.xlu0 %714
  %v717 = vmul.f32 %v699, %v715
  %719 = vrot.lane.b32.xlu0 %v680, 64
  %v720 = vpop.permute.xlu0 %719
  %722 = vst.msk [vmem:[#allocation2 + $0x20] sm:$0xff] %vm48, %v720
  %724 = vrot.lane.b32.xlu0 %v717, 96
  %v725 = vpop.permute.xlu0 %724
  %727 = vst.msk [vmem:[#allocation2 + $0x18] sm:$0xff] %vm190, %v725
  %v728 = vld [vmem:[%s0 + $0x28] sm:$0xff]
  %v729 = vsel %vm48, %v720, 0
  %731 = vmatpush.msra.mxu0 0.0
  %732 = vmatpush.msra.mxu0 0.0
  %733 = vmatpush.msra.mxu0 0.0
  %734 = vmatpush.msra.mxu0 0.0
  %735 = vmatpush.msra.mxu0 0.0
  %736 = vmatpush.msra.mxu0 0.0
  %737 = vmatpush.msra.mxu0 0.0
  %738 = vmatpush.msra.mxu0 0.0
  %739 = vmatpush.msra.mxu0 0.0
  %740 = vmatpush.msra.mxu0 0.0
  %741 = vmatpush.msra.mxu0 0.0
  %742 = vmatpush.msra.mxu0 0.0
  %743 = vmatpush.msra.mxu0 %v35
  %744 = vmatpush.msra.mxu0 %v34
  %745 = vmatpush.msra.mxu0 %v33
  %746 = vmatpush.msra.mxu0 %v32
  %747 = vmatmul.f32.gmra.mxu0 %v729
  %v748 = vpop.f32.mrf.mxu0
  %v749 = vadd.f32 0.0, %v748
  %750 = vdwg.mxu0
  %v751 = vadd.f32 %v728, %v749
  %v752 = vld [vmem:[%s73 + $0x10] sm:$0xff]
  %753 = vrot.lane.b32.xlu0 %v717, 64
  %v754 = vpop.permute.xlu0 %753
  %v755 = vsel %vm48, %v754, 0
  %757 = vmatpush.msra.mxu0 0.0
  %758 = vmatpush.msra.mxu0 0.0
  %759 = vmatpush.msra.mxu0 0.0
  %760 = vmatpush.msra.mxu0 0.0
  %761 = vmatpush.msra.mxu0 0.0
  %762 = vmatpush.msra.mxu0 0.0
  %763 = vmatpush.msra.mxu0 0.0
  %764 = vmatpush.msra.mxu0 0.0
  %765 = vmatpush.msra.mxu0 0.0
  %766 = vmatpush.msra.mxu0 0.0
  %767 = vmatpush.msra.mxu0 0.0
  %768 = vmatpush.msra.mxu0 0.0
  %769 = vmatpush.msra.mxu0 %v40
  %770 = vmatpush.msra.mxu0 %v39
  %771 = vmatpush.msra.mxu0 %v38
  %772 = vmatpush.msra.mxu0 %v37
  %773 = vmatmul.f32.gmra.mxu0 %v755
  %v774 = vpop.f32.mrf.mxu0
  %v775 = vadd.f32 0.0, %v774
  %776 = vdwg.mxu0
  %v777 = vadd.f32 %v752, %v775
  %v778 = vxor.u32 %v751, 2147483648
  %v779 = vmul.f32 %v778, 1.442695
  %v780 = vpow.pop %v779
  %v781 = vadd.f32 %v780, 1.0
  %v782 = vrcp.pop %v781
  %v783 = vmul.f32 %v781, %v782
  %v784 = vsub.f32 1.0, %v783
  %v785 = vmul.f32 %v782, %v784
  %v786 = vadd.f32 %v782, %v785
  %vm787 = vweird.f32 %v781
  %vm788 = vweird.f32 %v782
  %vm789 = vmor %vm787, %vm788
  %v790 = vsel %vm789, %v782, %v786
  %v791 = vand.u32 2147483647, %v781
  %vm792 = vcmp.eq.f32.partialorder %v791, 8.507059e+37
  %v793 = vand.u32 %v781, 2147483648
  %v794 = vor.u32 1.1754944e-38, %v793
  %v795 = vsel %vm792, %v794, %v790
  %v796 = vmul.f32 1.0, %v795
  %v797 = vtanh.pop %v751
  %v798 = vmul.f32 %v796, %v674
  %800 = vrot.lane.b32.xlu0 %v797, 32
  %v801 = vpop.permute.xlu0 %800
  %v803 = vmul.f32 %v796, %v801
  %805 = vrot.lane.b32.xlu0 %v803, 32
  %v806 = vpop.permute.xlu0 %805
  %v808 = vadd.f32 %v798, %v806
  %v809 = vtanh.pop %v808
  %811 = vrot.lane.b32.xlu0 %v809, 32
  %v812 = vpop.permute.xlu0 %811
  %v814 = vmul.f32 %v796, %v812
  %v815 = vxor.u32 %v777, 2147483648
  %v816 = vmul.f32 %v815, 1.442695
  %v817 = vpow.pop %v816
  %v818 = vadd.f32 %v817, 1.0
  %v819 = vrcp.pop %v818
  %v820 = vmul.f32 %v818, %v819
  %v821 = vsub.f32 1.0, %v820
  %v822 = vmul.f32 %v819, %v821
  %v823 = vadd.f32 %v819, %v822
  %vm824 = vweird.f32 %v818
  %vm825 = vweird.f32 %v819
  %vm826 = vmor %vm824, %vm825
  %v827 = vsel %vm826, %v819, %v823
  %v828 = vand.u32 2147483647, %v818
  %vm829 = vcmp.eq.f32.partialorder %v828, 8.507059e+37
  %v830 = vand.u32 %v818, 2147483648
  %v831 = vor.u32 1.1754944e-38, %v830
  %v832 = vsel %vm829, %v831, %v827
  %v833 = vmul.f32 1.0, %v832
  %v834 = vtanh.pop %v777
  %v835 = vmul.f32 %v833, %v711
  %837 = vrot.lane.b32.xlu0 %v834, 32
  %v838 = vpop.permute.xlu0 %837
  %v840 = vmul.f32 %v833, %v838
  %842 = vrot.lane.b32.xlu0 %v840, 32
  %v843 = vpop.permute.xlu0 %842
  %v845 = vadd.f32 %v835, %v843
  %v846 = vtanh.pop %v845
  %848 = vrot.lane.b32.xlu0 %v846, 32
  %v849 = vpop.permute.xlu0 %848
  %v851 = vmul.f32 %v833, %v849
  %853 = vrot.lane.b32.xlu0 %v814, 64
  %v854 = vpop.permute.xlu0 %853
  %856 = vst.msk [vmem:[#allocation2 + $0x28] sm:$0xff] %vm48, %v854
  %858 = vrot.lane.b32.xlu0 %v851, 96
  %v859 = vpop.permute.xlu0 %858
  %861 = vst.msk [vmem:[#allocation2 + $0x10] sm:$0xff] %vm190, %v859
  %v862 = vld [vmem:[%s0 + $0x30] sm:$0xff]
  %v863 = vsel %vm48, %v854, 0
  %865 = vmatpush.msra.mxu0 0.0
  %866 = vmatpush.msra.mxu0 0.0
  %867 = vmatpush.msra.mxu0 0.0
  %868 = vmatpush.msra.mxu0 0.0
  %869 = vmatpush.msra.mxu0 0.0
  %870 = vmatpush.msra.mxu0 0.0
  %871 = vmatpush.msra.mxu0 0.0
  %872 = vmatpush.msra.mxu0 0.0
  %873 = vmatpush.msra.mxu0 0.0
  %874 = vmatpush.msra.mxu0 0.0
  %875 = vmatpush.msra.mxu0 0.0
  %876 = vmatpush.msra.mxu0 0.0
  %877 = vmatpush.msra.mxu0 %v35
  %878 = vmatpush.msra.mxu0 %v34
  %879 = vmatpush.msra.mxu0 %v33
  %880 = vmatpush.msra.mxu0 %v32
  %881 = vmatmul.f32.gmra.mxu0 %v863
  %v882 = vpop.f32.mrf.mxu0
  %v883 = vadd.f32 0.0, %v882
  %884 = vdwg.mxu0
  %v885 = vadd.f32 %v862, %v883
  %v886 = vld [vmem:[%s73 + $0x8] sm:$0xff]
  %887 = vrot.lane.b32.xlu0 %v851, 64
  %v888 = vpop.permute.xlu0 %887
  %v889 = vsel %vm48, %v888, 0
  %891 = vmatpush.msra.mxu0 0.0
  %892 = vmatpush.msra.mxu0 0.0
  %893 = vmatpush.msra.mxu0 0.0
  %894 = vmatpush.msra.mxu0 0.0
  %895 = vmatpush.msra.mxu0 0.0
  %896 = vmatpush.msra.mxu0 0.0
  %897 = vmatpush.msra.mxu0 0.0
  %898 = vmatpush.msra.mxu0 0.0
  %899 = vmatpush.msra.mxu0 0.0
  %900 = vmatpush.msra.mxu0 0.0
  %901 = vmatpush.msra.mxu0 0.0
  %902 = vmatpush.msra.mxu0 0.0
  %903 = vmatpush.msra.mxu0 %v40
  %904 = vmatpush.msra.mxu0 %v39
  %905 = vmatpush.msra.mxu0 %v38
  %906 = vmatpush.msra.mxu0 %v37
  %907 = vmatmul.f32.gmra.mxu0 %v889
  %v908 = vpop.f32.mrf.mxu0
  %v909 = vadd.f32 0.0, %v908
  %910 = vdwg.mxu0
  %v911 = vadd.f32 %v886, %v909
  %v912 = vxor.u32 %v885, 2147483648
  %v913 = vmul.f32 %v912, 1.442695
  %v914 = vpow.pop %v913
  %v915 = vadd.f32 %v914, 1.0
  %v916 = vrcp.pop %v915
  %v917 = vmul.f32 %v915, %v916
  %v918 = vsub.f32 1.0, %v917
  %v919 = vmul.f32 %v916, %v918
  %v920 = vadd.f32 %v916, %v919
  %vm921 = vweird.f32 %v915
  %vm922 = vweird.f32 %v916
  %vm923 = vmor %vm921, %vm922
  %v924 = vsel %vm923, %v916, %v920
  %v925 = vand.u32 2147483647, %v915
  %vm926 = vcmp.eq.f32.partialorder %v925, 8.507059e+37
  %v927 = vand.u32 %v915, 2147483648
  %v928 = vor.u32 1.1754944e-38, %v927
  %v929 = vsel %vm926, %v928, %v924
  %v930 = vmul.f32 1.0, %v929
  %v931 = vtanh.pop %v885
  %v932 = vmul.f32 %v930, %v808
  %934 = vrot.lane.b32.xlu0 %v931, 32
  %v935 = vpop.permute.xlu0 %934
  %v937 = vmul.f32 %v930, %v935
  %939 = vrot.lane.b32.xlu0 %v937, 32
  %v940 = vpop.permute.xlu0 %939
  %v942 = vadd.f32 %v932, %v940
  %v943 = vtanh.pop %v942
  %945 = vrot.lane.b32.xlu0 %v943, 32
  %v946 = vpop.permute.xlu0 %945
  %v948 = vmul.f32 %v930, %v946
  %v949 = vxor.u32 %v911, 2147483648
  %v950 = vmul.f32 %v949, 1.442695
  %v951 = vpow.pop %v950
  %v952 = vadd.f32 %v951, 1.0
  %v953 = vrcp.pop %v952
  %v954 = vmul.f32 %v952, %v953
  %v955 = vsub.f32 1.0, %v954
  %v956 = vmul.f32 %v953, %v955
  %v957 = vadd.f32 %v953, %v956
  %vm958 = vweird.f32 %v952
  %vm959 = vweird.f32 %v953
  %vm960 = vmor %vm958, %vm959
  %v961 = vsel %vm960, %v953, %v957
  %v962 = vand.u32 2147483647, %v952
  %vm963 = vcmp.eq.f32.partialorder %v962, 8.507059e+37
  %v964 = vand.u32 %v952, 2147483648
  %v965 = vor.u32 1.1754944e-38, %v964
  %v966 = vsel %vm963, %v965, %v961
  %v967 = vmul.f32 1.0, %v966
  %v968 = vtanh.pop %v911
  %v969 = vmul.f32 %v967, %v845
  %971 = vrot.lane.b32.xlu0 %v968, 32
  %v972 = vpop.permute.xlu0 %971
  %v974 = vmul.f32 %v967, %v972
  %976 = vrot.lane.b32.xlu0 %v974, 32
  %v977 = vpop.permute.xlu0 %976
  %v979 = vadd.f32 %v969, %v977
  %v980 = vtanh.pop %v979
  %982 = vrot.lane.b32.xlu0 %v980, 32
  %v983 = vpop.permute.xlu0 %982
  %v985 = vmul.f32 %v967, %v983
  %987 = vrot.lane.b32.xlu0 %v948, 64
  %v988 = vpop.permute.xlu0 %987
  %990 = vst.msk [vmem:[#allocation2 + $0x30] sm:$0xff] %vm48, %v988
  %992 = vrot.lane.b32.xlu0 %v985, 96
  %v993 = vpop.permute.xlu0 %992
  %995 = vst.msk [vmem:[#allocation2 + $0x8] sm:$0xff] %vm190, %v993
  %v996 = vld [vmem:[%s0 + $0x38] sm:$0xff]
  %v997 = vsel %vm48, %v988, 0
  %999 = vmatpush.msra.mxu0 0.0
  %1000 = vmatpush.msra.mxu0 0.0
  %1001 = vmatpush.msra.mxu0 0.0
  %1002 = vmatpush.msra.mxu0 0.0
  %1003 = vmatpush.msra.mxu0 0.0
  %1004 = vmatpush.msra.mxu0 0.0
  %1005 = vmatpush.msra.mxu0 0.0
  %1006 = vmatpush.msra.mxu0 0.0
  %1007 = vmatpush.msra.mxu0 0.0
  %1008 = vmatpush.msra.mxu0 0.0
  %1009 = vmatpush.msra.mxu0 0.0
  %1010 = vmatpush.msra.mxu0 0.0
  %1011 = vmatpush.msra.mxu0 %v35
  %1012 = vmatpush.msra.mxu0 %v34
  %1013 = vmatpush.msra.mxu0 %v33
  %1014 = vmatpush.msra.mxu0 %v32
  %1015 = vmatmul.f32.gmra.mxu0 %v997
  %v1016 = vpop.f32.mrf.mxu0
  %v1017 = vadd.f32 0.0, %v1016
  %1018 = vdwg.mxu0
  %v1019 = vadd.f32 %v996, %v1017
  %v1020 = vld [vmem:[%s73] sm:$0xff]
  %1021 = vrot.lane.b32.xlu0 %v985, 64
  %v1022 = vpop.permute.xlu0 %1021
  %v1023 = vsel %vm48, %v1022, 0
  %1025 = vmatpush.msra.mxu0 0.0
  %1026 = vmatpush.msra.mxu0 0.0
  %1027 = vmatpush.msra.mxu0 0.0
  %1028 = vmatpush.msra.mxu0 0.0
  %1029 = vmatpush.msra.mxu0 0.0
  %1030 = vmatpush.msra.mxu0 0.0
  %1031 = vmatpush.msra.mxu0 0.0
  %1032 = vmatpush.msra.mxu0 0.0
  %1033 = vmatpush.msra.mxu0 0.0
  %1034 = vmatpush.msra.mxu0 0.0
  %1035 = vmatpush.msra.mxu0 0.0
  %1036 = vmatpush.msra.mxu0 0.0
  %1037 = vmatpush.msra.mxu0 %v40
  %1038 = vmatpush.msra.mxu0 %v39
  %1039 = vmatpush.msra.mxu0 %v38
  %1040 = vmatpush.msra.mxu0 %v37
  %1041 = vmatmul.f32.gmra.mxu0 %v1023
  %v1042 = vpop.f32.mrf.mxu0
  %v1043 = vadd.f32 0.0, %v1042
  %1044 = vdwg.mxu0
  %v1045 = vadd.f32 %v1020, %v1043
  %v1046 = vxor.u32 %v1019, 2147483648
  %v1047 = vmul.f32 %v1046, 1.442695
  %v1048 = vpow.pop %v1047
  %v1049 = vadd.f32 %v1048, 1.0
  %v1050 = vrcp.pop %v1049
  %v1051 = vmul.f32 %v1049, %v1050
  %v1052 = vsub.f32 1.0, %v1051
  %v1053 = vmul.f32 %v1050, %v1052
  %v1054 = vadd.f32 %v1050, %v1053
  %vm1055 = vweird.f32 %v1049
  %vm1056 = vweird.f32 %v1050
  %vm1057 = vmor %vm1055, %vm1056
  %v1058 = vsel %vm1057, %v1050, %v1054
  %v1059 = vand.u32 2147483647, %v1049
  %vm1060 = vcmp.eq.f32.partialorder %v1059, 8.507059e+37
  %v1061 = vand.u32 %v1049, 2147483648
  %v1062 = vor.u32 1.1754944e-38, %v1061
  %v1063 = vsel %vm1060, %v1062, %v1058
  %v1064 = vmul.f32 1.0, %v1063
  %v1065 = vtanh.pop %v1019
  %v1066 = vmul.f32 %v1064, %v942
  %1068 = vrot.lane.b32.xlu0 %v1065, 32
  %v1069 = vpop.permute.xlu0 %1068
  %v1071 = vmul.f32 %v1064, %v1069
  %1073 = vrot.lane.b32.xlu0 %v1071, 32
  %v1074 = vpop.permute.xlu0 %1073
  %v1076 = vadd.f32 %v1066, %v1074
  %v1077 = vtanh.pop %v1076
  %1079 = vrot.lane.b32.xlu0 %v1077, 32
  %v1080 = vpop.permute.xlu0 %1079
  %v1082 = vmul.f32 %v1064, %v1080
  %v1083 = vxor.u32 %v1045, 2147483648
  %v1084 = vmul.f32 %v1083, 1.442695
  %v1085 = vpow.pop %v1084
  %v1086 = vadd.f32 %v1085, 1.0
  %v1087 = vrcp.pop %v1086
  %v1088 = vmul.f32 %v1086, %v1087
  %v1089 = vsub.f32 1.0, %v1088
  %v1090 = vmul.f32 %v1087, %v1089
  %v1091 = vadd.f32 %v1087, %v1090
  %vm1092 = vweird.f32 %v1086
  %vm1093 = vweird.f32 %v1087
  %vm1094 = vmor %vm1092, %vm1093
  %v1095 = vsel %vm1094, %v1087, %v1091
  %v1096 = vand.u32 2147483647, %v1086
  %vm1097 = vcmp.eq.f32.partialorder %v1096, 8.507059e+37
  %v1098 = vand.u32 %v1086, 2147483648
  %v1099 = vor.u32 1.1754944e-38, %v1098
  %v1100 = vsel %vm1097, %v1099, %v1095
  %v1101 = vmul.f32 1.0, %v1100
  %v1102 = vtanh.pop %v1045
  %v1103 = vmul.f32 %v1101, %v979
  %1105 = vrot.lane.b32.xlu0 %v1102, 32
  %v1106 = vpop.permute.xlu0 %1105
  %v1108 = vmul.f32 %v1101, %v1106
  %1110 = vrot.lane.b32.xlu0 %v1108, 32
  %v1111 = vpop.permute.xlu0 %1110
  %v1113 = vadd.f32 %v1103, %v1111
  %v1114 = vtanh.pop %v1113
  %1116 = vrot.lane.b32.xlu0 %v1114, 32
  %v1117 = vpop.permute.xlu0 %1116
  %v1119 = vmul.f32 %v1101, %v1117
  %1121 = vrot.lane.b32.xlu0 %v1082, 64
  %v1122 = vpop.permute.xlu0 %1121
  %1124 = vst.msk [vmem:[#allocation2 + $0x38] sm:$0xff] %vm48, %v1122
  %1126 = vrot.lane.b32.xlu0 %v1119, 96
  %v1127 = vpop.permute.xlu0 %1126
  %1129 = vst.msk [vmem:[#allocation2] sm:$0xff] %vm190, %v1127
  %v1130 = vld [vmem:[#allocation2] sm:$0xff]
  %v1131 = vld [vmem:[#allocation2 + $0x8] sm:$0xff]
  %v1132 = vld [vmem:[#allocation2 + $0x10] sm:$0xff]
  %v1133 = vld [vmem:[#allocation2 + $0x18] sm:$0xff]
  %v1134 = vld [vmem:[#allocation2 + $0x20] sm:$0xff]
  %v1135 = vld [vmem:[#allocation2 + $0x28] sm:$0xff]
  %v1136 = vld [vmem:[#allocation2 + $0x30] sm:$0xff]
  %v1137 = vld [vmem:[#allocation2 + $0x38] sm:$0xff]
  %v1138 = vld [vmem:[%s2] sm:$0xff]
  %v1139 = vld [vmem:[%s2 + $0x8] sm:$0xff]
  %v1140 = vld [vmem:[%s2 + $0x10] sm:$0xff]
  %v1141 = vld [vmem:[%s2 + $0x18] sm:$0xff]
  %v1142 = vld [vmem:[%s2 + $0x20] sm:$0xff]
  %v1143 = vld [vmem:[%s2 + $0x28] sm:$0xff]
  %v1144 = vld [vmem:[%s2 + $0x30] sm:$0xff]
  %v1145 = vld [vmem:[%s2 + $0x38] sm:$0xff]
  %v1146 = vld [vmem:[%s4] sm:$0x1]
  %v1148 = vperm.slane %v1146, 0
  %vm1150 = vcmask 523264
  %v1152 = vsel %vm1150, %v1130, 0
  %v1155 = vsel %vm1150, %v1131, 0
  %v1158 = vsel %vm1150, %v1132, 0
  %v1161 = vsel %vm1150, %v1133, 0
  %v1164 = vsel %vm1150, %v1134, 0
  %v1167 = vsel %vm1150, %v1135, 0
  %v1170 = vsel %vm1150, %v1136, 0
  %v1173 = vsel %vm1150, %v1137, 0
  %1175 = vmatpush.msra.mxu0 0.0
  %1176 = vmatpush.msra.mxu0 0.0
  %1177 = vmatpush.msra.mxu0 0.0
  %1178 = vmatpush.msra.mxu0 0.0
  %1179 = vmatpush.msra.mxu0 0.0
  %1180 = vmatpush.msra.mxu0 0.0
  %1181 = vmatpush.msra.mxu0 0.0
  %1182 = vmatpush.msra.mxu0 0.0
  %1183 = vmatpush.msra.mxu0 %v1145
  %1184 = vmatpush.msra.mxu0 %v1144
  %1185 = vmatpush.msra.mxu0 %v1143
  %1186 = vmatpush.msra.mxu0 %v1142
  %1187 = vmatpush.msra.mxu0 %v1141
  %1188 = vmatpush.msra.mxu0 %v1140
  %1189 = vmatpush.msra.mxu0 %v1139
  %1190 = vmatpush.msra.mxu0 %v1138
  %1191 = vmatmul.f32.gmra.mxu0 %v1152
  %v1192 = vpop.f32.mrf.mxu0
  %v1193 = vadd.f32 %v1148, %v1192
  %1194 = vmatmul.f32.gmra.mxu0 %v1155
  %v1195 = vpop.f32.mrf.mxu0
  %v1196 = vadd.f32 %v1148, %v1195
  %1197 = vmatmul.f32.gmra.mxu0 %v1158
  %v1198 = vpop.f32.mrf.mxu0
  %v1199 = vadd.f32 %v1148, %v1198
  %1200 = vmatmul.f32.gmra.mxu0 %v1161
  %v1201 = vpop.f32.mrf.mxu0
  %v1202 = vadd.f32 %v1148, %v1201
  %1203 = vmatmul.f32.gmra.mxu0 %v1164
  %v1204 = vpop.f32.mrf.mxu0
  %v1205 = vadd.f32 %v1148, %v1204
  %1206 = vmatmul.f32.gmra.mxu0 %v1167
  %v1207 = vpop.f32.mrf.mxu0
  %v1208 = vadd.f32 %v1148, %v1207
  %1209 = vmatmul.f32.gmra.mxu0 %v1170
  %v1210 = vpop.f32.mrf.mxu0
  %v1211 = vadd.f32 %v1148, %v1210
  %1212 = vmatmul.f32.gmra.mxu0 %v1173
  %v1213 = vpop.f32.mrf.mxu0
  %v1214 = vadd.f32 %v1148, %v1213
  %1215 = vdwg.mxu0
  %1216 = vst [vmem:[#allocation3] sm:$0xff] %v1193
  %1217 = vst [vmem:[#allocation3 + $0x8] sm:$0xff] %v1196
  %1218 = vst [vmem:[#allocation3 + $0x10] sm:$0xff] %v1199
  %1219 = vst [vmem:[#allocation3 + $0x18] sm:$0xff] %v1202
  %1220 = vst [vmem:[#allocation3 + $0x20] sm:$0xff] %v1205
  %1221 = vst [vmem:[#allocation3 + $0x28] sm:$0xff] %v1208
  %1222 = vst [vmem:[#allocation3 + $0x30] sm:$0xff] %v1211
  %1223 = vst [vmem:[#allocation3 + $0x38] sm:$0xff] %v1214
  %s1224 = scalar_lea.vmem %s2, 64
  %v1225 = vld [vmem:[%s1224] sm:$0xff]
  %v1226 = vld [vmem:[%s1224 + $0x8] sm:$0xff]
  %v1227 = vld [vmem:[%s1224 + $0x10] sm:$0xff]
  %v1228 = vld [vmem:[%s1224 + $0x18] sm:$0xff]
  %v1229 = vld [vmem:[%s1224 + $0x20] sm:$0xff]
  %v1230 = vld [vmem:[%s1224 + $0x28] sm:$0xff]
  %v1231 = vld [vmem:[%s1224 + $0x30] sm:$0xff]
  %v1232 = vld [vmem:[%s1224 + $0x38] sm:$0xff]
  %s1233 = scalar_lea.vmem %s4, 1
  %v1234 = vld [vmem:[%s1233] sm:$0x1]
  %v1236 = vperm.slane %v1234, 0
  %1238 = vmatpush.msra.mxu0 0.0
  %1239 = vmatpush.msra.mxu0 0.0
  %1240 = vmatpush.msra.mxu0 0.0
  %1241 = vmatpush.msra.mxu0 0.0
  %1242 = vmatpush.msra.mxu0 0.0
  %1243 = vmatpush.msra.mxu0 0.0
  %1244 = vmatpush.msra.mxu0 0.0
  %1245 = vmatpush.msra.mxu0 0.0
  %1246 = vmatpush.msra.mxu0 %v1232
  %1247 = vmatpush.msra.mxu0 %v1231
  %1248 = vmatpush.msra.mxu0 %v1230
  %1249 = vmatpush.msra.mxu0 %v1229
  %1250 = vmatpush.msra.mxu0 %v1228
  %1251 = vmatpush.msra.mxu0 %v1227
  %1252 = vmatpush.msra.mxu0 %v1226
  %1253 = vmatpush.msra.mxu0 %v1225
  %1254 = vmatmul.f32.gmra.mxu0 %v1152
  %v1255 = vpop.f32.mrf.mxu0
  %v1256 = vadd.f32 %v1236, %v1255
  %1257 = vmatmul.f32.gmra.mxu0 %v1155
  %v1258 = vpop.f32.mrf.mxu0
  %v1259 = vadd.f32 %v1236, %v1258
  %1260 = vmatmul.f32.gmra.mxu0 %v1158
  %v1261 = vpop.f32.mrf.mxu0
  %v1262 = vadd.f32 %v1236, %v1261
  %1263 = vmatmul.f32.gmra.mxu0 %v1161
  %v1264 = vpop.f32.mrf.mxu0
  %v1265 = vadd.f32 %v1236, %v1264
  %1266 = vmatmul.f32.gmra.mxu0 %v1164
  %v1267 = vpop.f32.mrf.mxu0
  %v1268 = vadd.f32 %v1236, %v1267
  %1269 = vmatmul.f32.gmra.mxu0 %v1167
  %v1270 = vpop.f32.mrf.mxu0
  %v1271 = vadd.f32 %v1236, %v1270
  %1272 = vmatmul.f32.gmra.mxu0 %v1170
  %v1273 = vpop.f32.mrf.mxu0
  %v1274 = vadd.f32 %v1236, %v1273
  %1275 = vmatmul.f32.gmra.mxu0 %v1173
  %v1276 = vpop.f32.mrf.mxu0
  %v1277 = vadd.f32 %v1236, %v1276
  %1278 = vdwg.mxu0
  %s1279 = scalar_lea.vmem [#allocation3], 64
  %1280 = vst [vmem:[%s1279] sm:$0xff] %v1256
  %1281 = vst [vmem:[%s1279 + $0x8] sm:$0xff] %v1259
  %1282 = vst [vmem:[%s1279 + $0x10] sm:$0xff] %v1262
  %1283 = vst [vmem:[%s1279 + $0x18] sm:$0xff] %v1265
  %1284 = vst [vmem:[%s1279 + $0x20] sm:$0xff] %v1268
  %1285 = vst [vmem:[%s1279 + $0x28] sm:$0xff] %v1271
  %1286 = vst [vmem:[%s1279 + $0x30] sm:$0xff] %v1274
  %1287 = vst [vmem:[%s1279 + $0x38] sm:$0xff] %v1277
  %v1288 = vld [vmem:[%s3] sm:$0xff]
  %v1289 = vld [vmem:[%s3 + $0x8] sm:$0xff]
  %v1290 = vld [vmem:[%s3 + $0x10] sm:$0xff]
  %v1291 = vld [vmem:[%s3 + $0x18] sm:$0xff]
  %s1292 = scalar_lea.vmem %s3, 32
  %v1293 = vld [vmem:[%s1292] sm:$0xff]
  %v1294 = vld [vmem:[%s1292 + $0x8] sm:$0xff]
  %v1295 = vld [vmem:[%s1292 + $0x10] sm:$0xff]
  %v1296 = vld [vmem:[%s1292 + $0x18] sm:$0xff]
  %s1297 = scalar_lea.vmem %s5, 16
  %v1298 = vld [vmem:[%s1297] sm:$0xff]
  %s1299 = scalar_lea.vmem %s6, 16
  %v1300 = vld [vmem:[%s1299] sm:$0xff]
  %s1301 = scalar_lea.vmem %s5, 24
  %v1302 = vld [vmem:[%s1301] sm:$0xff]
  %s1303 = scalar_lea.vmem %s6, 24
  %v1304 = vld [vmem:[%s1303] sm:$0xff]
  %v1305 = vld [vmem:[#allocation3] sm:$0xff]
  %v1307 = vsel %vm48, %v1298, 0
  %1309 = vmatpush.msra.mxu0 0.0
  %1310 = vmatpush.msra.mxu0 0.0
  %1311 = vmatpush.msra.mxu0 0.0
  %1312 = vmatpush.msra.mxu0 0.0
  %1313 = vmatpush.msra.mxu0 0.0
  %1314 = vmatpush.msra.mxu0 0.0
  %1315 = vmatpush.msra.mxu0 0.0
  %1316 = vmatpush.msra.mxu0 0.0
  %1317 = vmatpush.msra.mxu0 0.0
  %1318 = vmatpush.msra.mxu0 0.0
  %1319 = vmatpush.msra.mxu0 0.0
  %1320 = vmatpush.msra.mxu0 0.0
  %1321 = vmatpush.msra.mxu0 %v1291
  %1322 = vmatpush.msra.mxu0 %v1290
  %1323 = vmatpush.msra.mxu0 %v1289
  %1324 = vmatpush.msra.mxu0 %v1288
  %1325 = vmatmul.f32.gmra.mxu0 %v1307
  %v1326 = vpop.f32.mrf.mxu0
  %v1327 = vadd.f32 0.0, %v1326
  %1328 = vdwg.mxu0
  %v1329 = vadd.f32 %v1305, %v1327
  %v1330 = vld [vmem:[%s1279 + $0x38] sm:$0xff]
  %v1332 = vsel %vm48, %v1302, 0
  %1334 = vmatpush.msra.mxu0 0.0
  %1335 = vmatpush.msra.mxu0 0.0
  %1336 = vmatpush.msra.mxu0 0.0
  %1337 = vmatpush.msra.mxu0 0.0
  %1338 = vmatpush.msra.mxu0 0.0
  %1339 = vmatpush.msra.mxu0 0.0
  %1340 = vmatpush.msra.mxu0 0.0
  %1341 = vmatpush.msra.mxu0 0.0
  %1342 = vmatpush.msra.mxu0 0.0
  %1343 = vmatpush.msra.mxu0 0.0
  %1344 = vmatpush.msra.mxu0 0.0
  %1345 = vmatpush.msra.mxu0 0.0
  %1346 = vmatpush.msra.mxu0 %v1296
  %1347 = vmatpush.msra.mxu0 %v1295
  %1348 = vmatpush.msra.mxu0 %v1294
  %1349 = vmatpush.msra.mxu0 %v1293
  %1350 = vmatmul.f32.gmra.mxu0 %v1332
  %v1351 = vpop.f32.mrf.mxu0
  %v1352 = vadd.f32 0.0, %v1351
  %1353 = vdwg.mxu0
  %v1354 = vadd.f32 %v1330, %v1352
  %v1355 = vxor.u32 %v1329, 2147483648
  %v1356 = vmul.f32 %v1355, 1.442695
  %v1357 = vpow.pop %v1356
  %v1358 = vadd.f32 %v1357, 1.0
  %v1359 = vrcp.pop %v1358
  %v1360 = vmul.f32 %v1358, %v1359
  %v1361 = vsub.f32 1.0, %v1360
  %v1362 = vmul.f32 %v1359, %v1361
  %v1363 = vadd.f32 %v1359, %v1362
  %vm1364 = vweird.f32 %v1358
  %vm1365 = vweird.f32 %v1359
  %vm1366 = vmor %vm1364, %vm1365
  %v1367 = vsel %vm1366, %v1359, %v1363
  %v1368 = vand.u32 2147483647, %v1358
  %vm1369 = vcmp.eq.f32.partialorder %v1368, 8.507059e+37
  %v1370 = vand.u32 %v1358, 2147483648
  %v1371 = vor.u32 1.1754944e-38, %v1370
  %v1372 = vsel %vm1369, %v1371, %v1367
  %v1373 = vmul.f32 1.0, %v1372
  %v1374 = vtanh.pop %v1329
  %1376 = vrot.lane.b32.xlu0 %v1300, 32
  %v1377 = vpop.permute.xlu0 %1376
  %v1379 = vmul.f32 %v1373, %v1377
  %1381 = vrot.lane.b32.xlu0 %v1374, 32
  %v1382 = vpop.permute.xlu0 %1381
  %v1384 = vmul.f32 %v1373, %v1382
  %1386 = vrot.lane.b32.xlu0 %v1384, 32
  %v1387 = vpop.permute.xlu0 %1386
  %v1389 = vadd.f32 %v1379, %v1387
  %v1390 = vtanh.pop %v1389
  %1392 = vrot.lane.b32.xlu0 %v1390, 32
  %v1393 = vpop.permute.xlu0 %1392
  %v1395 = vmul.f32 %v1373, %v1393
  %v1396 = vxor.u32 %v1354, 2147483648
  %v1397 = vmul.f32 %v1396, 1.442695
  %v1398 = vpow.pop %v1397
  %v1399 = vadd.f32 %v1398, 1.0
  %v1400 = vrcp.pop %v1399
  %v1401 = vmul.f32 %v1399, %v1400
  %v1402 = vsub.f32 1.0, %v1401
  %v1403 = vmul.f32 %v1400, %v1402
  %v1404 = vadd.f32 %v1400, %v1403
  %vm1405 = vweird.f32 %v1399
  %vm1406 = vweird.f32 %v1400
  %vm1407 = vmor %vm1405, %vm1406
  %v1408 = vsel %vm1407, %v1400, %v1404
  %v1409 = vand.u32 2147483647, %v1399
  %vm1410 = vcmp.eq.f32.partialorder %v1409, 8.507059e+37
  %v1411 = vand.u32 %v1399, 2147483648
  %v1412 = vor.u32 1.1754944e-38, %v1411
  %v1413 = vsel %vm1410, %v1412, %v1408
  %v1414 = vmul.f32 1.0, %v1413
  %v1415 = vtanh.pop %v1354
  %1417 = vrot.lane.b32.xlu0 %v1304, 32
  %v1418 = vpop.permute.xlu0 %1417
  %v1420 = vmul.f32 %v1414, %v1418
  %1422 = vrot.lane.b32.xlu0 %v1415, 32
  %v1423 = vpop.permute.xlu0 %1422
  %v1425 = vmul.f32 %v1414, %v1423
  %1427 = vrot.lane.b32.xlu0 %v1425, 32
  %v1428 = vpop.permute.xlu0 %1427
  %v1430 = vadd.f32 %v1420, %v1428
  %v1431 = vtanh.pop %v1430
  %1433 = vrot.lane.b32.xlu0 %v1431, 32
  %v1434 = vpop.permute.xlu0 %1433
  %v1436 = vmul.f32 %v1414, %v1434
  %1438 = vrot.lane.b32.xlu0 %v1395, 64
  %v1439 = vpop.permute.xlu0 %1438
  %1441 = vst.msk [vmem:[#allocation4] sm:$0xff] %vm48, %v1439
  %1443 = vrot.lane.b32.xlu0 %v1436, 96
  %v1444 = vpop.permute.xlu0 %1443
  %1446 = vst.msk [vmem:[#allocation4 + $0x38] sm:$0xff] %vm190, %v1444
  %v1447 = vld [vmem:[#allocation3 + $0x8] sm:$0xff]
  %v1448 = vsel %vm48, %v1439, 0
  %1450 = vmatpush.msra.mxu0 0.0
  %1451 = vmatpush.msra.mxu0 0.0
  %1452 = vmatpush.msra.mxu0 0.0
  %1453 = vmatpush.msra.mxu0 0.0
  %1454 = vmatpush.msra.mxu0 0.0
  %1455 = vmatpush.msra.mxu0 0.0
  %1456 = vmatpush.msra.mxu0 0.0
  %1457 = vmatpush.msra.mxu0 0.0
  %1458 = vmatpush.msra.mxu0 0.0
  %1459 = vmatpush.msra.mxu0 0.0
  %1460 = vmatpush.msra.mxu0 0.0
  %1461 = vmatpush.msra.mxu0 0.0
  %1462 = vmatpush.msra.mxu0 %v1291
  %1463 = vmatpush.msra.mxu0 %v1290
  %1464 = vmatpush.msra.mxu0 %v1289
  %1465 = vmatpush.msra.mxu0 %v1288
  %1466 = vmatmul.f32.gmra.mxu0 %v1448
  %v1467 = vpop.f32.mrf.mxu0
  %v1468 = vadd.f32 0.0, %v1467
  %1469 = vdwg.mxu0
  %v1470 = vadd.f32 %v1447, %v1468
  %v1471 = vld [vmem:[%s1279 + $0x30] sm:$0xff]
  %1472 = vrot.lane.b32.xlu0 %v1436, 64
  %v1473 = vpop.permute.xlu0 %1472
  %v1474 = vsel %vm48, %v1473, 0
  %1476 = vmatpush.msra.mxu0 0.0
  %1477 = vmatpush.msra.mxu0 0.0
  %1478 = vmatpush.msra.mxu0 0.0
  %1479 = vmatpush.msra.mxu0 0.0
  %1480 = vmatpush.msra.mxu0 0.0
  %1481 = vmatpush.msra.mxu0 0.0
  %1482 = vmatpush.msra.mxu0 0.0
  %1483 = vmatpush.msra.mxu0 0.0
  %1484 = vmatpush.msra.mxu0 0.0
  %1485 = vmatpush.msra.mxu0 0.0
  %1486 = vmatpush.msra.mxu0 0.0
  %1487 = vmatpush.msra.mxu0 0.0
  %1488 = vmatpush.msra.mxu0 %v1296
  %1489 = vmatpush.msra.mxu0 %v1295
  %1490 = vmatpush.msra.mxu0 %v1294
  %1491 = vmatpush.msra.mxu0 %v1293
  %1492 = vmatmul.f32.gmra.mxu0 %v1474
  %v1493 = vpop.f32.mrf.mxu0
  %v1494 = vadd.f32 0.0, %v1493
  %1495 = vdwg.mxu0
  %v1496 = vadd.f32 %v1471, %v1494
  %v1497 = vxor.u32 %v1470, 2147483648
  %v1498 = vmul.f32 %v1497, 1.442695
  %v1499 = vpow.pop %v1498
  %v1500 = vadd.f32 %v1499, 1.0
  %v1501 = vrcp.pop %v1500
  %v1502 = vmul.f32 %v1500, %v1501
  %v1503 = vsub.f32 1.0, %v1502
  %v1504 = vmul.f32 %v1501, %v1503
  %v1505 = vadd.f32 %v1501, %v1504
  %vm1506 = vweird.f32 %v1500
  %vm1507 = vweird.f32 %v1501
  %vm1508 = vmor %vm1506, %vm1507
  %v1509 = vsel %vm1508, %v1501, %v1505
  %v1510 = vand.u32 2147483647, %v1500
  %vm1511 = vcmp.eq.f32.partialorder %v1510, 8.507059e+37
  %v1512 = vand.u32 %v1500, 2147483648
  %v1513 = vor.u32 1.1754944e-38, %v1512
  %v1514 = vsel %vm1511, %v1513, %v1509
  %v1515 = vmul.f32 1.0, %v1514
  %v1516 = vtanh.pop %v1470
  %v1517 = vmul.f32 %v1515, %v1389
  %1519 = vrot.lane.b32.xlu0 %v1516, 32
  %v1520 = vpop.permute.xlu0 %1519
  %v1522 = vmul.f32 %v1515, %v1520
  %1524 = vrot.lane.b32.xlu0 %v1522, 32
  %v1525 = vpop.permute.xlu0 %1524
  %v1527 = vadd.f32 %v1517, %v1525
  %v1528 = vtanh.pop %v1527
  %1530 = vrot.lane.b32.xlu0 %v1528, 32
  %v1531 = vpop.permute.xlu0 %1530
  %v1533 = vmul.f32 %v1515, %v1531
  %v1534 = vxor.u32 %v1496, 2147483648
  %v1535 = vmul.f32 %v1534, 1.442695
  %v1536 = vpow.pop %v1535
  %v1537 = vadd.f32 %v1536, 1.0
  %v1538 = vrcp.pop %v1537
  %v1539 = vmul.f32 %v1537, %v1538
  %v1540 = vsub.f32 1.0, %v1539
  %v1541 = vmul.f32 %v1538, %v1540
  %v1542 = vadd.f32 %v1538, %v1541
  %vm1543 = vweird.f32 %v1537
  %vm1544 = vweird.f32 %v1538
  %vm1545 = vmor %vm1543, %vm1544
  %v1546 = vsel %vm1545, %v1538, %v1542
  %v1547 = vand.u32 2147483647, %v1537
  %vm1548 = vcmp.eq.f32.partialorder %v1547, 8.507059e+37
  %v1549 = vand.u32 %v1537, 2147483648
  %v1550 = vor.u32 1.1754944e-38, %v1549
  %v1551 = vsel %vm1548, %v1550, %v1546
  %v1552 = vmul.f32 1.0, %v1551
  %v1553 = vtanh.pop %v1496
  %v1554 = vmul.f32 %v1552, %v1430
  %1556 = vrot.lane.b32.xlu0 %v1553, 32
  %v1557 = vpop.permute.xlu0 %1556
  %v1559 = vmul.f32 %v1552, %v1557
  %1561 = vrot.lane.b32.xlu0 %v1559, 32
  %v1562 = vpop.permute.xlu0 %1561
  %v1564 = vadd.f32 %v1554, %v1562
  %v1565 = vtanh.pop %v1564
  %1567 = vrot.lane.b32.xlu0 %v1565, 32
  %v1568 = vpop.permute.xlu0 %1567
  %v1570 = vmul.f32 %v1552, %v1568
  %1572 = vrot.lane.b32.xlu0 %v1533, 64
  %v1573 = vpop.permute.xlu0 %1572
  %1575 = vst.msk [vmem:[#allocation4 + $0x8] sm:$0xff] %vm48, %v1573
  %1577 = vrot.lane.b32.xlu0 %v1570, 96
  %v1578 = vpop.permute.xlu0 %1577
  %1580 = vst.msk [vmem:[#allocation4 + $0x30] sm:$0xff] %vm190, %v1578
  %v1581 = vld [vmem:[#allocation3 + $0x10] sm:$0xff]
  %v1582 = vsel %vm48, %v1573, 0
  %1584 = vmatpush.msra.mxu0 0.0
  %1585 = vmatpush.msra.mxu0 0.0
  %1586 = vmatpush.msra.mxu0 0.0
  %1587 = vmatpush.msra.mxu0 0.0
  %1588 = vmatpush.msra.mxu0 0.0
  %1589 = vmatpush.msra.mxu0 0.0
  %1590 = vmatpush.msra.mxu0 0.0
  %1591 = vmatpush.msra.mxu0 0.0
  %1592 = vmatpush.msra.mxu0 0.0
  %1593 = vmatpush.msra.mxu0 0.0
  %1594 = vmatpush.msra.mxu0 0.0
  %1595 = vmatpush.msra.mxu0 0.0
  %1596 = vmatpush.msra.mxu0 %v1291
  %1597 = vmatpush.msra.mxu0 %v1290
  %1598 = vmatpush.msra.mxu0 %v1289
  %1599 = vmatpush.msra.mxu0 %v1288
  %1600 = vmatmul.f32.gmra.mxu0 %v1582
  %v1601 = vpop.f32.mrf.mxu0
  %v1602 = vadd.f32 0.0, %v1601
  %1603 = vdwg.mxu0
  %v1604 = vadd.f32 %v1581, %v1602
  %v1605 = vld [vmem:[%s1279 + $0x28] sm:$0xff]
  %1606 = vrot.lane.b32.xlu0 %v1570, 64
  %v1607 = vpop.permute.xlu0 %1606
  %v1608 = vsel %vm48, %v1607, 0
  %1610 = vmatpush.msra.mxu0 0.0
  %1611 = vmatpush.msra.mxu0 0.0
  %1612 = vmatpush.msra.mxu0 0.0
  %1613 = vmatpush.msra.mxu0 0.0
  %1614 = vmatpush.msra.mxu0 0.0
  %1615 = vmatpush.msra.mxu0 0.0
  %1616 = vmatpush.msra.mxu0 0.0
  %1617 = vmatpush.msra.mxu0 0.0
  %1618 = vmatpush.msra.mxu0 0.0
  %1619 = vmatpush.msra.mxu0 0.0
  %1620 = vmatpush.msra.mxu0 0.0
  %1621 = vmatpush.msra.mxu0 0.0
  %1622 = vmatpush.msra.mxu0 %v1296
  %1623 = vmatpush.msra.mxu0 %v1295
  %1624 = vmatpush.msra.mxu0 %v1294
  %1625 = vmatpush.msra.mxu0 %v1293
  %1626 = vmatmul.f32.gmra.mxu0 %v1608
  %v1627 = vpop.f32.mrf.mxu0
  %v1628 = vadd.f32 0.0, %v1627
  %1629 = vdwg.mxu0
  %v1630 = vadd.f32 %v1605, %v1628
  %v1631 = vxor.u32 %v1604, 2147483648
  %v1632 = vmul.f32 %v1631, 1.442695
  %v1633 = vpow.pop %v1632
  %v1634 = vadd.f32 %v1633, 1.0
  %v1635 = vrcp.pop %v1634
  %v1636 = vmul.f32 %v1634, %v1635
  %v1637 = vsub.f32 1.0, %v1636
  %v1638 = vmul.f32 %v1635, %v1637
  %v1639 = vadd.f32 %v1635, %v1638
  %vm1640 = vweird.f32 %v1634
  %vm1641 = vweird.f32 %v1635
  %vm1642 = vmor %vm1640, %vm1641
  %v1643 = vsel %vm1642, %v1635, %v1639
  %v1644 = vand.u32 2147483647, %v1634
  %vm1645 = vcmp.eq.f32.partialorder %v1644, 8.507059e+37
  %v1646 = vand.u32 %v1634, 2147483648
  %v1647 = vor.u32 1.1754944e-38, %v1646
  %v1648 = vsel %vm1645, %v1647, %v1643
  %v1649 = vmul.f32 1.0, %v1648
  %v1650 = vtanh.pop %v1604
  %v1651 = vmul.f32 %v1649, %v1527
  %1653 = vrot.lane.b32.xlu0 %v1650, 32
  %v1654 = vpop.permute.xlu0 %1653
  %v1656 = vmul.f32 %v1649, %v1654
  %1658 = vrot.lane.b32.xlu0 %v1656, 32
  %v1659 = vpop.permute.xlu0 %1658
  %v1661 = vadd.f32 %v1651, %v1659
  %v1662 = vtanh.pop %v1661
  %1664 = vrot.lane.b32.xlu0 %v1662, 32
  %v1665 = vpop.permute.xlu0 %1664
  %v1667 = vmul.f32 %v1649, %v1665
  %v1668 = vxor.u32 %v1630, 2147483648
  %v1669 = vmul.f32 %v1668, 1.442695
  %v1670 = vpow.pop %v1669
  %v1671 = vadd.f32 %v1670, 1.0
  %v1672 = vrcp.pop %v1671
  %v1673 = vmul.f32 %v1671, %v1672
  %v1674 = vsub.f32 1.0, %v1673
  %v1675 = vmul.f32 %v1672, %v1674
  %v1676 = vadd.f32 %v1672, %v1675
  %vm1677 = vweird.f32 %v1671
  %vm1678 = vweird.f32 %v1672
  %vm1679 = vmor %vm1677, %vm1678
  %v1680 = vsel %vm1679, %v1672, %v1676
  %v1681 = vand.u32 2147483647, %v1671
  %vm1682 = vcmp.eq.f32.partialorder %v1681, 8.507059e+37
  %v1683 = vand.u32 %v1671, 2147483648
  %v1684 = vor.u32 1.1754944e-38, %v1683
  %v1685 = vsel %vm1682, %v1684, %v1680
  %v1686 = vmul.f32 1.0, %v1685
  %v1687 = vtanh.pop %v1630
  %v1688 = vmul.f32 %v1686, %v1564
  %1690 = vrot.lane.b32.xlu0 %v1687, 32
  %v1691 = vpop.permute.xlu0 %1690
  %v1693 = vmul.f32 %v1686, %v1691
  %1695 = vrot.lane.b32.xlu0 %v1693, 32
  %v1696 = vpop.permute.xlu0 %1695
  %v1698 = vadd.f32 %v1688, %v1696
  %v1699 = vtanh.pop %v1698
  %1701 = vrot.lane.b32.xlu0 %v1699, 32
  %v1702 = vpop.permute.xlu0 %1701
  %v1704 = vmul.f32 %v1686, %v1702
  %1706 = vrot.lane.b32.xlu0 %v1667, 64
  %v1707 = vpop.permute.xlu0 %1706
  %1709 = vst.msk [vmem:[#allocation4 + $0x10] sm:$0xff] %vm48, %v1707
  %1711 = vrot.lane.b32.xlu0 %v1704, 96
  %v1712 = vpop.permute.xlu0 %1711
  %1714 = vst.msk [vmem:[#allocation4 + $0x28] sm:$0xff] %vm190, %v1712
  %v1715 = vld [vmem:[#allocation3 + $0x18] sm:$0xff]
  %v1716 = vsel %vm48, %v1707, 0
  %1718 = vmatpush.msra.mxu0 0.0
  %1719 = vmatpush.msra.mxu0 0.0
  %1720 = vmatpush.msra.mxu0 0.0
  %1721 = vmatpush.msra.mxu0 0.0
  %1722 = vmatpush.msra.mxu0 0.0
  %1723 = vmatpush.msra.mxu0 0.0
  %1724 = vmatpush.msra.mxu0 0.0
  %1725 = vmatpush.msra.mxu0 0.0
  %1726 = vmatpush.msra.mxu0 0.0
  %1727 = vmatpush.msra.mxu0 0.0
  %1728 = vmatpush.msra.mxu0 0.0
  %1729 = vmatpush.msra.mxu0 0.0
  %1730 = vmatpush.msra.mxu0 %v1291
  %1731 = vmatpush.msra.mxu0 %v1290
  %1732 = vmatpush.msra.mxu0 %v1289
  %1733 = vmatpush.msra.mxu0 %v1288
  %1734 = vmatmul.f32.gmra.mxu0 %v1716
  %v1735 = vpop.f32.mrf.mxu0
  %v1736 = vadd.f32 0.0, %v1735
  %1737 = vdwg.mxu0
  %v1738 = vadd.f32 %v1715, %v1736
  %v1739 = vld [vmem:[%s1279 + $0x20] sm:$0xff]
  %1740 = vrot.lane.b32.xlu0 %v1704, 64
  %v1741 = vpop.permute.xlu0 %1740
  %v1742 = vsel %vm48, %v1741, 0
  %1744 = vmatpush.msra.mxu0 0.0
  %1745 = vmatpush.msra.mxu0 0.0
  %1746 = vmatpush.msra.mxu0 0.0
  %1747 = vmatpush.msra.mxu0 0.0
  %1748 = vmatpush.msra.mxu0 0.0
  %1749 = vmatpush.msra.mxu0 0.0
  %1750 = vmatpush.msra.mxu0 0.0
  %1751 = vmatpush.msra.mxu0 0.0
  %1752 = vmatpush.msra.mxu0 0.0
  %1753 = vmatpush.msra.mxu0 0.0
  %1754 = vmatpush.msra.mxu0 0.0
  %1755 = vmatpush.msra.mxu0 0.0
  %1756 = vmatpush.msra.mxu0 %v1296
  %1757 = vmatpush.msra.mxu0 %v1295
  %1758 = vmatpush.msra.mxu0 %v1294
  %1759 = vmatpush.msra.mxu0 %v1293
  %1760 = vmatmul.f32.gmra.mxu0 %v1742
  %v1761 = vpop.f32.mrf.mxu0
  %v1762 = vadd.f32 0.0, %v1761
  %1763 = vdwg.mxu0
  %v1764 = vadd.f32 %v1739, %v1762
  %v1765 = vxor.u32 %v1738, 2147483648
  %v1766 = vmul.f32 %v1765, 1.442695
  %v1767 = vpow.pop %v1766
  %v1768 = vadd.f32 %v1767, 1.0
  %v1769 = vrcp.pop %v1768
  %v1770 = vmul.f32 %v1768, %v1769
  %v1771 = vsub.f32 1.0, %v1770
  %v1772 = vmul.f32 %v1769, %v1771
  %v1773 = vadd.f32 %v1769, %v1772
  %vm1774 = vweird.f32 %v1768
  %vm1775 = vweird.f32 %v1769
  %vm1776 = vmor %vm1774, %vm1775
  %v1777 = vsel %vm1776, %v1769, %v1773
  %v1778 = vand.u32 2147483647, %v1768
  %vm1779 = vcmp.eq.f32.partialorder %v1778, 8.507059e+37
  %v1780 = vand.u32 %v1768, 2147483648
  %v1781 = vor.u32 1.1754944e-38, %v1780
  %v1782 = vsel %vm1779, %v1781, %v1777
  %v1783 = vmul.f32 1.0, %v1782
  %v1784 = vtanh.pop %v1738
  %v1785 = vmul.f32 %v1783, %v1661
  %1787 = vrot.lane.b32.xlu0 %v1784, 32
  %v1788 = vpop.permute.xlu0 %1787
  %v1790 = vmul.f32 %v1783, %v1788
  %1792 = vrot.lane.b32.xlu0 %v1790, 32
  %v1793 = vpop.permute.xlu0 %1792
  %v1795 = vadd.f32 %v1785, %v1793
  %v1796 = vtanh.pop %v1795
  %1798 = vrot.lane.b32.xlu0 %v1796, 32
  %v1799 = vpop.permute.xlu0 %1798
  %v1801 = vmul.f32 %v1783, %v1799
  %v1802 = vxor.u32 %v1764, 2147483648
  %v1803 = vmul.f32 %v1802, 1.442695
  %v1804 = vpow.pop %v1803
  %v1805 = vadd.f32 %v1804, 1.0
  %v1806 = vrcp.pop %v1805
  %v1807 = vmul.f32 %v1805, %v1806
  %v1808 = vsub.f32 1.0, %v1807
  %v1809 = vmul.f32 %v1806, %v1808
  %v1810 = vadd.f32 %v1806, %v1809
  %vm1811 = vweird.f32 %v1805
  %vm1812 = vweird.f32 %v1806
  %vm1813 = vmor %vm1811, %vm1812
  %v1814 = vsel %vm1813, %v1806, %v1810
  %v1815 = vand.u32 2147483647, %v1805
  %vm1816 = vcmp.eq.f32.partialorder %v1815, 8.507059e+37
  %v1817 = vand.u32 %v1805, 2147483648
  %v1818 = vor.u32 1.1754944e-38, %v1817
  %v1819 = vsel %vm1816, %v1818, %v1814
  %v1820 = vmul.f32 1.0, %v1819
  %v1821 = vtanh.pop %v1764
  %v1822 = vmul.f32 %v1820, %v1698
  %1824 = vrot.lane.b32.xlu0 %v1821, 32
  %v1825 = vpop.permute.xlu0 %1824
  %v1827 = vmul.f32 %v1820, %v1825
  %1829 = vrot.lane.b32.xlu0 %v1827, 32
  %v1830 = vpop.permute.xlu0 %1829
  %v1832 = vadd.f32 %v1822, %v1830
  %v1833 = vtanh.pop %v1832
  %1835 = vrot.lane.b32.xlu0 %v1833, 32
  %v1836 = vpop.permute.xlu0 %1835
  %v1838 = vmul.f32 %v1820, %v1836
  %1840 = vrot.lane.b32.xlu0 %v1801, 64
  %v1841 = vpop.permute.xlu0 %1840
  %1843 = vst.msk [vmem:[#allocation4 + $0x18] sm:$0xff] %vm48, %v1841
  %1845 = vrot.lane.b32.xlu0 %v1838, 96
  %v1846 = vpop.permute.xlu0 %1845
  %1848 = vst.msk [vmem:[#allocation4 + $0x20] sm:$0xff] %vm190, %v1846
  %v1849 = vld [vmem:[#allocation3 + $0x20] sm:$0xff]
  %v1850 = vsel %vm48, %v1841, 0
  %1852 = vmatpush.msra.mxu0 0.0
  %1853 = vmatpush.msra.mxu0 0.0
  %1854 = vmatpush.msra.mxu0 0.0
  %1855 = vmatpush.msra.mxu0 0.0
  %1856 = vmatpush.msra.mxu0 0.0
  %1857 = vmatpush.msra.mxu0 0.0
  %1858 = vmatpush.msra.mxu0 0.0
  %1859 = vmatpush.msra.mxu0 0.0
  %1860 = vmatpush.msra.mxu0 0.0
  %1861 = vmatpush.msra.mxu0 0.0
  %1862 = vmatpush.msra.mxu0 0.0
  %1863 = vmatpush.msra.mxu0 0.0
  %1864 = vmatpush.msra.mxu0 %v1291
  %1865 = vmatpush.msra.mxu0 %v1290
  %1866 = vmatpush.msra.mxu0 %v1289
  %1867 = vmatpush.msra.mxu0 %v1288
  %1868 = vmatmul.f32.gmra.mxu0 %v1850
  %v1869 = vpop.f32.mrf.mxu0
  %v1870 = vadd.f32 0.0, %v1869
  %1871 = vdwg.mxu0
  %v1872 = vadd.f32 %v1849, %v1870
  %v1873 = vld [vmem:[%s1279 + $0x18] sm:$0xff]
  %1874 = vrot.lane.b32.xlu0 %v1838, 64
  %v1875 = vpop.permute.xlu0 %1874
  %v1876 = vsel %vm48, %v1875, 0
  %1878 = vmatpush.msra.mxu0 0.0
  %1879 = vmatpush.msra.mxu0 0.0
  %1880 = vmatpush.msra.mxu0 0.0
  %1881 = vmatpush.msra.mxu0 0.0
  %1882 = vmatpush.msra.mxu0 0.0
  %1883 = vmatpush.msra.mxu0 0.0
  %1884 = vmatpush.msra.mxu0 0.0
  %1885 = vmatpush.msra.mxu0 0.0
  %1886 = vmatpush.msra.mxu0 0.0
  %1887 = vmatpush.msra.mxu0 0.0
  %1888 = vmatpush.msra.mxu0 0.0
  %1889 = vmatpush.msra.mxu0 0.0
  %1890 = vmatpush.msra.mxu0 %v1296
  %1891 = vmatpush.msra.mxu0 %v1295
  %1892 = vmatpush.msra.mxu0 %v1294
  %1893 = vmatpush.msra.mxu0 %v1293
  %1894 = vmatmul.f32.gmra.mxu0 %v1876
  %v1895 = vpop.f32.mrf.mxu0
  %v1896 = vadd.f32 0.0, %v1895
  %1897 = vdwg.mxu0
  %v1898 = vadd.f32 %v1873, %v1896
  %v1899 = vxor.u32 %v1872, 2147483648
  %v1900 = vmul.f32 %v1899, 1.442695
  %v1901 = vpow.pop %v1900
  %v1902 = vadd.f32 %v1901, 1.0
  %v1903 = vrcp.pop %v1902
  %v1904 = vmul.f32 %v1902, %v1903
  %v1905 = vsub.f32 1.0, %v1904
  %v1906 = vmul.f32 %v1903, %v1905
  %v1907 = vadd.f32 %v1903, %v1906
  %vm1908 = vweird.f32 %v1902
  %vm1909 = vweird.f32 %v1903
  %vm1910 = vmor %vm1908, %vm1909
  %v1911 = vsel %vm1910, %v1903, %v1907
  %v1912 = vand.u32 2147483647, %v1902
  %vm1913 = vcmp.eq.f32.partialorder %v1912, 8.507059e+37
  %v1914 = vand.u32 %v1902, 2147483648
  %v1915 = vor.u32 1.1754944e-38, %v1914
  %v1916 = vsel %vm1913, %v1915, %v1911
  %v1917 = vmul.f32 1.0, %v1916
  %v1918 = vtanh.pop %v1872
  %v1919 = vmul.f32 %v1917, %v1795
  %1921 = vrot.lane.b32.xlu0 %v1918, 32
  %v1922 = vpop.permute.xlu0 %1921
  %v1924 = vmul.f32 %v1917, %v1922
  %1926 = vrot.lane.b32.xlu0 %v1924, 32
  %v1927 = vpop.permute.xlu0 %1926
  %v1929 = vadd.f32 %v1919, %v1927
  %v1930 = vtanh.pop %v1929
  %1932 = vrot.lane.b32.xlu0 %v1930, 32
  %v1933 = vpop.permute.xlu0 %1932
  %v1935 = vmul.f32 %v1917, %v1933
  %v1936 = vxor.u32 %v1898, 2147483648
  %v1937 = vmul.f32 %v1936, 1.442695
  %v1938 = vpow.pop %v1937
  %v1939 = vadd.f32 %v1938, 1.0
  %v1940 = vrcp.pop %v1939
  %v1941 = vmul.f32 %v1939, %v1940
  %v1942 = vsub.f32 1.0, %v1941
  %v1943 = vmul.f32 %v1940, %v1942
  %v1944 = vadd.f32 %v1940, %v1943
  %vm1945 = vweird.f32 %v1939
  %vm1946 = vweird.f32 %v1940
  %vm1947 = vmor %vm1945, %vm1946
  %v1948 = vsel %vm1947, %v1940, %v1944
  %v1949 = vand.u32 2147483647, %v1939
  %vm1950 = vcmp.eq.f32.partialorder %v1949, 8.507059e+37
  %v1951 = vand.u32 %v1939, 2147483648
  %v1952 = vor.u32 1.1754944e-38, %v1951
  %v1953 = vsel %vm1950, %v1952, %v1948
  %v1954 = vmul.f32 1.0, %v1953
  %v1955 = vtanh.pop %v1898
  %v1956 = vmul.f32 %v1954, %v1832
  %1958 = vrot.lane.b32.xlu0 %v1955, 32
  %v1959 = vpop.permute.xlu0 %1958
  %v1961 = vmul.f32 %v1954, %v1959
  %1963 = vrot.lane.b32.xlu0 %v1961, 32
  %v1964 = vpop.permute.xlu0 %1963
  %v1966 = vadd.f32 %v1956, %v1964
  %v1967 = vtanh.pop %v1966
  %1969 = vrot.lane.b32.xlu0 %v1967, 32
  %v1970 = vpop.permute.xlu0 %1969
  %v1972 = vmul.f32 %v1954, %v1970
  %1974 = vrot.lane.b32.xlu0 %v1935, 64
  %v1975 = vpop.permute.xlu0 %1974
  %1977 = vst.msk [vmem:[#allocation4 + $0x20] sm:$0xff] %vm48, %v1975
  %1979 = vrot.lane.b32.xlu0 %v1972, 96
  %v1980 = vpop.permute.xlu0 %1979
  %1982 = vst.msk [vmem:[#allocation4 + $0x18] sm:$0xff] %vm190, %v1980
  %v1983 = vld [vmem:[#allocation3 + $0x28] sm:$0xff]
  %v1984 = vsel %vm48, %v1975, 0
  %1986 = vmatpush.msra.mxu0 0.0
  %1987 = vmatpush.msra.mxu0 0.0
  %1988 = vmatpush.msra.mxu0 0.0
  %1989 = vmatpush.msra.mxu0 0.0
  %1990 = vmatpush.msra.mxu0 0.0
  %1991 = vmatpush.msra.mxu0 0.0
  %1992 = vmatpush.msra.mxu0 0.0
  %1993 = vmatpush.msra.mxu0 0.0
  %1994 = vmatpush.msra.mxu0 0.0
  %1995 = vmatpush.msra.mxu0 0.0
  %1996 = vmatpush.msra.mxu0 0.0
  %1997 = vmatpush.msra.mxu0 0.0
  %1998 = vmatpush.msra.mxu0 %v1291
  %1999 = vmatpush.msra.mxu0 %v1290
  %2000 = vmatpush.msra.mxu0 %v1289
  %2001 = vmatpush.msra.mxu0 %v1288
  %2002 = vmatmul.f32.gmra.mxu0 %v1984
  %v2003 = vpop.f32.mrf.mxu0
  %v2004 = vadd.f32 0.0, %v2003
  %2005 = vdwg.mxu0
  %v2006 = vadd.f32 %v1983, %v2004
  %v2007 = vld [vmem:[%s1279 + $0x10] sm:$0xff]
  %2008 = vrot.lane.b32.xlu0 %v1972, 64
  %v2009 = vpop.permute.xlu0 %2008
  %v2010 = vsel %vm48, %v2009, 0
  %2012 = vmatpush.msra.mxu0 0.0
  %2013 = vmatpush.msra.mxu0 0.0
  %2014 = vmatpush.msra.mxu0 0.0
  %2015 = vmatpush.msra.mxu0 0.0
  %2016 = vmatpush.msra.mxu0 0.0
  %2017 = vmatpush.msra.mxu0 0.0
  %2018 = vmatpush.msra.mxu0 0.0
  %2019 = vmatpush.msra.mxu0 0.0
  %2020 = vmatpush.msra.mxu0 0.0
  %2021 = vmatpush.msra.mxu0 0.0
  %2022 = vmatpush.msra.mxu0 0.0
  %2023 = vmatpush.msra.mxu0 0.0
  %2024 = vmatpush.msra.mxu0 %v1296
  %2025 = vmatpush.msra.mxu0 %v1295
  %2026 = vmatpush.msra.mxu0 %v1294
  %2027 = vmatpush.msra.mxu0 %v1293
  %2028 = vmatmul.f32.gmra.mxu0 %v2010
  %v2029 = vpop.f32.mrf.mxu0
  %v2030 = vadd.f32 0.0, %v2029
  %2031 = vdwg.mxu0
  %v2032 = vadd.f32 %v2007, %v2030
  %v2033 = vxor.u32 %v2006, 2147483648
  %v2034 = vmul.f32 %v2033, 1.442695
  %v2035 = vpow.pop %v2034
  %v2036 = vadd.f32 %v2035, 1.0
  %v2037 = vrcp.pop %v2036
  %v2038 = vmul.f32 %v2036, %v2037
  %v2039 = vsub.f32 1.0, %v2038
  %v2040 = vmul.f32 %v2037, %v2039
  %v2041 = vadd.f32 %v2037, %v2040
  %vm2042 = vweird.f32 %v2036
  %vm2043 = vweird.f32 %v2037
  %vm2044 = vmor %vm2042, %vm2043
  %v2045 = vsel %vm2044, %v2037, %v2041
  %v2046 = vand.u32 2147483647, %v2036
  %vm2047 = vcmp.eq.f32.partialorder %v2046, 8.507059e+37
  %v2048 = vand.u32 %v2036, 2147483648
  %v2049 = vor.u32 1.1754944e-38, %v2048
  %v2050 = vsel %vm2047, %v2049, %v2045
  %v2051 = vmul.f32 1.0, %v2050
  %v2052 = vtanh.pop %v2006
  %v2053 = vmul.f32 %v2051, %v1929
  %2055 = vrot.lane.b32.xlu0 %v2052, 32
  %v2056 = vpop.permute.xlu0 %2055
  %v2058 = vmul.f32 %v2051, %v2056
  %2060 = vrot.lane.b32.xlu0 %v2058, 32
  %v2061 = vpop.permute.xlu0 %2060
  %v2063 = vadd.f32 %v2053, %v2061
  %v2064 = vtanh.pop %v2063
  %2066 = vrot.lane.b32.xlu0 %v2064, 32
  %v2067 = vpop.permute.xlu0 %2066
  %v2069 = vmul.f32 %v2051, %v2067
  %v2070 = vxor.u32 %v2032, 2147483648
  %v2071 = vmul.f32 %v2070, 1.442695
  %v2072 = vpow.pop %v2071
  %v2073 = vadd.f32 %v2072, 1.0
  %v2074 = vrcp.pop %v2073
  %v2075 = vmul.f32 %v2073, %v2074
  %v2076 = vsub.f32 1.0, %v2075
  %v2077 = vmul.f32 %v2074, %v2076
  %v2078 = vadd.f32 %v2074, %v2077
  %vm2079 = vweird.f32 %v2073
  %vm2080 = vweird.f32 %v2074
  %vm2081 = vmor %vm2079, %vm2080
  %v2082 = vsel %vm2081, %v2074, %v2078
  %v2083 = vand.u32 2147483647, %v2073
  %vm2084 = vcmp.eq.f32.partialorder %v2083, 8.507059e+37
  %v2085 = vand.u32 %v2073, 2147483648
  %v2086 = vor.u32 1.1754944e-38, %v2085
  %v2087 = vsel %vm2084, %v2086, %v2082
  %v2088 = vmul.f32 1.0, %v2087
  %v2089 = vtanh.pop %v2032
  %v2090 = vmul.f32 %v2088, %v1966
  %2092 = vrot.lane.b32.xlu0 %v2089, 32
  %v2093 = vpop.permute.xlu0 %2092
  %v2095 = vmul.f32 %v2088, %v2093
  %2097 = vrot.lane.b32.xlu0 %v2095, 32
  %v2098 = vpop.permute.xlu0 %2097
  %v2100 = vadd.f32 %v2090, %v2098
  %v2101 = vtanh.pop %v2100
  %2103 = vrot.lane.b32.xlu0 %v2101, 32
  %v2104 = vpop.permute.xlu0 %2103
  %v2106 = vmul.f32 %v2088, %v2104
  %2108 = vrot.lane.b32.xlu0 %v2069, 64
  %v2109 = vpop.permute.xlu0 %2108
  %2111 = vst.msk [vmem:[#allocation4 + $0x28] sm:$0xff] %vm48, %v2109
  %2113 = vrot.lane.b32.xlu0 %v2106, 96
  %v2114 = vpop.permute.xlu0 %2113
  %2116 = vst.msk [vmem:[#allocation4 + $0x10] sm:$0xff] %vm190, %v2114
  %v2117 = vld [vmem:[#allocation3 + $0x30] sm:$0xff]
  %v2118 = vsel %vm48, %v2109, 0
  %2120 = vmatpush.msra.mxu0 0.0
  %2121 = vmatpush.msra.mxu0 0.0
  %2122 = vmatpush.msra.mxu0 0.0
  %2123 = vmatpush.msra.mxu0 0.0
  %2124 = vmatpush.msra.mxu0 0.0
  %2125 = vmatpush.msra.mxu0 0.0
  %2126 = vmatpush.msra.mxu0 0.0
  %2127 = vmatpush.msra.mxu0 0.0
  %2128 = vmatpush.msra.mxu0 0.0
  %2129 = vmatpush.msra.mxu0 0.0
  %2130 = vmatpush.msra.mxu0 0.0
  %2131 = vmatpush.msra.mxu0 0.0
  %2132 = vmatpush.msra.mxu0 %v1291
  %2133 = vmatpush.msra.mxu0 %v1290
  %2134 = vmatpush.msra.mxu0 %v1289
  %2135 = vmatpush.msra.mxu0 %v1288
  %2136 = vmatmul.f32.gmra.mxu0 %v2118
  %v2137 = vpop.f32.mrf.mxu0
  %v2138 = vadd.f32 0.0, %v2137
  %2139 = vdwg.mxu0
  %v2140 = vadd.f32 %v2117, %v2138
  %v2141 = vld [vmem:[%s1279 + $0x8] sm:$0xff]
  %2142 = vrot.lane.b32.xlu0 %v2106, 64
  %v2143 = vpop.permute.xlu0 %2142
  %v2144 = vsel %vm48, %v2143, 0
  %2146 = vmatpush.msra.mxu0 0.0
  %2147 = vmatpush.msra.mxu0 0.0
  %2148 = vmatpush.msra.mxu0 0.0
  %2149 = vmatpush.msra.mxu0 0.0
  %2150 = vmatpush.msra.mxu0 0.0
  %2151 = vmatpush.msra.mxu0 0.0
  %2152 = vmatpush.msra.mxu0 0.0
  %2153 = vmatpush.msra.mxu0 0.0
  %2154 = vmatpush.msra.mxu0 0.0
  %2155 = vmatpush.msra.mxu0 0.0
  %2156 = vmatpush.msra.mxu0 0.0
  %2157 = vmatpush.msra.mxu0 0.0
  %2158 = vmatpush.msra.mxu0 %v1296
  %2159 = vmatpush.msra.mxu0 %v1295
  %2160 = vmatpush.msra.mxu0 %v1294
  %2161 = vmatpush.msra.mxu0 %v1293
  %2162 = vmatmul.f32.gmra.mxu0 %v2144
  %v2163 = vpop.f32.mrf.mxu0
  %v2164 = vadd.f32 0.0, %v2163
  %2165 = vdwg.mxu0
  %v2166 = vadd.f32 %v2141, %v2164
  %v2167 = vxor.u32 %v2140, 2147483648
  %v2168 = vmul.f32 %v2167, 1.442695
  %v2169 = vpow.pop %v2168
  %v2170 = vadd.f32 %v2169, 1.0
  %v2171 = vrcp.pop %v2170
  %v2172 = vmul.f32 %v2170, %v2171
  %v2173 = vsub.f32 1.0, %v2172
  %v2174 = vmul.f32 %v2171, %v2173
  %v2175 = vadd.f32 %v2171, %v2174
  %vm2176 = vweird.f32 %v2170
  %vm2177 = vweird.f32 %v2171
  %vm2178 = vmor %vm2176, %vm2177
  %v2179 = vsel %vm2178, %v2171, %v2175
  %v2180 = vand.u32 2147483647, %v2170
  %vm2181 = vcmp.eq.f32.partialorder %v2180, 8.507059e+37
  %v2182 = vand.u32 %v2170, 2147483648
  %v2183 = vor.u32 1.1754944e-38, %v2182
  %v2184 = vsel %vm2181, %v2183, %v2179
  %v2185 = vmul.f32 1.0, %v2184
  %v2186 = vtanh.pop %v2140
  %v2187 = vmul.f32 %v2185, %v2063
  %2189 = vrot.lane.b32.xlu0 %v2186, 32
  %v2190 = vpop.permute.xlu0 %2189
  %v2192 = vmul.f32 %v2185, %v2190
  %2194 = vrot.lane.b32.xlu0 %v2192, 32
  %v2195 = vpop.permute.xlu0 %2194
  %v2197 = vadd.f32 %v2187, %v2195
  %v2198 = vtanh.pop %v2197
  %2200 = vrot.lane.b32.xlu0 %v2198, 32
  %v2201 = vpop.permute.xlu0 %2200
  %v2203 = vmul.f32 %v2185, %v2201
  %v2204 = vxor.u32 %v2166, 2147483648
  %v2205 = vmul.f32 %v2204, 1.442695
  %v2206 = vpow.pop %v2205
  %v2207 = vadd.f32 %v2206, 1.0
  %v2208 = vrcp.pop %v2207
  %v2209 = vmul.f32 %v2207, %v2208
  %v2210 = vsub.f32 1.0, %v2209
  %v2211 = vmul.f32 %v2208, %v2210
  %v2212 = vadd.f32 %v2208, %v2211
  %vm2213 = vweird.f32 %v2207
  %vm2214 = vweird.f32 %v2208
  %vm2215 = vmor %vm2213, %vm2214
  %v2216 = vsel %vm2215, %v2208, %v2212
  %v2217 = vand.u32 2147483647, %v2207
  %vm2218 = vcmp.eq.f32.partialorder %v2217, 8.507059e+37
  %v2219 = vand.u32 %v2207, 2147483648
  %v2220 = vor.u32 1.1754944e-38, %v2219
  %v2221 = vsel %vm2218, %v2220, %v2216
  %v2222 = vmul.f32 1.0, %v2221
  %v2223 = vtanh.pop %v2166
  %v2224 = vmul.f32 %v2222, %v2100
  %2226 = vrot.lane.b32.xlu0 %v2223, 32
  %v2227 = vpop.permute.xlu0 %2226
  %v2229 = vmul.f32 %v2222, %v2227
  %2231 = vrot.lane.b32.xlu0 %v2229, 32
  %v2232 = vpop.permute.xlu0 %2231
  %v2234 = vadd.f32 %v2224, %v2232
  %v2235 = vtanh.pop %v2234
  %2237 = vrot.lane.b32.xlu0 %v2235, 32
  %v2238 = vpop.permute.xlu0 %2237
  %v2240 = vmul.f32 %v2222, %v2238
  %2242 = vrot.lane.b32.xlu0 %v2203, 64
  %v2243 = vpop.permute.xlu0 %2242
  %2245 = vst.msk [vmem:[#allocation4 + $0x30] sm:$0xff] %vm48, %v2243
  %2247 = vrot.lane.b32.xlu0 %v2240, 96
  %v2248 = vpop.permute.xlu0 %2247
  %2250 = vst.msk [vmem:[#allocation4 + $0x8] sm:$0xff] %vm190, %v2248
  %v2251 = vld [vmem:[#allocation3 + $0x38] sm:$0xff]
  %v2252 = vsel %vm48, %v2243, 0
  %2254 = vmatpush.msra.mxu0 0.0
  %2255 = vmatpush.msra.mxu0 0.0
  %2256 = vmatpush.msra.mxu0 0.0
  %2257 = vmatpush.msra.mxu0 0.0
  %2258 = vmatpush.msra.mxu0 0.0
  %2259 = vmatpush.msra.mxu0 0.0
  %2260 = vmatpush.msra.mxu0 0.0
  %2261 = vmatpush.msra.mxu0 0.0
  %2262 = vmatpush.msra.mxu0 0.0
  %2263 = vmatpush.msra.mxu0 0.0
  %2264 = vmatpush.msra.mxu0 0.0
  %2265 = vmatpush.msra.mxu0 0.0
  %2266 = vmatpush.msra.mxu0 %v1291
  %2267 = vmatpush.msra.mxu0 %v1290
  %2268 = vmatpush.msra.mxu0 %v1289
  %2269 = vmatpush.msra.mxu0 %v1288
  %2270 = vmatmul.f32.gmra.mxu0 %v2252
  %v2271 = vpop.f32.mrf.mxu0
  %v2272 = vadd.f32 0.0, %v2271
  %2273 = vdwg.mxu0
  %v2274 = vadd.f32 %v2251, %v2272
  %v2275 = vld [vmem:[%s1279] sm:$0xff]
  %2276 = vrot.lane.b32.xlu0 %v2240, 64
  %v2277 = vpop.permute.xlu0 %2276
  %v2278 = vsel %vm48, %v2277, 0
  %2280 = vmatpush.msra.mxu0 0.0
  %2281 = vmatpush.msra.mxu0 0.0
  %2282 = vmatpush.msra.mxu0 0.0
  %2283 = vmatpush.msra.mxu0 0.0
  %2284 = vmatpush.msra.mxu0 0.0
  %2285 = vmatpush.msra.mxu0 0.0
  %2286 = vmatpush.msra.mxu0 0.0
  %2287 = vmatpush.msra.mxu0 0.0
  %2288 = vmatpush.msra.mxu0 0.0
  %2289 = vmatpush.msra.mxu0 0.0
  %2290 = vmatpush.msra.mxu0 0.0
  %2291 = vmatpush.msra.mxu0 0.0
  %2292 = vmatpush.msra.mxu0 %v1296
  %2293 = vmatpush.msra.mxu0 %v1295
  %2294 = vmatpush.msra.mxu0 %v1294
  %2295 = vmatpush.msra.mxu0 %v1293
  %2296 = vmatmul.f32.gmra.mxu0 %v2278
  %v2297 = vpop.f32.mrf.mxu0
  %v2298 = vadd.f32 0.0, %v2297
  %2299 = vdwg.mxu0
  %v2300 = vadd.f32 %v2275, %v2298
  %v2301 = vxor.u32 %v2274, 2147483648
  %v2302 = vmul.f32 %v2301, 1.442695
  %v2303 = vpow.pop %v2302
  %v2304 = vadd.f32 %v2303, 1.0
  %v2305 = vrcp.pop %v2304
  %v2306 = vmul.f32 %v2304, %v2305
  %v2307 = vsub.f32 1.0, %v2306
  %v2308 = vmul.f32 %v2305, %v2307
  %v2309 = vadd.f32 %v2305, %v2308
  %vm2310 = vweird.f32 %v2304
  %vm2311 = vweird.f32 %v2305
  %vm2312 = vmor %vm2310, %vm2311
  %v2313 = vsel %vm2312, %v2305, %v2309
  %v2314 = vand.u32 2147483647, %v2304
  %vm2315 = vcmp.eq.f32.partialorder %v2314, 8.507059e+37
  %v2316 = vand.u32 %v2304, 2147483648
  %v2317 = vor.u32 1.1754944e-38, %v2316
  %v2318 = vsel %vm2315, %v2317, %v2313
  %v2319 = vmul.f32 1.0, %v2318
  %v2320 = vtanh.pop %v2274
  %v2321 = vmul.f32 %v2319, %v2197
  %2323 = vrot.lane.b32.xlu0 %v2320, 32
  %v2324 = vpop.permute.xlu0 %2323
  %v2326 = vmul.f32 %v2319, %v2324
  %2328 = vrot.lane.b32.xlu0 %v2326, 32
  %v2329 = vpop.permute.xlu0 %2328
  %v2331 = vadd.f32 %v2321, %v2329
  %v2332 = vtanh.pop %v2331
  %2334 = vrot.lane.b32.xlu0 %v2332, 32
  %v2335 = vpop.permute.xlu0 %2334
  %v2337 = vmul.f32 %v2319, %v2335
  %v2338 = vxor.u32 %v2300, 2147483648
  %v2339 = vmul.f32 %v2338, 1.442695
  %v2340 = vpow.pop %v2339
  %v2341 = vadd.f32 %v2340, 1.0
  %v2342 = vrcp.pop %v2341
  %v2343 = vmul.f32 %v2341, %v2342
  %v2344 = vsub.f32 1.0, %v2343
  %v2345 = vmul.f32 %v2342, %v2344
  %v2346 = vadd.f32 %v2342, %v2345
  %vm2347 = vweird.f32 %v2341
  %vm2348 = vweird.f32 %v2342
  %vm2349 = vmor %vm2347, %vm2348
  %v2350 = vsel %vm2349, %v2342, %v2346
  %v2351 = vand.u32 2147483647, %v2341
  %vm2352 = vcmp.eq.f32.partialorder %v2351, 8.507059e+37
  %v2353 = vand.u32 %v2341, 2147483648
  %v2354 = vor.u32 1.1754944e-38, %v2353
  %v2355 = vsel %vm2352, %v2354, %v2350
  %v2356 = vmul.f32 1.0, %v2355
  %v2357 = vtanh.pop %v2300
  %v2358 = vmul.f32 %v2356, %v2234
  %2360 = vrot.lane.b32.xlu0 %v2357, 32
  %v2361 = vpop.permute.xlu0 %2360
  %v2363 = vmul.f32 %v2356, %v2361
  %2365 = vrot.lane.b32.xlu0 %v2363, 32
  %v2366 = vpop.permute.xlu0 %2365
  %v2368 = vadd.f32 %v2358, %v2366
  %v2369 = vtanh.pop %v2368
  %2371 = vrot.lane.b32.xlu0 %v2369, 32
  %v2372 = vpop.permute.xlu0 %2371
  %v2374 = vmul.f32 %v2356, %v2372
  %2376 = vrot.lane.b32.xlu0 %v2337, 64
  %v2377 = vpop.permute.xlu0 %2376
  %2379 = vst.msk [vmem:[#allocation4 + $0x38] sm:$0xff] %vm48, %v2377
  %2381 = vrot.lane.b32.xlu0 %v2374, 96
  %v2382 = vpop.permute.xlu0 %2381
  %2384 = vst.msk [vmem:[#allocation4] sm:$0xff] %vm190, %v2382
  %v2385 = vld [vmem:[#allocation4] sm:$0xff]
  %v2386 = vld [vmem:[#allocation4 + $0x8] sm:$0xff]
  %v2387 = vld [vmem:[#allocation4 + $0x10] sm:$0xff]
  %v2388 = vld [vmem:[#allocation4 + $0x18] sm:$0xff]
  %v2389 = vld [vmem:[#allocation4 + $0x20] sm:$0xff]
  %v2390 = vld [vmem:[#allocation4 + $0x28] sm:$0xff]
  %v2391 = vld [vmem:[#allocation4 + $0x30] sm:$0xff]
  %v2392 = vld [vmem:[#allocation4 + $0x38] sm:$0xff]
  %v2393 = vld [vmem:[%s7] sm:$0xff]
  %v2394 = vld [vmem:[%s7 + $0x8] sm:$0xff]
  %v2395 = vld [vmem:[%s7 + $0x10] sm:$0xff]
  %v2396 = vld [vmem:[%s7 + $0x18] sm:$0xff]
  %v2397 = vld [vmem:[%s7 + $0x20] sm:$0xff]
  %v2398 = vld [vmem:[%s7 + $0x28] sm:$0xff]
  %v2399 = vld [vmem:[%s7 + $0x30] sm:$0xff]
  %v2400 = vld [vmem:[%s7 + $0x38] sm:$0xff]
  %v2401 = vld [vmem:[%s8] sm:$0x1]
  %v2403 = vperm.slane %v2401, 0
  %v2406 = vsel %vm1150, %v2385, 0
  %v2409 = vsel %vm1150, %v2386, 0
  %v2412 = vsel %vm1150, %v2387, 0
  %v2415 = vsel %vm1150, %v2388, 0
  %v2418 = vsel %vm1150, %v2389, 0
  %v2421 = vsel %vm1150, %v2390, 0
  %v2424 = vsel %vm1150, %v2391, 0
  %v2427 = vsel %vm1150, %v2392, 0
  %2429 = vmatpush.msra.mxu0 0.0
  %2430 = vmatpush.msra.mxu0 0.0
  %2431 = vmatpush.msra.mxu0 0.0
  %2432 = vmatpush.msra.mxu0 0.0
  %2433 = vmatpush.msra.mxu0 0.0
  %2434 = vmatpush.msra.mxu0 0.0
  %2435 = vmatpush.msra.mxu0 0.0
  %2436 = vmatpush.msra.mxu0 0.0
  %2437 = vmatpush.msra.mxu0 %v2400
  %2438 = vmatpush.msra.mxu0 %v2399
  %2439 = vmatpush.msra.mxu0 %v2398
  %2440 = vmatpush.msra.mxu0 %v2397
  %2441 = vmatpush.msra.mxu0 %v2396
  %2442 = vmatpush.msra.mxu0 %v2395
  %2443 = vmatpush.msra.mxu0 %v2394
  %2444 = vmatpush.msra.mxu0 %v2393
  %2445 = vmatmul.f32.gmra.mxu0 %v2406
  %v2446 = vpop.f32.mrf.mxu0
  %v2447 = vadd.f32 %v2403, %v2446
  %2448 = vmatmul.f32.gmra.mxu0 %v2409
  %v2449 = vpop.f32.mrf.mxu0
  %v2450 = vadd.f32 %v2403, %v2449
  %2451 = vmatmul.f32.gmra.mxu0 %v2412
  %v2452 = vpop.f32.mrf.mxu0
  %v2453 = vadd.f32 %v2403, %v2452
  %2454 = vmatmul.f32.gmra.mxu0 %v2415
  %v2455 = vpop.f32.mrf.mxu0
  %v2456 = vadd.f32 %v2403, %v2455
  %2457 = vmatmul.f32.gmra.mxu0 %v2418
  %v2458 = vpop.f32.mrf.mxu0
  %v2459 = vadd.f32 %v2403, %v2458
  %2460 = vmatmul.f32.gmra.mxu0 %v2421
  %v2461 = vpop.f32.mrf.mxu0
  %v2462 = vadd.f32 %v2403, %v2461
  %2463 = vmatmul.f32.gmra.mxu0 %v2424
  %v2464 = vpop.f32.mrf.mxu0
  %v2465 = vadd.f32 %v2403, %v2464
  %2466 = vmatmul.f32.gmra.mxu0 %v2427
  %v2467 = vpop.f32.mrf.mxu0
  %v2468 = vadd.f32 %v2403, %v2467
  %2469 = vdwg.mxu0
  %2470 = vst [vmem:[%s9] sm:$0xff] %v2447
  %2471 = vst [vmem:[%s9 + $0x8] sm:$0xff] %v2450
  %2472 = vst [vmem:[%s9 + $0x10] sm:$0xff] %v2453
  %2473 = vst [vmem:[%s9 + $0x18] sm:$0xff] %v2456
  %2474 = vst [vmem:[%s9 + $0x20] sm:$0xff] %v2459
  %2475 = vst [vmem:[%s9 + $0x28] sm:$0xff] %v2462
  %2476 = vst [vmem:[%s9 + $0x30] sm:$0xff] %v2465
  %2477 = vst [vmem:[%s9 + $0x38] sm:$0xff] %v2468
  // Predicated region
  $region38: #{bidirectional_lstm_forward.1} parent=0 // pred_check
    _
  $region39: #{bidirectional_lstm_forward.1} parent=0 // pred_check_branch
    %2479 = sbr.rel (0) target = $region41
  $region40: #{bidirectional_lstm_forward.1} parent=0 // pred_region
    _
  $region41: #{bidirectional_lstm_forward.1} parent=0 // pred_fallthru
    _
  // Predicated region
  $region42: #{bidirectional_lstm_forward.1} parent=0 // pred_check
    _
  $region43: #{bidirectional_lstm_forward.1} parent=0 // pred_check_branch
    %2481 = sbr.rel (0) target = $region45
  $region44: #{bidirectional_lstm_forward.1} parent=0 // pred_region
    _
  $region45: #{bidirectional_lstm_forward.1} parent=0 // pred_fallthru
    _

</llo_original>
